<compile_context>
chip_gen: v7x
topology: tpu7x:2x2x1
jax: 0.10.0
libtpu: 0.0.40
codegen_flags: <defaults>
</compile_context>

<pallas_src>
from collections import namedtuple
from functools import partial

import jax
import jax.numpy as jnp
from jax.experimental import pallas as pl
from jax.experimental.pallas import tpu as pltpu

Genotype = namedtuple("Genotype", ["normal", "normal_concat", "reduce", "reduce_concat"])

_EPS = 1e-5
_VMEM_LIMIT_CACHE = None


def _vmem_limit_bytes():
    """Per-generation scoped-VMEM budget (v5e/v6e: 128 MiB phys, v7x: 64 MiB)."""
    global _VMEM_LIMIT_CACHE
    if _VMEM_LIMIT_CACHE is None:
        try:
            cap = int(pltpu.get_tpu_info().vmem_capacity_bytes)
        except Exception:
            cap = 64 * 1024 * 1024  # conservative fallback (v7x-sized)
        _VMEM_LIMIT_CACHE = int(min(cap * 3 // 4, 100 * 1024 * 1024))
    return _VMEM_LIMIT_CACHE


def _cparams(n_parallel_axes=1):
    return pltpu.CompilerParams(
        dimension_semantics=("parallel",) * n_parallel_axes,
        vmem_limit_bytes=_vmem_limit_bytes(),
    )


# ----------------------------------------------------------------------------
# Kernels
# ----------------------------------------------------------------------------
def _relu_conv1x1_bn_kernel(x_ref, w_ref, scale_ref, shift_ref, o_ref):
    """o = BN(Conv1x1(ReLU(x))) with BN folded into scale/shift.  x: (tm, Cin)."""
    x = jnp.maximum(x_ref[...], 0.0).astype(jnp.bfloat16)   # bf16 MXU operand
    y = jnp.dot(x, w_ref[...], preferred_element_type=jnp.float32)
    o_ref[...] = y * scale_ref[...] + shift_ref[...]


def _sepconv3x3_kernel(x_ref,
                       dw1_ref, pw1_ref, sc1_ref, sh1_ref,
                       dw2_ref, pw2_ref, sc2_ref, sh2_ref,
                       *rest, has_add):
    """Fused SepConv3x3: (ReLU -> dw3x3(p=1) -> pw1x1 -> BN) x 2, + optional add.

    x_ref : (1, H, W, C) UNPADDED input; halos are built in VMEM scratch.
    dw*   : (9, C) depthwise taps (f32); pw*: (C, C) bf16; sc/sh: folded BN.
    rest  : ([add_ref], o_ref, xpad_scr, mid_scr)  o_ref: (1, H, W, C)
    """
    if has_add:
        add_ref, o_ref, xpad, mid = rest
    else:
        o_ref, xpad, mid = rest
        add_ref = None
    _, H, W, C = o_ref.shape

    # ---- stage 1: ReLU -> dw3x3 -> pw1x1 -> BN ----
    xpad[...] = jnp.zeros_like(xpad)                         # zero halo in VMEM
    xpad[:, 1:H + 1, 1:W + 1, :] = jnp.maximum(x_ref[...], 0.0)
    dw1 = dw1_ref[...]
    acc = jnp.zeros((1, H, W, C), jnp.float32)
    for dy in range(3):
        for dx in range(3):
            acc = acc + xpad[:, dy:dy + H, dx:dx + W, :] * dw1[3 * dy + dx].reshape(1, 1, 1, C)
    y = jnp.dot(acc.reshape(H * W, C).astype(jnp.bfloat16), pw1_ref[...],
                preferred_element_type=jnp.float32)
    y = y * sc1_ref[...] + sh1_ref[...]

    # ---- stage 2: ReLU -> dw3x3 -> pw1x1 -> BN (+ fused DAG-node add) ----
    # Writing ReLU(y) into the interior of a pre-zeroed scratch IS the zero
    # padding stage 2 needs (no ring mask, no extended-grid compute).
    mid[...] = jnp.zeros_like(mid)
    mid[:, 1:H + 1, 1:W + 1, :] = jnp.maximum(y, 0.0).reshape(1, H, W, C)
    dw2 = dw2_ref[...]
    acc = jnp.zeros((1, H, W, C), jnp.float32)
    for dy in range(3):
        for dx in range(3):
            acc = acc + mid[:, dy:dy + H, dx:dx + W, :] * dw2[3 * dy + dx].reshape(1, 1, 1, C)
    out = jnp.dot(acc.reshape(H * W, C).astype(jnp.bfloat16), pw2_ref[...],
                  preferred_element_type=jnp.float32)
    out = (out * sc2_ref[...] + sh2_ref[...]).reshape(1, H, W, C)
    if has_add:
        out = out + add_ref[...]
    o_ref[...] = out


def _avgpool3x3_kernel(*refs, C, has_add):
    """AvgPool 3x3/s1/p1, count_include_pad=False, lane-folded (N, H, W*C)."""
    if has_add:
        x_ref, inv_ref, add_ref, o_ref, xpad = refs
    else:
        x_ref, inv_ref, o_ref, xpad = refs
        add_ref = None
    _, H, WC = o_ref.shape
    xpad[...] = jnp.zeros_like(xpad)                         # zero halo in VMEM
    xpad[:, 1:H + 1, C:C + WC] = x_ref[...]
    acc = jnp.zeros((1, H, WC), jnp.float32)
    for dy in range(3):
        for dx in range(3):
            acc = acc + xpad[:, dy:dy + H, dx * C:dx * C + WC]
    out = acc * inv_ref[...]
    if has_add:
        out = out + add_ref[...]
    o_ref[...] = out


def _maxpool3x3_kernel(*refs, C, has_add):
    """MaxPool 3x3/s1/p1 (halo = -inf), lane-folded (N, H, W*C)."""
    if has_add:
        x_ref, add_ref, o_ref, xpad = refs
    else:
        x_ref, o_ref, xpad = refs
        add_ref = None
    _, H, WC = o_ref.shape
    xpad[...] = jnp.full(xpad.shape, -jnp.inf, jnp.float32)  # -inf halo in VMEM
    xpad[:, 1:H + 1, C:C + WC] = x_ref[...]
    acc = jnp.full((1, H, WC), -jnp.inf, jnp.float32)
    for dy in range(3):
        for dx in range(3):
            acc = jnp.maximum(acc, xpad[:, dy:dy + H, dx * C:dx * C + WC])
    if has_add:
        acc = acc + add_ref[...]
    o_ref[...] = acc


# ----------------------------------------------------------------------------
# Wrappers (BN folding / BlockSpecs / scratch)
# ----------------------------------------------------------------------------
def _fold_bn(bn):
    scale = bn["gamma"] / jnp.sqrt(bn["var"] + _EPS)
    shift = bn["beta"] - bn["mean"] * scale
    return scale, shift


def relu_conv1x1_bn(x_nhwc, w_bf16, bn):
    N, H, W, Cin = x_nhwc.shape
    Cout = w_bf16.shape[1]
    scale, shift = _fold_bn(bn)
    M = N * H * W
    tm = min(M, 2048)                 # big row tile; remainder masked by Pallas
    x2d = x_nhwc.reshape(M, Cin)
    out = pl.pallas_call(
        _relu_conv1x1_bn_kernel,
        out_shape=jax.ShapeDtypeStruct((M, Cout), jnp.float32),
        grid=(pl.cdiv(M, tm),),
        in_specs=[
            pl.BlockSpec((tm, Cin), lambda i: (i, 0)),
            pl.BlockSpec((Cin, Cout), lambda i: (0, 0)),
            pl.BlockSpec((1, Cout), lambda i: (0, 0)),
            pl.BlockSpec((1, Cout), lambda i: (0, 0)),
        ],
        out_specs=pl.BlockSpec((tm, Cout), lambda i: (i, 0)),
        compiler_params=_cparams(1),
    )(x2d, w_bf16, scale.reshape(1, Cout), shift.reshape(1, Cout))
    return out.reshape(N, H, W, Cout)


def sep_conv_3x3(x_nhwc, p, addend=None):
    N, H, W, C = x_nhwc.shape
    sc1, sh1 = _fold_bn(p["bn1"])
    sc2, sh2 = _fold_bn(p["bn2"])

    inputs = [x_nhwc,
              p["dw1"].reshape(9, C), p["pw1"], sc1.reshape(1, C), sh1.reshape(1, C),
              p["dw2"].reshape(9, C), p["pw2"], sc2.reshape(1, C), sh2.reshape(1, C)]
    in_specs = [
        pl.BlockSpec((1, H, W, C), lambda n: (n, 0, 0, 0)),
        pl.BlockSpec((9, C), lambda n: (0, 0)),
        pl.BlockSpec((C, C), lambda n: (0, 0)),
        pl.BlockSpec((1, C), lambda n: (0, 0)),
        pl.BlockSpec((1, C), lambda n: (0, 0)),
        pl.BlockSpec((9, C), lambda n: (0, 0)),
        pl.BlockSpec((C, C), lambda n: (0, 0)),
        pl.BlockSpec((1, C), lambda n: (0, 0)),
        pl.BlockSpec((1, C), lambda n: (0, 0)),
    ]
    if addend is not None:
        inputs.append(addend)
        in_specs.append(pl.BlockSpec((1, H, W, C), lambda n: (n, 0, 0, 0)))

    return pl.pallas_call(
        partial(_sepconv3x3_kernel, has_add=addend is not None),
        out_shape=jax.ShapeDtypeStruct((N, H, W, C), jnp.float32),
        grid=(N,),
        in_specs=in_specs,
        out_specs=pl.BlockSpec((1, H, W, C), lambda n: (n, 0, 0, 0)),
        scratch_shapes=[pltpu.VMEM((1, H + 2, W + 2, C), jnp.float32),
                        pltpu.VMEM((1, H + 2, W + 2, C), jnp.float32)],
        compiler_params=_cparams(1),
    )(*inputs)


def avg_pool_3x3(x_nhwc, addend=None):
    N, H, W, C = x_nhwc.shape
    WC = W * C
    x_f = x_nhwc.reshape(N, H, WC)            # lane-folded view, contiguous
    # count_include_pad=False denominator (trace-time constant, broadcast on C)
    ones = jnp.pad(jnp.ones((H, W), jnp.float32), ((1, 1), (1, 1)))
    cnt = sum(ones[dy:dy + H, dx:dx + W] for dy in range(3) for dx in range(3))
    inv = jnp.repeat((1.0 / cnt)[:, :, None], C, axis=2).reshape(1, H, WC)

    inputs = [x_f, inv]
    in_specs = [
        pl.BlockSpec((1, H, WC), lambda n: (n, 0, 0)),
        pl.BlockSpec((1, H, WC), lambda n: (0, 0, 0)),
    ]
    if addend is not None:
        inputs.append(addend.reshape(N, H, WC))
        in_specs.append(pl.BlockSpec((1, H, WC), lambda n: (n, 0, 0)))

    out = pl.pallas_call(
        partial(_avgpool3x3_kernel, C=C, has_add=addend is not None),
        out_shape=jax.ShapeDtypeStruct((N, H, WC), jnp.float32),
        grid=(N,),
        in_specs=in_specs,
        out_specs=pl.BlockSpec((1, H, WC), lambda n: (n, 0, 0)),
        scratch_shapes=[pltpu.VMEM((1, H + 2, (W + 2) * C), jnp.float32)],
        compiler_params=_cparams(1),
    )(*inputs)
    return out.reshape(N, H, W, C)


def max_pool_3x3(x_nhwc, addend=None):
    N, H, W, C = x_nhwc.shape
    WC = W * C
    x_f = x_nhwc.reshape(N, H, WC)

    inputs = [x_f]
    in_specs = [pl.BlockSpec((1, H, WC), lambda n: (n, 0, 0))]
    if addend is not None:
        inputs.append(addend.reshape(N, H, WC))
        in_specs.append(pl.BlockSpec((1, H, WC), lambda n: (n, 0, 0)))

    out = pl.pallas_call(
        partial(_maxpool3x3_kernel, C=C, has_add=addend is not None),
        out_shape=jax.ShapeDtypeStruct((N, H, WC), jnp.float32),
        grid=(N,),
        in_specs=in_specs,
        out_specs=pl.BlockSpec((1, H, WC), lambda n: (n, 0, 0)),
        scratch_shapes=[pltpu.VMEM((1, H + 2, (W + 2) * C), jnp.float32)],
        compiler_params=_cparams(1),
    )(*inputs)
    return out.reshape(N, H, W, C)


def _apply_op(name, p, x, addend=None):
    if name == "skip_connect":
        return x  # Identity (stride 1, non-reduction cell)
    if name == "sep_conv_3x3":
        return sep_conv_3x3(x, p, addend)
    if name == "avg_pool_3x3":
        return avg_pool_3x3(x, addend)
    if name == "max_pool_3x3":
        return max_pool_3x3(x, addend)
    raise ValueError(f"unsupported op {name}")


# ----------------------------------------------------------------------------
# Cell: parameter init + forward
# ----------------------------------------------------------------------------
def _init_bn(key, C):
    kg, kb = jax.random.split(key)
    return dict(
        gamma=1.0 + 0.1 * jax.random.normal(kg, (C,), jnp.float32),
        beta=0.1 * jax.random.normal(kb, (C,), jnp.float32),
        mean=jnp.zeros((C,), jnp.float32),
        var=jnp.ones((C,), jnp.float32),
    )


def _init_relu_conv_bn(key, Cin, Cout):
    kw, kb = jax.random.split(key)
    # Pointwise weights stored bf16 (MXU operand); BN stats stay f32.
    w = (0.1 * jax.random.normal(kw, (Cin, Cout), jnp.float32)).astype(jnp.bfloat16)
    return dict(w=w, bn=_init_bn(kb, Cout))


def _init_sep_conv(key, C):
    k = jax.random.split(key, 6)
    return dict(
        dw1=0.1 * jax.random.normal(k[0], (3, 3, C), jnp.float32),
        pw1=(0.1 * jax.random.normal(k[1], (C, C), jnp.float32)).astype(jnp.bfloat16),
        bn1=_init_bn(k[2], C),
        dw2=0.1 * jax.random.normal(k[3], (3, 3, C), jnp.float32),
        pw2=(0.1 * jax.random.normal(k[4], (C, C), jnp.float32)).astype(jnp.bfloat16),
        bn2=_init_bn(k[5], C),
    )


def init_cell_params(genotype, C_prev_prev, C_prev, C, key):
    op_names = [n for n, _ in genotype.normal]
    keys = jax.random.split(key, 2 + len(op_names))
    params = dict(
        pre0=_init_relu_conv_bn(keys[0], C_prev_prev, C),
        pre1=_init_relu_conv_bn(keys[1], C_prev, C),
        ops=[],
    )
    for i, name in enumerate(op_names):
        if name == "sep_conv_3x3":
            params["ops"].append(_init_sep_conv(keys[2 + i], C))
        else:
            params["ops"].append(None)  # pooling / identity: parameter-free
    return params


def cell_forward(genotype, params, s0_nchw, s1_nchw):
    """Forward of Cell (eval mode, drop_prob=0, SE=False).  NCHW in/out."""
    op_names, indices = zip(*genotype.normal)
    concat = genotype.normal_concat
    steps = len(op_names) // 2

    # NCHW -> NHWC for the kernels
    s0 = jnp.transpose(s0_nchw, (0, 2, 3, 1))
    s1 = jnp.transpose(s1_nchw, (0, 2, 3, 1))

    s0 = relu_conv1x1_bn(s0, params["pre0"]["w"], params["pre0"]["bn"])
    s1 = relu_conv1x1_bn(s1, params["pre1"]["w"], params["pre1"]["bn"])

    states = [s0, s1]
    for i in range(steps):
        n1, n2 = op_names[2 * i], op_names[2 * i + 1]
        p1, p2 = params["ops"][2 * i], params["ops"][2 * i + 1]
        a, b = states[indices[2 * i]], states[indices[2 * i + 1]]
        # Fuse the DAG-node add into the epilogue of a producing kernel.
        if n1 == "skip_connect" and n2 == "skip_connect":
            s = a + b                                   # trivial; let XLA fuse
        elif n1 == "skip_connect":
            s = _apply_op(n2, p2, b, addend=a)
        elif n2 == "skip_connect":
            s = _apply_op(n1, p1, a, addend=b)
        else:
            h1 = _apply_op(n1, p1, a)
            s = _apply_op(n2, p2, b, addend=h1)
        states.append(s)

    out = jnp.concatenate([states[i] for i in concat], axis=-1)  # channel concat
    return jnp.transpose(out, (0, 3, 1, 2))  # back to NCHW


# ----------------------------------------------------------------------------
if __name__ == "__main__":
    N, C_pp, C_p, C, H, W = 2, 8, 8, 8, 8, 8

    genotype = Genotype(
        normal=[("sep_conv_3x3", 0), ("skip_connect", 1),
                ("sep_conv_3x3", 1), ("avg_pool_3x3", 0),
                ("skip_connect", 2), ("max_pool_3x3", 1),
                ("sep_conv_3x3", 2), ("skip_connect", 3)],
        normal_concat=[2, 3, 4, 5],
        reduce=[], reduce_concat=[],
    )

    root = jax.random.PRNGKey(0)
    kp, k0, k1 = jax.random.split(root, 3)
    params = init_cell_params(genotype, C_pp, C_p, C, kp)

    s0 = jax.random.normal(k0, (N, C_pp, H, W), jnp.float32)
    s1 = jax.random.normal(k1, (N, C_p, H, W), jnp.float32)

    fwd = jax.jit(lambda p, a, b: cell_forward(genotype, p, a, b))
    out = fwd(params, s0, s1)
    jax.block_until_ready(out)

    multiplier = len(genotype.normal_concat)
    assert out.shape == (N, multiplier * C, H, W), out.shape
    assert bool(jnp.all(jnp.isfinite(out)))
    print("KERNEL_OK")
</pallas_src>

<mosaic_0001>
module attributes {stable_mosaic.version = 11 : i64} {
  func.func @_relu_conv1x1_bn_kernel(%arg0: i32, %arg1: memref<128x8xf32, #tpu.memory_space<vmem>>, %arg2: memref<8x8xbf16, #tpu.memory_space<vmem>>, %arg3: memref<1x8xf32, #tpu.memory_space<vmem>>, %arg4: memref<1x8xf32, #tpu.memory_space<vmem>>, %arg5: memref<128x8xf32, #tpu.memory_space<vmem>>) attributes {dimension_semantics = [#tpu.dimension_semantics<parallel>], iteration_bounds = array<i64: 1>, scalar_prefetch = 0 : i64, scratch_operands = 0 : i64, tpu.core_type = #tpu.core_type<tc>, window_params = [{transform_indices = @transform_0, window_bounds = array<i64: 128, 8>}, {pipeline_mode = #tpu.pipeline_mode<synchronous>, transform_indices = @transform_1, window_bounds = array<i64: 8, 8>}, {pipeline_mode = #tpu.pipeline_mode<synchronous>, transform_indices = @transform_2, window_bounds = array<i64: 1, 8>}, {pipeline_mode = #tpu.pipeline_mode<synchronous>, transform_indices = @transform_3, window_bounds = array<i64: 1, 8>}, {transform_indices = @transform_4, window_bounds = array<i64: 128, 8>}]} {
    %c0 = arith.constant 0 : index
    %c0_0 = arith.constant 0 : index
    %0 = vector.load %arg1[%c0, %c0_0] : memref<128x8xf32, #tpu.memory_space<vmem>>, vector<128x8xf32>
    %cst = arith.constant 0.000000e+00 : f32
    %1 = vector.broadcast %cst : f32 to vector<128x8xf32>
    %2 = arith.maximumf %0, %1 : vector<128x8xf32>
    %3 = arith.truncf %2 : vector<128x8xf32> to vector<128x8xbf16>
    %c0_1 = arith.constant 0 : index
    %c0_2 = arith.constant 0 : index
    %4 = vector.load %arg2[%c0_1, %c0_2] : memref<8x8xbf16, #tpu.memory_space<vmem>>, vector<8x8xbf16>
    %cst_3 = arith.constant dense<0.000000e+00> : vector<128x8xf32>
    %5 = tpu.matmul %3, %4, %cst_3 {dimension_numbers = #tpu.dot_dimension_numbers<[1], [0], [0], [1], [0, 0, 1, 1], [], []>} : vector<128x8xbf16>, vector<8x8xbf16>, vector<128x8xf32> -> vector<128x8xf32>
    %c0_4 = arith.constant 0 : index
    %c0_5 = arith.constant 0 : index
    %6 = vector.load %arg3[%c0_4, %c0_5] : memref<1x8xf32, #tpu.memory_space<vmem>>, vector<1x8xf32>
    %7 = vector.broadcast %6 : vector<1x8xf32> to vector<128x8xf32>
    %8 = arith.mulf %5, %7 : vector<128x8xf32>
    %c0_6 = arith.constant 0 : index
    %c0_7 = arith.constant 0 : index
    %9 = vector.load %arg4[%c0_6, %c0_7] : memref<1x8xf32, #tpu.memory_space<vmem>>, vector<1x8xf32>
    %10 = vector.broadcast %9 : vector<1x8xf32> to vector<128x8xf32>
    %11 = arith.addf %8, %10 : vector<128x8xf32>
    %c0_8 = arith.constant 0 : index
    %c0_9 = arith.constant 0 : index
    %12 = vector.load %arg5[%c0_8, %c0_9] : memref<128x8xf32, #tpu.memory_space<vmem>>, vector<128x8xf32>
    tpu.vector_store %arg5[%c0_8, %c0_9], %11 {strides = array<i32>} : memref<128x8xf32, #tpu.memory_space<vmem>>, vector<128x8xf32>,
    return
  }
  func.func @transform_0(%arg0: i32) -> (i32, i32) {
    %c0_i32 = arith.constant 0 : i32
    %c0_i32_0 = arith.constant 0 : i32
    return %arg0, %c0_i32 : i32, i32
  }
  func.func @transform_1(%arg0: i32) -> (i32, i32) {
    %c0_i32 = arith.constant 0 : i32
    %c0_i32_0 = arith.constant 0 : i32
    %c0_i32_1 = arith.constant 0 : i32
    return %c0_i32, %c0_i32_0 : i32, i32
  }
  func.func @transform_2(%arg0: i32) -> (i32, i32) {
    %c0_i32 = arith.constant 0 : i32
    %c0_i32_0 = arith.constant 0 : i32
    %c0_i32_1 = arith.constant 0 : i32
    return %c0_i32, %c0_i32_0 : i32, i32
  }
  func.func @transform_3(%arg0: i32) -> (i32, i32) {
    %c0_i32 = arith.constant 0 : i32
    %c0_i32_0 = arith.constant 0 : i32
    %c0_i32_1 = arith.constant 0 : i32
    return %c0_i32, %c0_i32_0 : i32, i32
  }
  func.func @transform_4(%arg0: i32) -> (i32, i32) {
    %c0_i32 = arith.constant 0 : i32
    %c0_i32_0 = arith.constant 0 : i32
    return %arg0, %c0_i32 : i32, i32
  }
}

module attributes {stable_mosaic.version = 11 : i64} {
  func.func @_sepconv3x3_kernel(%arg0: i32, %arg1: memref<1x8x8x8xf32, #tpu.memory_space<vmem>>, %arg2: memref<9x8xf32, #tpu.memory_space<vmem>>, %arg3: memref<8x8xbf16, #tpu.memory_space<vmem>>, %arg4: memref<1x8xf32, #tpu.memory_space<vmem>>, %arg5: memref<1x8xf32, #tpu.memory_space<vmem>>, %arg6: memref<9x8xf32, #tpu.memory_space<vmem>>, %arg7: memref<8x8xbf16, #tpu.memory_space<vmem>>, %arg8: memref<1x8xf32, #tpu.memory_space<vmem>>, %arg9: memref<1x8xf32, #tpu.memory_space<vmem>>, %arg10: memref<1x8x8x8xf32, #tpu.memory_space<vmem>>, %arg11: memref<1x8x8x8xf32, #tpu.memory_space<vmem>>, %arg12: memref<1x10x10x8xf32, #tpu.memory_space<vmem>>, %arg13: memref<1x10x10x8xf32, #tpu.memory_space<vmem>>) attributes {dimension_semantics = [#tpu.dimension_semantics<parallel>], iteration_bounds = array<i64: 2>, scalar_prefetch = 0 : i64, scratch_operands = 2 : i64, tpu.core_type = #tpu.core_type<tc>, window_params = [{transform_indices = @transform_0, window_bounds = array<i64: 1, 8, 8, 8>}, {pipeline_mode = #tpu.pipeline_mode<synchronous>, transform_indices = @transform_1, window_bounds = array<i64: 9, 8>}, {pipeline_mode = #tpu.pipeline_mode<synchronous>, transform_indices = @transform_2, window_bounds = array<i64: 8, 8>}, {pipeline_mode = #tpu.pipeline_mode<synchronous>, transform_indices = @transform_3, window_bounds = array<i64: 1, 8>}, {pipeline_mode = #tpu.pipeline_mode<synchronous>, transform_indices = @transform_4, window_bounds = array<i64: 1, 8>}, {pipeline_mode = #tpu.pipeline_mode<synchronous>, transform_indices = @transform_5, window_bounds = array<i64: 9, 8>}, {pipeline_mode = #tpu.pipeline_mode<synchronous>, transform_indices = @transform_6, window_bounds = array<i64: 8, 8>}, {pipeline_mode = #tpu.pipeline_mode<synchronous>, transform_indices = @transform_7, window_bounds = array<i64: 1, 8>}, {pipeline_mode = #tpu.pipeline_mode<synchronous>, transform_indices = @transform_8, window_bounds = array<i64: 1, 8>}, {transform_indices = @transform_9, window_bounds = array<i64: 1, 8, 8, 8>}, {transform_indices = @transform_10, window_bounds = array<i64: 1, 8, 8, 8>}]} {
    %cst = arith.constant 0.000000e+00 : f32
    %0 = vector.broadcast %cst : f32 to vector<1x10x10x8xf32>
    %c0 = arith.constant 0 : index
    %c0_0 = arith.constant 0 : index
    %c0_1 = arith.constant 0 : index
    %c0_2 = arith.constant 0 : index
    %1 = vector.load %arg12[%c0, %c0_0, %c0_1, %c0_2] : memref<1x10x10x8xf32, #tpu.memory_space<vmem>>, vector<1x10x10x8xf32>
    tpu.vector_store %arg12[%c0, %c0_0, %c0_1, %c0_2], %0 {strides = array<i32>} : memref<1x10x10x8xf32, #tpu.memory_space<vmem>>, vector<1x10x10x8xf32>,
    %c0_3 = arith.constant 0 : index
    %c0_4 = arith.constant 0 : index
    %c0_5 = arith.constant 0 : index
    %c0_6 = arith.constant 0 : index
    %2 = vector.load %arg1[%c0_3, %c0_4, %c0_5, %c0_6] : memref<1x8x8x8xf32, #tpu.memory_space<vmem>>, vector<1x8x8x8xf32>
    %cst_7 = arith.constant 0.000000e+00 : f32
    %3 = vector.broadcast %cst_7 : f32 to vector<1x8x8x8xf32>
    %4 = arith.maximumf %2, %3 : vector<1x8x8x8xf32>
    %c0_8 = arith.constant 0 : index
    %c1 = arith.constant 1 : index
    %c1_9 = arith.constant 1 : index
    %c0_10 = arith.constant 0 : index
    %5 = vector.load %arg12[%c0_8, %c1, %c1_9, %c0_10] : memref<1x10x10x8xf32, #tpu.memory_space<vmem>>, vector<1x8x8x8xf32>
    tpu.vector_store %arg12[%c0_8, %c1, %c1_9, %c0_10], %4 {strides = array<i32>} : memref<1x10x10x8xf32, #tpu.memory_space<vmem>>, vector<1x8x8x8xf32>,
    %c0_11 = arith.constant 0 : index
    %c0_12 = arith.constant 0 : index
    %6 = vector.load %arg2[%c0_11, %c0_12] : memref<9x8xf32, #tpu.memory_space<vmem>>, vector<9x8xf32>
    %cst_13 = arith.constant 0.000000e+00 : f32
    %7 = vector.broadcast %cst_13 : f32 to vector<1x8x8x8xf32>
    %c0_14 = arith.constant 0 : index
    %c0_15 = arith.constant 0 : index
    %c0_16 = arith.constant 0 : index
    %c0_17 = arith.constant 0 : index
    %8 = vector.load %arg12[%c0_14, %c0_15, %c0_16, %c0_17] : memref<1x10x10x8xf32, #tpu.memory_space<vmem>>, vector<1x8x8x8xf32>
    %9 = vector.extract_strided_slice %6 {offsets = [0, 0], sizes = [1, 8], strides = [1, 1]} : vector<9x8xf32> to vector<1x8xf32>
    %10 = vector.shape_cast %9 : vector<1x8xf32> to vector<8xf32>
    %11 = vector.shape_cast %10 : vector<8xf32> to vector<1x1x1x8xf32>
    %12 = vector.broadcast %11 : vector<1x1x1x8xf32> to vector<1x8x8x8xf32>
    %13 = arith.mulf %8, %12 : vector<1x8x8x8xf32>
    %14 = arith.addf %7, %13 : vector<1x8x8x8xf32>
    %c0_18 = arith.constant 0 : index
    %c0_19 = arith.constant 0 : index
    %c1_20 = arith.constant 1 : index
    %c0_21 = arith.constant 0 : index
    %15 = vector.load %arg12[%c0_18, %c0_19, %c1_20, %c0_21] : memref<1x10x10x8xf32, #tpu.memory_space<vmem>>, vector<1x8x8x8xf32>
    %16 = vector.extract_strided_slice %6 {offsets = [1, 0], sizes = [1, 8], strides = [1, 1]} : vector<9x8xf32> to vector<1x8xf32>
    %17 = vector.shape_cast %16 : vector<1x8xf32> to vector<8xf32>
    %18 = vector.shape_cast %17 : vector<8xf32> to vector<1x1x1x8xf32>
    %19 = vector.broadcast %18 : vector<1x1x1x8xf32> to vector<1x8x8x8xf32>
    %20 = arith.mulf %15, %19 : vector<1x8x8x8xf32>
    %21 = arith.addf %14, %20 : vector<1x8x8x8xf32>
    %c0_22 = arith.constant 0 : index
    %c0_23 = arith.constant 0 : index
    %c2 = arith.constant 2 : index
    %c0_24 = arith.constant 0 : index
    %22 = vector.load %arg12[%c0_22, %c0_23, %c2, %c0_24] : memref<1x10x10x8xf32, #tpu.memory_space<vmem>>, vector<1x8x8x8xf32>
    %23 = vector.extract_strided_slice %6 {offsets = [2, 0], sizes = [1, 8], strides = [1, 1]} : vector<9x8xf32> to vector<1x8xf32>
    %24 = vector.shape_cast %23 : vector<1x8xf32> to vector<8xf32>
    %25 = vector.shape_cast %24 : vector<8xf32> to vector<1x1x1x8xf32>
    %26 = vector.broadcast %25 : vector<1x1x1x8xf32> to vector<1x8x8x8xf32>
    %27 = arith.mulf %22, %26 : vector<1x8x8x8xf32>
    %28 = arith.addf %21, %27 : vector<1x8x8x8xf32>
    %c0_25 = arith.constant 0 : index
    %c1_26 = arith.constant 1 : index
    %c0_27 = arith.constant 0 : index
    %c0_28 = arith.constant 0 : index
    %29 = vector.load %arg12[%c0_25, %c1_26, %c0_27, %c0_28] : memref<1x10x10x8xf32, #tpu.memory_space<vmem>>, vector<1x8x8x8xf32>
    %30 = vector.extract_strided_slice %6 {offsets = [3, 0], sizes = [1, 8], strides = [1, 1]} : vector<9x8xf32> to vector<1x8xf32>
    %31 = vector.shape_cast %30 : vector<1x8xf32> to vector<8xf32>
    %32 = vector.shape_cast %31 : vector<8xf32> to vector<1x1x1x8xf32>
    %33 = vector.broadcast %32 : vector<1x1x1x8xf32> to vector<1x8x8x8xf32>
    %34 = arith.mulf %29, %33 : vector<1x8x8x8xf32>
    %35 = arith.addf %28, %34 : vector<1x8x8x8xf32>
    %c0_29 = arith.constant 0 : index
    %c1_30 = arith.constant 1 : index
    %c1_31 = arith.constant 1 : index
    %c0_32 = arith.constant 0 : index
    %36 = vector.load %arg12[%c0_29, %c1_30, %c1_31, %c0_32] : memref<1x10x10x8xf32, #tpu.memory_space<vmem>>, vector<1x8x8x8xf32>
    %37 = vector.extract_strided_slice %6 {offsets = [4, 0], sizes = [1, 8], strides = [1, 1]} : vector<9x8xf32> to vector<1x8xf32>
    %38 = vector.shape_cast %37 : vector<1x8xf32> to vector<8xf32>
    %39 = vector.shape_cast %38 : vector<8xf32> to vector<1x1x1x8xf32>
    %40 = vector.broadcast %39 : vector<1x1x1x8xf32> to vector<1x8x8x8xf32>
    %41 = arith.mulf %36, %40 : vector<1x8x8x8xf32>
    %42 = arith.addf %35, %41 : vector<1x8x8x8xf32>
    %c0_33 = arith.constant 0 : index
    %c1_34 = arith.constant 1 : index
    %c2_35 = arith.constant 2 : index
    %c0_36 = arith.constant 0 : index
    %43 = vector.load %arg12[%c0_33, %c1_34, %c2_35, %c0_36] : memref<1x10x10x8xf32, #tpu.memory_space<vmem>>, vector<1x8x8x8xf32>
    %44 = vector.extract_strided_slice %6 {offsets = [5, 0], sizes = [1, 8], strides = [1, 1]} : vector<9x8xf32> to vector<1x8xf32>
    %45 = vector.shape_cast %44 : vector<1x8xf32> to vector<8xf32>
    %46 = vector.shape_cast %45 : vector<8xf32> to vector<1x1x1x8xf32>
    %47 = vector.broadcast %46 : vector<1x1x1x8xf32> to vector<1x8x8x8xf32>
    %48 = arith.mulf %43, %47 : vector<1x8x8x8xf32>
    %49 = arith.addf %42, %48 : vector<1x8x8x8xf32>
    %c0_37 = arith.constant 0 : index
    %c2_38 = arith.constant 2 : index
    %c0_39 = arith.constant 0 : index
    %c0_40 = arith.constant 0 : index
    %50 = vector.load %arg12[%c0_37, %c2_38, %c0_39, %c0_40] : memref<1x10x10x8xf32, #tpu.memory_space<vmem>>, vector<1x8x8x8xf32>
    %51 = vector.extract_strided_slice %6 {offsets = [6, 0], sizes = [1, 8], strides = [1, 1]} : vector<9x8xf32> to vector<1x8xf32>
    %52 = vector.shape_cast %51 : vector<1x8xf32> to vector<8xf32>
    %53 = vector.shape_cast %52 : vector<8xf32> to vector<1x1x1x8xf32>
    %54 = vector.broadcast %53 : vector<1x1x1x8xf32> to vector<1x8x8x8xf32>
    %55 = arith.mulf %50, %54 : vector<1x8x8x8xf32>
    %56 = arith.addf %49, %55 : vector<1x8x8x8xf32>
    %c0_41 = arith.constant 0 : index
    %c2_42 = arith.constant 2 : index
    %c1_43 = arith.constant 1 : index
    %c0_44 = arith.constant 0 : index
    %57 = vector.load %arg12[%c0_41, %c2_42, %c1_43, %c0_44] : memref<1x10x10x8xf32, #tpu.memory_space<vmem>>, vector<1x8x8x8xf32>
    %58 = vector.extract_strided_slice %6 {offsets = [7, 0], sizes = [1, 8], strides = [1, 1]} : vector<9x8xf32> to vector<1x8xf32>
    %59 = vector.shape_cast %58 : vector<1x8xf32> to vector<8xf32>
    %60 = vector.shape_cast %59 : vector<8xf32> to vector<1x1x1x8xf32>
    %61 = vector.broadcast %60 : vector<1x1x1x8xf32> to vector<1x8x8x8xf32>
    %62 = arith.mulf %57, %61 : vector<1x8x8x8xf32>
    %63 = arith.addf %56, %62 : vector<1x8x8x8xf32>
    %c0_45 = arith.constant 0 : index
    %c2_46 = arith.constant 2 : index
    %c2_47 = arith.constant 2 : index
    %c0_48 = arith.constant 0 : index
    %64 = vector.load %arg12[%c0_45, %c2_46, %c2_47, %c0_48] : memref<1x10x10x8xf32, #tpu.memory_space<vmem>>, vector<1x8x8x8xf32>
    %65 = vector.extract_strided_slice %6 {offsets = [8, 0], sizes = [1, 8], strides = [1, 1]} : vector<9x8xf32> to vector<1x8xf32>
    %66 = vector.shape_cast %65 : vector<1x8xf32> to vector<8xf32>
    %67 = vector.shape_cast %66 : vector<8xf32> to vector<1x1x1x8xf32>
    %68 = vector.broadcast %67 : vector<1x1x1x8xf32> to vector<1x8x8x8xf32>
    %69 = arith.mulf %64, %68 : vector<1x8x8x8xf32>
    %70 = arith.addf %63, %69 : vector<1x8x8x8xf32>
    %71 = vector.shape_cast %70 : vector<1x8x8x8xf32> to vector<64x8xf32>
    %72 = arith.truncf %71 : vector<64x8xf32> to vector<64x8xbf16>
    %c0_49 = arith.constant 0 : index
    %c0_50 = arith.constant 0 : index
    %73 = vector.load %arg3[%c0_49, %c0_50] : memref<8x8xbf16, #tpu.memory_space<vmem>>, vector<8x8xbf16>
    %cst_51 = arith.constant dense<0.000000e+00> : vector<64x8xf32>
    %74 = tpu.matmul %72, %73, %cst_51 {dimension_numbers = #tpu.dot_dimension_numbers<[1], [0], [0], [1], [0, 0, 1, 1], [], []>} : vector<64x8xbf16>, vector<8x8xbf16>, vector<64x8xf32> -> vector<64x8xf32>
    %c0_52 = arith.constant 0 : index
    %c0_53 = arith.constant 0 : index
    %75 = vector.load %arg4[%c0_52, %c0_53] : memref<1x8xf32, #tpu.memory_space<vmem>>, vector<1x8xf32>
    %76 = vector.broadcast %75 : vector<1x8xf32> to vector<64x8xf32>
    %77 = arith.mulf %74, %76 : vector<64x8xf32>
    %c0_54 = arith.constant 0 : index
    %c0_55 = arith.constant 0 : index
    %78 = vector.load %arg5[%c0_54, %c0_55] : memref<1x8xf32, #tpu.memory_space<vmem>>, vector<1x8xf32>
    %79 = vector.broadcast %78 : vector<1x8xf32> to vector<64x8xf32>
    %80 = arith.addf %77, %79 : vector<64x8xf32>
    %cst_56 = arith.constant 0.000000e+00 : f32
    %81 = vector.broadcast %cst_56 : f32 to vector<1x10x10x8xf32>
    %c0_57 = arith.constant 0 : index
    %c0_58 = arith.constant 0 : index
    %c0_59 = arith.constant 0 : index
    %c0_60 = arith.constant 0 : index
    %82 = vector.load %arg13[%c0_57, %c0_58, %c0_59, %c0_60] : memref<1x10x10x8xf32, #tpu.memory_space<vmem>>, vector<1x10x10x8xf32>
    tpu.vector_store %arg13[%c0_57, %c0_58, %c0_59, %c0_60], %81 {strides = array<i32>} : memref<1x10x10x8xf32, #tpu.memory_space<vmem>>, vector<1x10x10x8xf32>,
    %cst_61 = arith.constant 0.000000e+00 : f32
    %83 = vector.broadcast %cst_61 : f32 to vector<64x8xf32>
    %84 = arith.maximumf %80, %83 : vector<64x8xf32>
    %85 = vector.shape_cast %84 : vector<64x8xf32> to vector<1x8x8x8xf32>
    %c0_62 = arith.constant 0 : index
    %c1_63 = arith.constant 1 : index
    %c1_64 = arith.constant 1 : index
    %c0_65 = arith.constant 0 : index
    %86 = vector.load %arg13[%c0_62, %c1_63, %c1_64, %c0_65] : memref<1x10x10x8xf32, #tpu.memory_space<vmem>>, vector<1x8x8x8xf32>
    tpu.vector_store %arg13[%c0_62, %c1_63, %c1_64, %c0_65], %85 {strides = array<i32>} : memref<1x10x10x8xf32, #tpu.memory_space<vmem>>, vector<1x8x8x8xf32>,
    %c0_66 = arith.constant 0 : index
    %c0_67 = arith.constant 0 : index
    %87 = vector.load %arg6[%c0_66, %c0_67] : memref<9x8xf32, #tpu.memory_space<vmem>>, vector<9x8xf32>
    %cst_68 = arith.constant 0.000000e+00 : f32
    %88 = vector.broadcast %cst_68 : f32 to vector<1x8x8x8xf32>
    %c0_69 = arith.constant 0 : index
    %c0_70 = arith.constant 0 : index
    %c0_71 = arith.constant 0 : index
    %c0_72 = arith.constant 0 : index
    %89 = vector.load %arg13[%c0_69, %c0_70, %c0_71, %c0_72] : memref<1x10x10x8xf32, #tpu.memory_space<vmem>>, vector<1x8x8x8xf32>
    %90 = vector.extract_strided_slice %87 {offsets = [0, 0], sizes = [1, 8], strides = [1, 1]} : vector<9x8xf32> to vector<1x8xf32>
    %91 = vector.shape_cast %90 : vector<1x8xf32> to vector<8xf32>
    %92 = vector.shape_cast %91 : vector<8xf32> to vector<1x1x1x8xf32>
    %93 = vector.broadcast %92 : vector<1x1x1x8xf32> to vector<1x8x8x8xf32>
    %94 = arith.mulf %89, %93 : vector<1x8x8x8xf32>
    %95 = arith.addf %88, %94 : vector<1x8x8x8xf32>
    %c0_73 = arith.constant 0 : index
    %c0_74 = arith.constant 0 : index
    %c1_75 = arith.constant 1 : index
    %c0_76 = arith.constant 0 : index
    %96 = vector.load %arg13[%c0_73, %c0_74, %c1_75, %c0_76] : memref<1x10x10x8xf32, #tpu.memory_space<vmem>>, vector<1x8x8x8xf32>
    %97 = vector.extract_strided_slice %87 {offsets = [1, 0], sizes = [1, 8], strides = [1, 1]} : vector<9x8xf32> to vector<1x8xf32>
    %98 = vector.shape_cast %97 : vector<1x8xf32> to vector<8xf32>
    %99 = vector.shape_cast %98 : vector<8xf32> to vector<1x1x1x8xf32>
    %100 = vector.broadcast %99 : vector<1x1x1x8xf32> to vector<1x8x8x8xf32>
    %101 = arith.mulf %96, %100 : vector<1x8x8x8xf32>
    %102 = arith.addf %95, %101 : vector<1x8x8x8xf32>
    %c0_77 = arith.constant 0 : index
    %c0_78 = arith.constant 0 : index
    %c2_79 = arith.constant 2 : index
    %c0_80 = arith.constant 0 : index
    %103 = vector.load %arg13[%c0_77, %c0_78, %c2_79, %c0_80] : memref<1x10x10x8xf32, #tpu.memory_space<vmem>>, vector<1x8x8x8xf32>
    %104 = vector.extract_strided_slice %87 {offsets = [2, 0], sizes = [1, 8], strides = [1, 1]} : vector<9x8xf32> to vector<1x8xf32>
    %105 = vector.shape_cast %104 : vector<1x8xf32> to vector<8xf32>
    %106 = vector.shape_cast %105 : vector<8xf32> to vector<1x1x1x8xf32>
    %107 = vector.broadcast %106 : vector<1x1x1x8xf32> to vector<1x8x8x8xf32>
    %108 = arith.mulf %103, %107 : vector<1x8x8x8xf32>
    %109 = arith.addf %102, %108 : vector<1x8x8x8xf32>
    %c0_81 = arith.constant 0 : index
    %c1_82 = arith.constant 1 : index
    %c0_83 = arith.constant 0 : index
    %c0_84 = arith.constant 0 : index
    %110 = vector.load %arg13[%c0_81, %c1_82, %c0_83, %c0_84] : memref<1x10x10x8xf32, #tpu.memory_space<vmem>>, vector<1x8x8x8xf32>
    %111 = vector.extract_strided_slice %87 {offsets = [3, 0], sizes = [1, 8], strides = [1, 1]} : vector<9x8xf32> to vector<1x8xf32>
    %112 = vector.shape_cast %111 : vector<1x8xf32> to vector<8xf32>
    %113 = vector.shape_cast %112 : vector<8xf32> to vector<1x1x1x8xf32>
    %114 = vector.broadcast %113 : vector<1x1x1x8xf32> to vector<1x8x8x8xf32>
    %115 = arith.mulf %110, %114 : vector<1x8x8x8xf32>
    %116 = arith.addf %109, %115 : vector<1x8x8x8xf32>
    %c0_85 = arith.constant 0 : index
    %c1_86 = arith.constant 1 : index
    %c1_87 = arith.constant 1 : index
    %c0_88 = arith.constant 0 : index
    %117 = vector.load %arg13[%c0_85, %c1_86, %c1_87, %c0_88] : memref<1x10x10x8xf32, #tpu.memory_space<vmem>>, vector<1x8x8x8xf32>
    %118 = vector.extract_strided_slice %87 {offsets = [4, 0], sizes = [1, 8], strides = [1, 1]} : vector<9x8xf32> to vector<1x8xf32>
    %119 = vector.shape_cast %118 : vector<1x8xf32> to vector<8xf32>
    %120 = vector.shape_cast %119 : vector<8xf32> to vector<1x1x1x8xf32>
    %121 = vector.broadcast %120 : vector<1x1x1x8xf32> to vector<1x8x8x8xf32>
    %122 = arith.mulf %117, %121 : vector<1x8x8x8xf32>
    %123 = arith.addf %116, %122 : vector<1x8x8x8xf32>
    %c0_89 = arith.constant 0 : index
    %c1_90 = arith.constant 1 : index
    %c2_91 = arith.constant 2 : index
    %c0_92 = arith.constant 0 : index
    %124 = vector.load %arg13[%c0_89, %c1_90, %c2_91, %c0_92] : memref<1x10x10x8xf32, #tpu.memory_space<vmem>>, vector<1x8x8x8xf32>
    %125 = vector.extract_strided_slice %87 {offsets = [5, 0], sizes = [1, 8], strides = [1, 1]} : vector<9x8xf32> to vector<1x8xf32>
    %126 = vector.shape_cast %125 : vector<1x8xf32> to vector<8xf32>
    %127 = vector.shape_cast %126 : vector<8xf32> to vector<1x1x1x8xf32>
    %128 = vector.broadcast %127 : vector<1x1x1x8xf32> to vector<1x8x8x8xf32>
    %129 = arith.mulf %124, %128 : vector<1x8x8x8xf32>
    %130 = arith.addf %123, %129 : vector<1x8x8x8xf32>
    %c0_93 = arith.constant 0 : index
    %c2_94 = arith.constant 2 : index
    %c0_95 = arith.constant 0 : index
    %c0_96 = arith.constant 0 : index
    %131 = vector.load %arg13[%c0_93, %c2_94, %c0_95, %c0_96] : memref<1x10x10x8xf32, #tpu.memory_space<vmem>>, vector<1x8x8x8xf32>
    %132 = vector.extract_strided_slice %87 {offsets = [6, 0], sizes = [1, 8], strides = [1, 1]} : vector<9x8xf32> to vector<1x8xf32>
    %133 = vector.shape_cast %132 : vector<1x8xf32> to vector<8xf32>
    %134 = vector.shape_cast %133 : vector<8xf32> to vector<1x1x1x8xf32>
    %135 = vector.broadcast %134 : vector<1x1x1x8xf32> to vector<1x8x8x8xf32>
    %136 = arith.mulf %131, %135 : vector<1x8x8x8xf32>
    %137 = arith.addf %130, %136 : vector<1x8x8x8xf32>
    %c0_97 = arith.constant 0 : index
    %c2_98 = arith.constant 2 : index
    %c1_99 = arith.constant 1 : index
    %c0_100 = arith.constant 0 : index
    %138 = vector.load %arg13[%c0_97, %c2_98, %c1_99, %c0_100] : memref<1x10x10x8xf32, #tpu.memory_space<vmem>>, vector<1x8x8x8xf32>
    %139 = vector.extract_strided_slice %87 {offsets = [7, 0], sizes = [1, 8], strides = [1, 1]} : vector<9x8xf32> to vector<1x8xf32>
    %140 = vector.shape_cast %139 : vector<1x8xf32> to vector<8xf32>
    %141 = vector.shape_cast %140 : vector<8xf32> to vector<1x1x1x8xf32>
    %142 = vector.broadcast %141 : vector<1x1x1x8xf32> to vector<1x8x8x8xf32>
    %143 = arith.mulf %138, %142 : vector<1x8x8x8xf32>
    %144 = arith.addf %137, %143 : vector<1x8x8x8xf32>
    %c0_101 = arith.constant 0 : index
    %c2_102 = arith.constant 2 : index
    %c2_103 = arith.constant 2 : index
    %c0_104 = arith.constant 0 : index
    %145 = vector.load %arg13[%c0_101, %c2_102, %c2_103, %c0_104] : memref<1x10x10x8xf32, #tpu.memory_space<vmem>>, vector<1x8x8x8xf32>
    %146 = vector.extract_strided_slice %87 {offsets = [8, 0], sizes = [1, 8], strides = [1, 1]} : vector<9x8xf32> to vector<1x8xf32>
    %147 = vector.shape_cast %146 : vector<1x8xf32> to vector<8xf32>
    %148 = vector.shape_cast %147 : vector<8xf32> to vector<1x1x1x8xf32>
    %149 = vector.broadcast %148 : vector<1x1x1x8xf32> to vector<1x8x8x8xf32>
    %150 = arith.mulf %145, %149 : vector<1x8x8x8xf32>
    %151 = arith.addf %144, %150 : vector<1x8x8x8xf32>
    %152 = vector.shape_cast %151 : vector<1x8x8x8xf32> to vector<64x8xf32>
    %153 = arith.truncf %152 : vector<64x8xf32> to vector<64x8xbf16>
    %c0_105 = arith.constant 0 : index
    %c0_106 = arith.constant 0 : index
    %154 = vector.load %arg7[%c0_105, %c0_106] : memref<8x8xbf16, #tpu.memory_space<vmem>>, vector<8x8xbf16>
    %cst_107 = arith.constant dense<0.000000e+00> : vector<64x8xf32>
    %155 = tpu.matmul %153, %154, %cst_107 {dimension_numbers = #tpu.dot_dimension_numbers<[1], [0], [0], [1], [0, 0, 1, 1], [], []>} : vector<64x8xbf16>, vector<8x8xbf16>, vector<64x8xf32> -> vector<64x8xf32>
    %c0_108 = arith.constant 0 : index
    %c0_109 = arith.constant 0 : index
    %156 = vector.load %arg8[%c0_108, %c0_109] : memref<1x8xf32, #tpu.memory_space<vmem>>, vector<1x8xf32>
    %157 = vector.broadcast %156 : vector<1x8xf32> to vector<64x8xf32>
    %158 = arith.mulf %155, %157 : vector<64x8xf32>
    %c0_110 = arith.constant 0 : index
    %c0_111 = arith.constant 0 : index
    %159 = vector.load %arg9[%c0_110, %c0_111] : memref<1x8xf32, #tpu.memory_space<vmem>>, vector<1x8xf32>
    %160 = vector.broadcast %159 : vector<1x8xf32> to vector<64x8xf32>
    %161 = arith.addf %158, %160 : vector<64x8xf32>
    %162 = vector.shape_cast %161 : vector<64x8xf32> to vector<1x8x8x8xf32>
    %c0_112 = arith.constant 0 : index
    %c0_113 = arith.constant 0 : index
    %c0_114 = arith.constant 0 : index
    %c0_115 = arith.constant 0 : index
    %163 = vector.load %arg10[%c0_112, %c0_113, %c0_114, %c0_115] : memref<1x8x8x8xf32, #tpu.memory_space<vmem>>, vector<1x8x8x8xf32>
    %164 = arith.addf %162, %163 : vector<1x8x8x8xf32>
    %c0_116 = arith.constant 0 : index
    %c0_117 = arith.constant 0 : index
    %c0_118 = arith.constant 0 : index
    %c0_119 = arith.constant 0 : index
    %165 = vector.load %arg11[%c0_116, %c0_117, %c0_118, %c0_119] : memref<1x8x8x8xf32, #tpu.memory_space<vmem>>, vector<1x8x8x8xf32>
    tpu.vector_store %arg11[%c0_116, %c0_117, %c0_118, %c0_119], %164 {strides = array<i32>} : memref<1x8x8x8xf32, #tpu.memory_space<vmem>>, vector<1x8x8x8xf32>,
    return
  }
  func.func @transform_0(%arg0: i32) -> (i32, i32, i32, i32) {
    %c0_i32 = arith.constant 0 : i32
    %c0_i32_0 = arith.constant 0 : i32
    %c0_i32_1 = arith.constant 0 : i32
    %c0_i32_2 = arith.constant 0 : i32
    return %arg0, %c0_i32, %c0_i32_0, %c0_i32_1 : i32, i32, i32, i32
  }
  func.func @transform_1(%arg0: i32) -> (i32, i32) {
    %c0_i32 = arith.constant 0 : i32
    %c0_i32_0 = arith.constant 0 : i32
    %c0_i32_1 = arith.constant 0 : i32
    return %c0_i32, %c0_i32_0 : i32, i32
  }
  func.func @transform_2(%arg0: i32) -> (i32, i32) {
    %c0_i32 = arith.constant 0 : i32
    %c0_i32_0 = arith.constant 0 : i32
    %c0_i32_1 = arith.constant 0 : i32
    return %c0_i32, %c0_i32_0 : i32, i32
  }
  func.func @transform_3(%arg0: i32) -> (i32, i32) {
    %c0_i32 = arith.constant 0 : i32
    %c0_i32_0 = arith.constant 0 : i32
    %c0_i32_1 = arith.constant 0 : i32
    return %c0_i32, %c0_i32_0 : i32, i32
  }
  func.func @transform_4(%arg0: i32) -> (i32, i32) {
    %c0_i32 = arith.constant 0 : i32
    %c0_i32_0 = arith.constant 0 : i32
    %c0_i32_1 = arith.constant 0 : i32
    return %c0_i32, %c0_i32_0 : i32, i32
  }
  func.func @transform_5(%arg0: i32) -> (i32, i32) {
    %c0_i32 = arith.constant 0 : i32
    %c0_i32_0 = arith.constant 0 : i32
    %c0_i32_1 = arith.constant 0 : i32
    return %c0_i32, %c0_i32_0 : i32, i32
  }
  func.func @transform_6(%arg0: i32) -> (i32, i32) {
    %c0_i32 = arith.constant 0 : i32
    %c0_i32_0 = arith.constant 0 : i32
    %c0_i32_1 = arith.constant 0 : i32
    return %c0_i32, %c0_i32_0 : i32, i32
  }
  func.func @transform_7(%arg0: i32) -> (i32, i32) {
    %c0_i32 = arith.constant 0 : i32
    %c0_i32_0 = arith.constant 0 : i32
    %c0_i32_1 = arith.constant 0 : i32
    return %c0_i32, %c0_i32_0 : i32, i32
  }
  func.func @transform_8(%arg0: i32) -> (i32, i32) {
    %c0_i32 = arith.constant 0 : i32
    %c0_i32_0 = arith.constant 0 : i32
    %c0_i32_1 = arith.constant 0 : i32
    return %c0_i32, %c0_i32_0 : i32, i32
  }
  func.func @transform_9(%arg0: i32) -> (i32, i32, i32, i32) {
    %c0_i32 = arith.constant 0 : i32
    %c0_i32_0 = arith.constant 0 : i32
    %c0_i32_1 = arith.constant 0 : i32
    %c0_i32_2 = arith.constant 0 : i32
    return %arg0, %c0_i32, %c0_i32_0, %c0_i32_1 : i32, i32, i32, i32
  }
  func.func @transform_10(%arg0: i32) -> (i32, i32, i32, i32) {
    %c0_i32 = arith.constant 0 : i32
    %c0_i32_0 = arith.constant 0 : i32
    %c0_i32_1 = arith.constant 0 : i32
    %c0_i32_2 = arith.constant 0 : i32
    return %arg0, %c0_i32, %c0_i32_0, %c0_i32_1 : i32, i32, i32, i32
  }
}

module attributes {stable_mosaic.version = 11 : i64} {
  func.func @_maxpool3x3_kernel(%arg0: i32, %arg1: memref<1x8x64xf32, #tpu.memory_space<vmem>>, %arg2: memref<1x8x64xf32, #tpu.memory_space<vmem>>, %arg3: memref<1x8x64xf32, #tpu.memory_space<vmem>>, %arg4: memref<1x10x80xf32, #tpu.memory_space<vmem>>) attributes {dimension_semantics = [#tpu.dimension_semantics<parallel>], iteration_bounds = array<i64: 2>, scalar_prefetch = 0 : i64, scratch_operands = 1 : i64, tpu.core_type = #tpu.core_type<tc>, window_params = [{transform_indices = @transform_0, window_bounds = array<i64: 1, 8, 64>}, {transform_indices = @transform_1, window_bounds = array<i64: 1, 8, 64>}, {transform_indices = @transform_2, window_bounds = array<i64: 1, 8, 64>}]} {
    %cst = arith.constant 0xFF800000 : f32
    %0 = vector.broadcast %cst : f32 to vector<1x10x80xf32>
    %c0 = arith.constant 0 : index
    %c0_0 = arith.constant 0 : index
    %c0_1 = arith.constant 0 : index
    %1 = vector.load %arg4[%c0, %c0_0, %c0_1] : memref<1x10x80xf32, #tpu.memory_space<vmem>>, vector<1x10x80xf32>
    tpu.vector_store %arg4[%c0, %c0_0, %c0_1], %0 {strides = array<i32>} : memref<1x10x80xf32, #tpu.memory_space<vmem>>, vector<1x10x80xf32>,
    %c0_2 = arith.constant 0 : index
    %c0_3 = arith.constant 0 : index
    %c0_4 = arith.constant 0 : index
    %2 = vector.load %arg1[%c0_2, %c0_3, %c0_4] : memref<1x8x64xf32, #tpu.memory_space<vmem>>, vector<1x8x64xf32>
    %c0_5 = arith.constant 0 : index
    %c1 = arith.constant 1 : index
    %c8 = arith.constant 8 : index
    %3 = vector.load %arg4[%c0_5, %c1, %c8] : memref<1x10x80xf32, #tpu.memory_space<vmem>>, vector<1x8x64xf32>
    tpu.vector_store %arg4[%c0_5, %c1, %c8], %2 {strides = array<i32>} : memref<1x10x80xf32, #tpu.memory_space<vmem>>, vector<1x8x64xf32>,
    %cst_6 = arith.constant 0xFF800000 : f32
    %4 = vector.broadcast %cst_6 : f32 to vector<1x8x64xf32>
    %c0_7 = arith.constant 0 : index
    %c0_8 = arith.constant 0 : index
    %c0_9 = arith.constant 0 : index
    %5 = vector.load %arg4[%c0_7, %c0_8, %c0_9] : memref<1x10x80xf32, #tpu.memory_space<vmem>>, vector<1x8x64xf32>
    %6 = arith.maximumf %4, %5 : vector<1x8x64xf32>
    %c0_10 = arith.constant 0 : index
    %c0_11 = arith.constant 0 : index
    %c8_12 = arith.constant 8 : index
    %7 = vector.load %arg4[%c0_10, %c0_11, %c8_12] : memref<1x10x80xf32, #tpu.memory_space<vmem>>, vector<1x8x64xf32>
    %8 = arith.maximumf %6, %7 : vector<1x8x64xf32>
    %c0_13 = arith.constant 0 : index
    %c0_14 = arith.constant 0 : index
    %c16 = arith.constant 16 : index
    %9 = vector.load %arg4[%c0_13, %c0_14, %c16] : memref<1x10x80xf32, #tpu.memory_space<vmem>>, vector<1x8x64xf32>
    %10 = arith.maximumf %8, %9 : vector<1x8x64xf32>
    %c0_15 = arith.constant 0 : index
    %c1_16 = arith.constant 1 : index
    %c0_17 = arith.constant 0 : index
    %11 = vector.load %arg4[%c0_15, %c1_16, %c0_17] : memref<1x10x80xf32, #tpu.memory_space<vmem>>, vector<1x8x64xf32>
    %12 = arith.maximumf %10, %11 : vector<1x8x64xf32>
    %c0_18 = arith.constant 0 : index
    %c1_19 = arith.constant 1 : index
    %c8_20 = arith.constant 8 : index
    %13 = vector.load %arg4[%c0_18, %c1_19, %c8_20] : memref<1x10x80xf32, #tpu.memory_space<vmem>>, vector<1x8x64xf32>
    %14 = arith.maximumf %12, %13 : vector<1x8x64xf32>
    %c0_21 = arith.constant 0 : index
    %c1_22 = arith.constant 1 : index
    %c16_23 = arith.constant 16 : index
    %15 = vector.load %arg4[%c0_21, %c1_22, %c16_23] : memref<1x10x80xf32, #tpu.memory_space<vmem>>, vector<1x8x64xf32>
    %16 = arith.maximumf %14, %15 : vector<1x8x64xf32>
    %c0_24 = arith.constant 0 : index
    %c2 = arith.constant 2 : index
    %c0_25 = arith.constant 0 : index
    %17 = vector.load %arg4[%c0_24, %c2, %c0_25] : memref<1x10x80xf32, #tpu.memory_space<vmem>>, vector<1x8x64xf32>
    %18 = arith.maximumf %16, %17 : vector<1x8x64xf32>
    %c0_26 = arith.constant 0 : index
    %c2_27 = arith.constant 2 : index
    %c8_28 = arith.constant 8 : index
    %19 = vector.load %arg4[%c0_26, %c2_27, %c8_28] : memref<1x10x80xf32, #tpu.memory_space<vmem>>, vector<1x8x64xf32>
    %20 = arith.maximumf %18, %19 : vector<1x8x64xf32>
    %c0_29 = arith.constant 0 : index
    %c2_30 = arith.constant 2 : index
    %c16_31 = arith.constant 16 : index
    %21 = vector.load %arg4[%c0_29, %c2_30, %c16_31] : memref<1x10x80xf32, #tpu.memory_space<vmem>>, vector<1x8x64xf32>
    %22 = arith.maximumf %20, %21 : vector<1x8x64xf32>
    %c0_32 = arith.constant 0 : index
    %c0_33 = arith.constant 0 : index
    %c0_34 = arith.constant 0 : index
    %23 = vector.load %arg2[%c0_32, %c0_33, %c0_34] : memref<1x8x64xf32, #tpu.memory_space<vmem>>, vector<1x8x64xf32>
    %24 = arith.addf %22, %23 : vector<1x8x64xf32>
    %c0_35 = arith.constant 0 : index
    %c0_36 = arith.constant 0 : index
    %c0_37 = arith.constant 0 : index
    %25 = vector.load %arg3[%c0_35, %c0_36, %c0_37] : memref<1x8x64xf32, #tpu.memory_space<vmem>>, vector<1x8x64xf32>
    tpu.vector_store %arg3[%c0_35, %c0_36, %c0_37], %24 {strides = array<i32>} : memref<1x8x64xf32, #tpu.memory_space<vmem>>, vector<1x8x64xf32>,
    return
  }
  func.func @transform_0(%arg0: i32) -> (i32, i32, i32) {
    %c0_i32 = arith.constant 0 : i32
    %c0_i32_0 = arith.constant 0 : i32
    %c0_i32_1 = arith.constant 0 : i32
    return %arg0, %c0_i32, %c0_i32_0 : i32, i32, i32
  }
  func.func @transform_1(%arg0: i32) -> (i32, i32, i32) {
    %c0_i32 = arith.constant 0 : i32
    %c0_i32_0 = arith.constant 0 : i32
    %c0_i32_1 = arith.constant 0 : i32
    return %arg0, %c0_i32, %c0_i32_0 : i32, i32, i32
  }
  func.func @transform_2(%arg0: i32) -> (i32, i32, i32) {
    %c0_i32 = arith.constant 0 : i32
    %c0_i32_0 = arith.constant 0 : i32
    %c0_i32_1 = arith.constant 0 : i32
    return %arg0, %c0_i32, %c0_i32_0 : i32, i32, i32
  }
}

module attributes {stable_mosaic.version = 11 : i64} {
  func.func @_sepconv3x3_kernel(%arg0: i32, %arg1: memref<1x8x8x8xf32, #tpu.memory_space<vmem>>, %arg2: memref<9x8xf32, #tpu.memory_space<vmem>>, %arg3: memref<8x8xbf16, #tpu.memory_space<vmem>>, %arg4: memref<1x8xf32, #tpu.memory_space<vmem>>, %arg5: memref<1x8xf32, #tpu.memory_space<vmem>>, %arg6: memref<9x8xf32, #tpu.memory_space<vmem>>, %arg7: memref<8x8xbf16, #tpu.memory_space<vmem>>, %arg8: memref<1x8xf32, #tpu.memory_space<vmem>>, %arg9: memref<1x8xf32, #tpu.memory_space<vmem>>, %arg10: memref<1x8x8x8xf32, #tpu.memory_space<vmem>>, %arg11: memref<1x10x10x8xf32, #tpu.memory_space<vmem>>, %arg12: memref<1x10x10x8xf32, #tpu.memory_space<vmem>>) attributes {dimension_semantics = [#tpu.dimension_semantics<parallel>], iteration_bounds = array<i64: 2>, scalar_prefetch = 0 : i64, scratch_operands = 2 : i64, tpu.core_type = #tpu.core_type<tc>, window_params = [{transform_indices = @transform_0, window_bounds = array<i64: 1, 8, 8, 8>}, {pipeline_mode = #tpu.pipeline_mode<synchronous>, transform_indices = @transform_1, window_bounds = array<i64: 9, 8>}, {pipeline_mode = #tpu.pipeline_mode<synchronous>, transform_indices = @transform_2, window_bounds = array<i64: 8, 8>}, {pipeline_mode = #tpu.pipeline_mode<synchronous>, transform_indices = @transform_3, window_bounds = array<i64: 1, 8>}, {pipeline_mode = #tpu.pipeline_mode<synchronous>, transform_indices = @transform_4, window_bounds = array<i64: 1, 8>}, {pipeline_mode = #tpu.pipeline_mode<synchronous>, transform_indices = @transform_5, window_bounds = array<i64: 9, 8>}, {pipeline_mode = #tpu.pipeline_mode<synchronous>, transform_indices = @transform_6, window_bounds = array<i64: 8, 8>}, {pipeline_mode = #tpu.pipeline_mode<synchronous>, transform_indices = @transform_7, window_bounds = array<i64: 1, 8>}, {pipeline_mode = #tpu.pipeline_mode<synchronous>, transform_indices = @transform_8, window_bounds = array<i64: 1, 8>}, {transform_indices = @transform_9, window_bounds = array<i64: 1, 8, 8, 8>}]} {
    %cst = arith.constant 0.000000e+00 : f32
    %0 = vector.broadcast %cst : f32 to vector<1x10x10x8xf32>
    %c0 = arith.constant 0 : index
    %c0_0 = arith.constant 0 : index
    %c0_1 = arith.constant 0 : index
    %c0_2 = arith.constant 0 : index
    %1 = vector.load %arg11[%c0, %c0_0, %c0_1, %c0_2] : memref<1x10x10x8xf32, #tpu.memory_space<vmem>>, vector<1x10x10x8xf32>
    tpu.vector_store %arg11[%c0, %c0_0, %c0_1, %c0_2], %0 {strides = array<i32>} : memref<1x10x10x8xf32, #tpu.memory_space<vmem>>, vector<1x10x10x8xf32>,
    %c0_3 = arith.constant 0 : index
    %c0_4 = arith.constant 0 : index
    %c0_5 = arith.constant 0 : index
    %c0_6 = arith.constant 0 : index
    %2 = vector.load %arg1[%c0_3, %c0_4, %c0_5, %c0_6] : memref<1x8x8x8xf32, #tpu.memory_space<vmem>>, vector<1x8x8x8xf32>
    %cst_7 = arith.constant 0.000000e+00 : f32
    %3 = vector.broadcast %cst_7 : f32 to vector<1x8x8x8xf32>
    %4 = arith.maximumf %2, %3 : vector<1x8x8x8xf32>
    %c0_8 = arith.constant 0 : index
    %c1 = arith.constant 1 : index
    %c1_9 = arith.constant 1 : index
    %c0_10 = arith.constant 0 : index
    %5 = vector.load %arg11[%c0_8, %c1, %c1_9, %c0_10] : memref<1x10x10x8xf32, #tpu.memory_space<vmem>>, vector<1x8x8x8xf32>
    tpu.vector_store %arg11[%c0_8, %c1, %c1_9, %c0_10], %4 {strides = array<i32>} : memref<1x10x10x8xf32, #tpu.memory_space<vmem>>, vector<1x8x8x8xf32>,
    %c0_11 = arith.constant 0 : index
    %c0_12 = arith.constant 0 : index
    %6 = vector.load %arg2[%c0_11, %c0_12] : memref<9x8xf32, #tpu.memory_space<vmem>>, vector<9x8xf32>
    %cst_13 = arith.constant 0.000000e+00 : f32
    %7 = vector.broadcast %cst_13 : f32 to vector<1x8x8x8xf32>
    %c0_14 = arith.constant 0 : index
    %c0_15 = arith.constant 0 : index
    %c0_16 = arith.constant 0 : index
    %c0_17 = arith.constant 0 : index
    %8 = vector.load %arg11[%c0_14, %c0_15, %c0_16, %c0_17] : memref<1x10x10x8xf32, #tpu.memory_space<vmem>>, vector<1x8x8x8xf32>
    %9 = vector.extract_strided_slice %6 {offsets = [0, 0], sizes = [1, 8], strides = [1, 1]} : vector<9x8xf32> to vector<1x8xf32>
    %10 = vector.shape_cast %9 : vector<1x8xf32> to vector<8xf32>
    %11 = vector.shape_cast %10 : vector<8xf32> to vector<1x1x1x8xf32>
    %12 = vector.broadcast %11 : vector<1x1x1x8xf32> to vector<1x8x8x8xf32>
    %13 = arith.mulf %8, %12 : vector<1x8x8x8xf32>
    %14 = arith.addf %7, %13 : vector<1x8x8x8xf32>
    %c0_18 = arith.constant 0 : index
    %c0_19 = arith.constant 0 : index
    %c1_20 = arith.constant 1 : index
    %c0_21 = arith.constant 0 : index
    %15 = vector.load %arg11[%c0_18, %c0_19, %c1_20, %c0_21] : memref<1x10x10x8xf32, #tpu.memory_space<vmem>>, vector<1x8x8x8xf32>
    %16 = vector.extract_strided_slice %6 {offsets = [1, 0], sizes = [1, 8], strides = [1, 1]} : vector<9x8xf32> to vector<1x8xf32>
    %17 = vector.shape_cast %16 : vector<1x8xf32> to vector<8xf32>
    %18 = vector.shape_cast %17 : vector<8xf32> to vector<1x1x1x8xf32>
    %19 = vector.broadcast %18 : vector<1x1x1x8xf32> to vector<1x8x8x8xf32>
    %20 = arith.mulf %15, %19 : vector<1x8x8x8xf32>
    %21 = arith.addf %14, %20 : vector<1x8x8x8xf32>
    %c0_22 = arith.constant 0 : index
    %c0_23 = arith.constant 0 : index
    %c2 = arith.constant 2 : index
    %c0_24 = arith.constant 0 : index
    %22 = vector.load %arg11[%c0_22, %c0_23, %c2, %c0_24] : memref<1x10x10x8xf32, #tpu.memory_space<vmem>>, vector<1x8x8x8xf32>
    %23 = vector.extract_strided_slice %6 {offsets = [2, 0], sizes = [1, 8], strides = [1, 1]} : vector<9x8xf32> to vector<1x8xf32>
    %24 = vector.shape_cast %23 : vector<1x8xf32> to vector<8xf32>
    %25 = vector.shape_cast %24 : vector<8xf32> to vector<1x1x1x8xf32>
    %26 = vector.broadcast %25 : vector<1x1x1x8xf32> to vector<1x8x8x8xf32>
    %27 = arith.mulf %22, %26 : vector<1x8x8x8xf32>
    %28 = arith.addf %21, %27 : vector<1x8x8x8xf32>
    %c0_25 = arith.constant 0 : index
    %c1_26 = arith.constant 1 : index
    %c0_27 = arith.constant 0 : index
    %c0_28 = arith.constant 0 : index
    %29 = vector.load %arg11[%c0_25, %c1_26, %c0_27, %c0_28] : memref<1x10x10x8xf32, #tpu.memory_space<vmem>>, vector<1x8x8x8xf32>
    %30 = vector.extract_strided_slice %6 {offsets = [3, 0], sizes = [1, 8], strides = [1, 1]} : vector<9x8xf32> to vector<1x8xf32>
    %31 = vector.shape_cast %30 : vector<1x8xf32> to vector<8xf32>
    %32 = vector.shape_cast %31 : vector<8xf32> to vector<1x1x1x8xf32>
    %33 = vector.broadcast %32 : vector<1x1x1x8xf32> to vector<1x8x8x8xf32>
    %34 = arith.mulf %29, %33 : vector<1x8x8x8xf32>
    %35 = arith.addf %28, %34 : vector<1x8x8x8xf32>
    %c0_29 = arith.constant 0 : index
    %c1_30 = arith.constant 1 : index
    %c1_31 = arith.constant 1 : index
    %c0_32 = arith.constant 0 : index
    %36 = vector.load %arg11[%c0_29, %c1_30, %c1_31, %c0_32] : memref<1x10x10x8xf32, #tpu.memory_space<vmem>>, vector<1x8x8x8xf32>
    %37 = vector.extract_strided_slice %6 {offsets = [4, 0], sizes = [1, 8], strides = [1, 1]} : vector<9x8xf32> to vector<1x8xf32>
    %38 = vector.shape_cast %37 : vector<1x8xf32> to vector<8xf32>
    %39 = vector.shape_cast %38 : vector<8xf32> to vector<1x1x1x8xf32>
    %40 = vector.broadcast %39 : vector<1x1x1x8xf32> to vector<1x8x8x8xf32>
    %41 = arith.mulf %36, %40 : vector<1x8x8x8xf32>
    %42 = arith.addf %35, %41 : vector<1x8x8x8xf32>
    %c0_33 = arith.constant 0 : index
    %c1_34 = arith.constant 1 : index
    %c2_35 = arith.constant 2 : index
    %c0_36 = arith.constant 0 : index
    %43 = vector.load %arg11[%c0_33, %c1_34, %c2_35, %c0_36] : memref<1x10x10x8xf32, #tpu.memory_space<vmem>>, vector<1x8x8x8xf32>
    %44 = vector.extract_strided_slice %6 {offsets = [5, 0], sizes = [1, 8], strides = [1, 1]} : vector<9x8xf32> to vector<1x8xf32>
    %45 = vector.shape_cast %44 : vector<1x8xf32> to vector<8xf32>
    %46 = vector.shape_cast %45 : vector<8xf32> to vector<1x1x1x8xf32>
    %47 = vector.broadcast %46 : vector<1x1x1x8xf32> to vector<1x8x8x8xf32>
    %48 = arith.mulf %43, %47 : vector<1x8x8x8xf32>
    %49 = arith.addf %42, %48 : vector<1x8x8x8xf32>
    %c0_37 = arith.constant 0 : index
    %c2_38 = arith.constant 2 : index
    %c0_39 = arith.constant 0 : index
    %c0_40 = arith.constant 0 : index
    %50 = vector.load %arg11[%c0_37, %c2_38, %c0_39, %c0_40] : memref<1x10x10x8xf32, #tpu.memory_space<vmem>>, vector<1x8x8x8xf32>
    %51 = vector.extract_strided_slice %6 {offsets = [6, 0], sizes = [1, 8], strides = [1, 1]} : vector<9x8xf32> to vector<1x8xf32>
    %52 = vector.shape_cast %51 : vector<1x8xf32> to vector<8xf32>
    %53 = vector.shape_cast %52 : vector<8xf32> to vector<1x1x1x8xf32>
    %54 = vector.broadcast %53 : vector<1x1x1x8xf32> to vector<1x8x8x8xf32>
    %55 = arith.mulf %50, %54 : vector<1x8x8x8xf32>
    %56 = arith.addf %49, %55 : vector<1x8x8x8xf32>
    %c0_41 = arith.constant 0 : index
    %c2_42 = arith.constant 2 : index
    %c1_43 = arith.constant 1 : index
    %c0_44 = arith.constant 0 : index
    %57 = vector.load %arg11[%c0_41, %c2_42, %c1_43, %c0_44] : memref<1x10x10x8xf32, #tpu.memory_space<vmem>>, vector<1x8x8x8xf32>
    %58 = vector.extract_strided_slice %6 {offsets = [7, 0], sizes = [1, 8], strides = [1, 1]} : vector<9x8xf32> to vector<1x8xf32>
    %59 = vector.shape_cast %58 : vector<1x8xf32> to vector<8xf32>
    %60 = vector.shape_cast %59 : vector<8xf32> to vector<1x1x1x8xf32>
    %61 = vector.broadcast %60 : vector<1x1x1x8xf32> to vector<1x8x8x8xf32>
    %62 = arith.mulf %57, %61 : vector<1x8x8x8xf32>
    %63 = arith.addf %56, %62 : vector<1x8x8x8xf32>
    %c0_45 = arith.constant 0 : index
    %c2_46 = arith.constant 2 : index
    %c2_47 = arith.constant 2 : index
    %c0_48 = arith.constant 0 : index
    %64 = vector.load %arg11[%c0_45, %c2_46, %c2_47, %c0_48] : memref<1x10x10x8xf32, #tpu.memory_space<vmem>>, vector<1x8x8x8xf32>
    %65 = vector.extract_strided_slice %6 {offsets = [8, 0], sizes = [1, 8], strides = [1, 1]} : vector<9x8xf32> to vector<1x8xf32>
    %66 = vector.shape_cast %65 : vector<1x8xf32> to vector<8xf32>
    %67 = vector.shape_cast %66 : vector<8xf32> to vector<1x1x1x8xf32>
    %68 = vector.broadcast %67 : vector<1x1x1x8xf32> to vector<1x8x8x8xf32>
    %69 = arith.mulf %64, %68 : vector<1x8x8x8xf32>
    %70 = arith.addf %63, %69 : vector<1x8x8x8xf32>
    %71 = vector.shape_cast %70 : vector<1x8x8x8xf32> to vector<64x8xf32>
    %72 = arith.truncf %71 : vector<64x8xf32> to vector<64x8xbf16>
    %c0_49 = arith.constant 0 : index
    %c0_50 = arith.constant 0 : index
    %73 = vector.load %arg3[%c0_49, %c0_50] : memref<8x8xbf16, #tpu.memory_space<vmem>>, vector<8x8xbf16>
    %cst_51 = arith.constant dense<0.000000e+00> : vector<64x8xf32>
    %74 = tpu.matmul %72, %73, %cst_51 {dimension_numbers = #tpu.dot_dimension_numbers<[1], [0], [0], [1], [0, 0, 1, 1], [], []>} : vector<64x8xbf16>, vector<8x8xbf16>, vector<64x8xf32> -> vector<64x8xf32>
    %c0_52 = arith.constant 0 : index
    %c0_53 = arith.constant 0 : index
    %75 = vector.load %arg4[%c0_52, %c0_53] : memref<1x8xf32, #tpu.memory_space<vmem>>, vector<1x8xf32>
    %76 = vector.broadcast %75 : vector<1x8xf32> to vector<64x8xf32>
    %77 = arith.mulf %74, %76 : vector<64x8xf32>
    %c0_54 = arith.constant 0 : index
    %c0_55 = arith.constant 0 : index
    %78 = vector.load %arg5[%c0_54, %c0_55] : memref<1x8xf32, #tpu.memory_space<vmem>>, vector<1x8xf32>
    %79 = vector.broadcast %78 : vector<1x8xf32> to vector<64x8xf32>
    %80 = arith.addf %77, %79 : vector<64x8xf32>
    %cst_56 = arith.constant 0.000000e+00 : f32
    %81 = vector.broadcast %cst_56 : f32 to vector<1x10x10x8xf32>
    %c0_57 = arith.constant 0 : index
    %c0_58 = arith.constant 0 : index
    %c0_59 = arith.constant 0 : index
    %c0_60 = arith.constant 0 : index
    %82 = vector.load %arg12[%c0_57, %c0_58, %c0_59, %c0_60] : memref<1x10x10x8xf32, #tpu.memory_space<vmem>>, vector<1x10x10x8xf32>
    tpu.vector_store %arg12[%c0_57, %c0_58, %c0_59, %c0_60], %81 {strides = array<i32>} : memref<1x10x10x8xf32, #tpu.memory_space<vmem>>, vector<1x10x10x8xf32>,
    %cst_61 = arith.constant 0.000000e+00 : f32
    %83 = vector.broadcast %cst_61 : f32 to vector<64x8xf32>
    %84 = arith.maximumf %80, %83 : vector<64x8xf32>
    %85 = vector.shape_cast %84 : vector<64x8xf32> to vector<1x8x8x8xf32>
    %c0_62 = arith.constant 0 : index
    %c1_63 = arith.constant 1 : index
    %c1_64 = arith.constant 1 : index
    %c0_65 = arith.constant 0 : index
    %86 = vector.load %arg12[%c0_62, %c1_63, %c1_64, %c0_65] : memref<1x10x10x8xf32, #tpu.memory_space<vmem>>, vector<1x8x8x8xf32>
    tpu.vector_store %arg12[%c0_62, %c1_63, %c1_64, %c0_65], %85 {strides = array<i32>} : memref<1x10x10x8xf32, #tpu.memory_space<vmem>>, vector<1x8x8x8xf32>,
    %c0_66 = arith.constant 0 : index
    %c0_67 = arith.constant 0 : index
    %87 = vector.load %arg6[%c0_66, %c0_67] : memref<9x8xf32, #tpu.memory_space<vmem>>, vector<9x8xf32>
    %cst_68 = arith.constant 0.000000e+00 : f32
    %88 = vector.broadcast %cst_68 : f32 to vector<1x8x8x8xf32>
    %c0_69 = arith.constant 0 : index
    %c0_70 = arith.constant 0 : index
    %c0_71 = arith.constant 0 : index
    %c0_72 = arith.constant 0 : index
    %89 = vector.load %arg12[%c0_69, %c0_70, %c0_71, %c0_72] : memref<1x10x10x8xf32, #tpu.memory_space<vmem>>, vector<1x8x8x8xf32>
    %90 = vector.extract_strided_slice %87 {offsets = [0, 0], sizes = [1, 8], strides = [1, 1]} : vector<9x8xf32> to vector<1x8xf32>
    %91 = vector.shape_cast %90 : vector<1x8xf32> to vector<8xf32>
    %92 = vector.shape_cast %91 : vector<8xf32> to vector<1x1x1x8xf32>
    %93 = vector.broadcast %92 : vector<1x1x1x8xf32> to vector<1x8x8x8xf32>
    %94 = arith.mulf %89, %93 : vector<1x8x8x8xf32>
    %95 = arith.addf %88, %94 : vector<1x8x8x8xf32>
    %c0_73 = arith.constant 0 : index
    %c0_74 = arith.constant 0 : index
    %c1_75 = arith.constant 1 : index
    %c0_76 = arith.constant 0 : index
    %96 = vector.load %arg12[%c0_73, %c0_74, %c1_75, %c0_76] : memref<1x10x10x8xf32, #tpu.memory_space<vmem>>, vector<1x8x8x8xf32>
    %97 = vector.extract_strided_slice %87 {offsets = [1, 0], sizes = [1, 8], strides = [1, 1]} : vector<9x8xf32> to vector<1x8xf32>
    %98 = vector.shape_cast %97 : vector<1x8xf32> to vector<8xf32>
    %99 = vector.shape_cast %98 : vector<8xf32> to vector<1x1x1x8xf32>
    %100 = vector.broadcast %99 : vector<1x1x1x8xf32> to vector<1x8x8x8xf32>
    %101 = arith.mulf %96, %100 : vector<1x8x8x8xf32>
    %102 = arith.addf %95, %101 : vector<1x8x8x8xf32>
    %c0_77 = arith.constant 0 : index
    %c0_78 = arith.constant 0 : index
    %c2_79 = arith.constant 2 : index
    %c0_80 = arith.constant 0 : index
    %103 = vector.load %arg12[%c0_77, %c0_78, %c2_79, %c0_80] : memref<1x10x10x8xf32, #tpu.memory_space<vmem>>, vector<1x8x8x8xf32>
    %104 = vector.extract_strided_slice %87 {offsets = [2, 0], sizes = [1, 8], strides = [1, 1]} : vector<9x8xf32> to vector<1x8xf32>
    %105 = vector.shape_cast %104 : vector<1x8xf32> to vector<8xf32>
    %106 = vector.shape_cast %105 : vector<8xf32> to vector<1x1x1x8xf32>
    %107 = vector.broadcast %106 : vector<1x1x1x8xf32> to vector<1x8x8x8xf32>
    %108 = arith.mulf %103, %107 : vector<1x8x8x8xf32>
    %109 = arith.addf %102, %108 : vector<1x8x8x8xf32>
    %c0_81 = arith.constant 0 : index
    %c1_82 = arith.constant 1 : index
    %c0_83 = arith.constant 0 : index
    %c0_84 = arith.constant 0 : index
    %110 = vector.load %arg12[%c0_81, %c1_82, %c0_83, %c0_84] : memref<1x10x10x8xf32, #tpu.memory_space<vmem>>, vector<1x8x8x8xf32>
    %111 = vector.extract_strided_slice %87 {offsets = [3, 0], sizes = [1, 8], strides = [1, 1]} : vector<9x8xf32> to vector<1x8xf32>
    %112 = vector.shape_cast %111 : vector<1x8xf32> to vector<8xf32>
    %113 = vector.shape_cast %112 : vector<8xf32> to vector<1x1x1x8xf32>
    %114 = vector.broadcast %113 : vector<1x1x1x8xf32> to vector<1x8x8x8xf32>
    %115 = arith.mulf %110, %114 : vector<1x8x8x8xf32>
    %116 = arith.addf %109, %115 : vector<1x8x8x8xf32>
    %c0_85 = arith.constant 0 : index
    %c1_86 = arith.constant 1 : index
    %c1_87 = arith.constant 1 : index
    %c0_88 = arith.constant 0 : index
    %117 = vector.load %arg12[%c0_85, %c1_86, %c1_87, %c0_88] : memref<1x10x10x8xf32, #tpu.memory_space<vmem>>, vector<1x8x8x8xf32>
    %118 = vector.extract_strided_slice %87 {offsets = [4, 0], sizes = [1, 8], strides = [1, 1]} : vector<9x8xf32> to vector<1x8xf32>
    %119 = vector.shape_cast %118 : vector<1x8xf32> to vector<8xf32>
    %120 = vector.shape_cast %119 : vector<8xf32> to vector<1x1x1x8xf32>
    %121 = vector.broadcast %120 : vector<1x1x1x8xf32> to vector<1x8x8x8xf32>
    %122 = arith.mulf %117, %121 : vector<1x8x8x8xf32>
    %123 = arith.addf %116, %122 : vector<1x8x8x8xf32>
    %c0_89 = arith.constant 0 : index
    %c1_90 = arith.constant 1 : index
    %c2_91 = arith.constant 2 : index
    %c0_92 = arith.constant 0 : index
    %124 = vector.load %arg12[%c0_89, %c1_90, %c2_91, %c0_92] : memref<1x10x10x8xf32, #tpu.memory_space<vmem>>, vector<1x8x8x8xf32>
    %125 = vector.extract_strided_slice %87 {offsets = [5, 0], sizes = [1, 8], strides = [1, 1]} : vector<9x8xf32> to vector<1x8xf32>
    %126 = vector.shape_cast %125 : vector<1x8xf32> to vector<8xf32>
    %127 = vector.shape_cast %126 : vector<8xf32> to vector<1x1x1x8xf32>
    %128 = vector.broadcast %127 : vector<1x1x1x8xf32> to vector<1x8x8x8xf32>
    %129 = arith.mulf %124, %128 : vector<1x8x8x8xf32>
    %130 = arith.addf %123, %129 : vector<1x8x8x8xf32>
    %c0_93 = arith.constant 0 : index
    %c2_94 = arith.constant 2 : index
    %c0_95 = arith.constant 0 : index
    %c0_96 = arith.constant 0 : index
    %131 = vector.load %arg12[%c0_93, %c2_94, %c0_95, %c0_96] : memref<1x10x10x8xf32, #tpu.memory_space<vmem>>, vector<1x8x8x8xf32>
    %132 = vector.extract_strided_slice %87 {offsets = [6, 0], sizes = [1, 8], strides = [1, 1]} : vector<9x8xf32> to vector<1x8xf32>
    %133 = vector.shape_cast %132 : vector<1x8xf32> to vector<8xf32>
    %134 = vector.shape_cast %133 : vector<8xf32> to vector<1x1x1x8xf32>
    %135 = vector.broadcast %134 : vector<1x1x1x8xf32> to vector<1x8x8x8xf32>
    %136 = arith.mulf %131, %135 : vector<1x8x8x8xf32>
    %137 = arith.addf %130, %136 : vector<1x8x8x8xf32>
    %c0_97 = arith.constant 0 : index
    %c2_98 = arith.constant 2 : index
    %c1_99 = arith.constant 1 : index
    %c0_100 = arith.constant 0 : index
    %138 = vector.load %arg12[%c0_97, %c2_98, %c1_99, %c0_100] : memref<1x10x10x8xf32, #tpu.memory_space<vmem>>, vector<1x8x8x8xf32>
    %139 = vector.extract_strided_slice %87 {offsets = [7, 0], sizes = [1, 8], strides = [1, 1]} : vector<9x8xf32> to vector<1x8xf32>
    %140 = vector.shape_cast %139 : vector<1x8xf32> to vector<8xf32>
    %141 = vector.shape_cast %140 : vector<8xf32> to vector<1x1x1x8xf32>
    %142 = vector.broadcast %141 : vector<1x1x1x8xf32> to vector<1x8x8x8xf32>
    %143 = arith.mulf %138, %142 : vector<1x8x8x8xf32>
    %144 = arith.addf %137, %143 : vector<1x8x8x8xf32>
    %c0_101 = arith.constant 0 : index
    %c2_102 = arith.constant 2 : index
    %c2_103 = arith.constant 2 : index
    %c0_104 = arith.constant 0 : index
    %145 = vector.load %arg12[%c0_101, %c2_102, %c2_103, %c0_104] : memref<1x10x10x8xf32, #tpu.memory_space<vmem>>, vector<1x8x8x8xf32>
    %146 = vector.extract_strided_slice %87 {offsets = [8, 0], sizes = [1, 8], strides = [1, 1]} : vector<9x8xf32> to vector<1x8xf32>
    %147 = vector.shape_cast %146 : vector<1x8xf32> to vector<8xf32>
    %148 = vector.shape_cast %147 : vector<8xf32> to vector<1x1x1x8xf32>
    %149 = vector.broadcast %148 : vector<1x1x1x8xf32> to vector<1x8x8x8xf32>
    %150 = arith.mulf %145, %149 : vector<1x8x8x8xf32>
    %151 = arith.addf %144, %150 : vector<1x8x8x8xf32>
    %152 = vector.shape_cast %151 : vector<1x8x8x8xf32> to vector<64x8xf32>
    %153 = arith.truncf %152 : vector<64x8xf32> to vector<64x8xbf16>
    %c0_105 = arith.constant 0 : index
    %c0_106 = arith.constant 0 : index
    %154 = vector.load %arg7[%c0_105, %c0_106] : memref<8x8xbf16, #tpu.memory_space<vmem>>, vector<8x8xbf16>
    %cst_107 = arith.constant dense<0.000000e+00> : vector<64x8xf32>
    %155 = tpu.matmul %153, %154, %cst_107 {dimension_numbers = #tpu.dot_dimension_numbers<[1], [0], [0], [1], [0, 0, 1, 1], [], []>} : vector<64x8xbf16>, vector<8x8xbf16>, vector<64x8xf32> -> vector<64x8xf32>
    %c0_108 = arith.constant 0 : index
    %c0_109 = arith.constant 0 : index
    %156 = vector.load %arg8[%c0_108, %c0_109] : memref<1x8xf32, #tpu.memory_space<vmem>>, vector<1x8xf32>
    %157 = vector.broadcast %156 : vector<1x8xf32> to vector<64x8xf32>
    %158 = arith.mulf %155, %157 : vector<64x8xf32>
    %c0_110 = arith.constant 0 : index
    %c0_111 = arith.constant 0 : index
    %159 = vector.load %arg9[%c0_110, %c0_111] : memref<1x8xf32, #tpu.memory_space<vmem>>, vector<1x8xf32>
    %160 = vector.broadcast %159 : vector<1x8xf32> to vector<64x8xf32>
    %161 = arith.addf %158, %160 : vector<64x8xf32>
    %162 = vector.shape_cast %161 : vector<64x8xf32> to vector<1x8x8x8xf32>
    %c0_112 = arith.constant 0 : index
    %c0_113 = arith.constant 0 : index
    %c0_114 = arith.constant 0 : index
    %c0_115 = arith.constant 0 : index
    %163 = vector.load %arg10[%c0_112, %c0_113, %c0_114, %c0_115] : memref<1x8x8x8xf32, #tpu.memory_space<vmem>>, vector<1x8x8x8xf32>
    tpu.vector_store %arg10[%c0_112, %c0_113, %c0_114, %c0_115], %162 {strides = array<i32>} : memref<1x8x8x8xf32, #tpu.memory_space<vmem>>, vector<1x8x8x8xf32>,
    return
  }
  func.func @transform_0(%arg0: i32) -> (i32, i32, i32, i32) {
    %c0_i32 = arith.constant 0 : i32
    %c0_i32_0 = arith.constant 0 : i32
    %c0_i32_1 = arith.constant 0 : i32
    %c0_i32_2 = arith.constant 0 : i32
    return %arg0, %c0_i32, %c0_i32_0, %c0_i32_1 : i32, i32, i32, i32
  }
  func.func @transform_1(%arg0: i32) -> (i32, i32) {
    %c0_i32 = arith.constant 0 : i32
    %c0_i32_0 = arith.constant 0 : i32
    %c0_i32_1 = arith.constant 0 : i32
    return %c0_i32, %c0_i32_0 : i32, i32
  }
  func.func @transform_2(%arg0: i32) -> (i32, i32) {
    %c0_i32 = arith.constant 0 : i32
    %c0_i32_0 = arith.constant 0 : i32
    %c0_i32_1 = arith.constant 0 : i32
    return %c0_i32, %c0_i32_0 : i32, i32
  }
  func.func @transform_3(%arg0: i32) -> (i32, i32) {
    %c0_i32 = arith.constant 0 : i32
    %c0_i32_0 = arith.constant 0 : i32
    %c0_i32_1 = arith.constant 0 : i32
    return %c0_i32, %c0_i32_0 : i32, i32
  }
  func.func @transform_4(%arg0: i32) -> (i32, i32) {
    %c0_i32 = arith.constant 0 : i32
    %c0_i32_0 = arith.constant 0 : i32
    %c0_i32_1 = arith.constant 0 : i32
    return %c0_i32, %c0_i32_0 : i32, i32
  }
  func.func @transform_5(%arg0: i32) -> (i32, i32) {
    %c0_i32 = arith.constant 0 : i32
    %c0_i32_0 = arith.constant 0 : i32
    %c0_i32_1 = arith.constant 0 : i32
    return %c0_i32, %c0_i32_0 : i32, i32
  }
  func.func @transform_6(%arg0: i32) -> (i32, i32) {
    %c0_i32 = arith.constant 0 : i32
    %c0_i32_0 = arith.constant 0 : i32
    %c0_i32_1 = arith.constant 0 : i32
    return %c0_i32, %c0_i32_0 : i32, i32
  }
  func.func @transform_7(%arg0: i32) -> (i32, i32) {
    %c0_i32 = arith.constant 0 : i32
    %c0_i32_0 = arith.constant 0 : i32
    %c0_i32_1 = arith.constant 0 : i32
    return %c0_i32, %c0_i32_0 : i32, i32
  }
  func.func @transform_8(%arg0: i32) -> (i32, i32) {
    %c0_i32 = arith.constant 0 : i32
    %c0_i32_0 = arith.constant 0 : i32
    %c0_i32_1 = arith.constant 0 : i32
    return %c0_i32, %c0_i32_0 : i32, i32
  }
  func.func @transform_9(%arg0: i32) -> (i32, i32, i32, i32) {
    %c0_i32 = arith.constant 0 : i32
    %c0_i32_0 = arith.constant 0 : i32
    %c0_i32_1 = arith.constant 0 : i32
    %c0_i32_2 = arith.constant 0 : i32
    return %arg0, %c0_i32, %c0_i32_0, %c0_i32_1 : i32, i32, i32, i32
  }
}

module attributes {stable_mosaic.version = 11 : i64} {
  func.func @_avgpool3x3_kernel(%arg0: i32, %arg1: memref<1x8x64xf32, #tpu.memory_space<vmem>>, %arg2: memref<1x8x64xf32, #tpu.memory_space<vmem>>, %arg3: memref<1x8x64xf32, #tpu.memory_space<vmem>>, %arg4: memref<1x8x64xf32, #tpu.memory_space<vmem>>, %arg5: memref<1x10x80xf32, #tpu.memory_space<vmem>>) attributes {dimension_semantics = [#tpu.dimension_semantics<parallel>], iteration_bounds = array<i64: 2>, scalar_prefetch = 0 : i64, scratch_operands = 1 : i64, tpu.core_type = #tpu.core_type<tc>, window_params = [{transform_indices = @transform_0, window_bounds = array<i64: 1, 8, 64>}, {pipeline_mode = #tpu.pipeline_mode<synchronous>, transform_indices = @transform_1, window_bounds = array<i64: 1, 8, 64>}, {transform_indices = @transform_2, window_bounds = array<i64: 1, 8, 64>}, {transform_indices = @transform_3, window_bounds = array<i64: 1, 8, 64>}]} {
    %cst = arith.constant 0.000000e+00 : f32
    %0 = vector.broadcast %cst : f32 to vector<1x10x80xf32>
    %c0 = arith.constant 0 : index
    %c0_0 = arith.constant 0 : index
    %c0_1 = arith.constant 0 : index
    %1 = vector.load %arg5[%c0, %c0_0, %c0_1] : memref<1x10x80xf32, #tpu.memory_space<vmem>>, vector<1x10x80xf32>
    tpu.vector_store %arg5[%c0, %c0_0, %c0_1], %0 {strides = array<i32>} : memref<1x10x80xf32, #tpu.memory_space<vmem>>, vector<1x10x80xf32>,
    %c0_2 = arith.constant 0 : index
    %c0_3 = arith.constant 0 : index
    %c0_4 = arith.constant 0 : index
    %2 = vector.load %arg1[%c0_2, %c0_3, %c0_4] : memref<1x8x64xf32, #tpu.memory_space<vmem>>, vector<1x8x64xf32>
    %c0_5 = arith.constant 0 : index
    %c1 = arith.constant 1 : index
    %c8 = arith.constant 8 : index
    %3 = vector.load %arg5[%c0_5, %c1, %c8] : memref<1x10x80xf32, #tpu.memory_space<vmem>>, vector<1x8x64xf32>
    tpu.vector_store %arg5[%c0_5, %c1, %c8], %2 {strides = array<i32>} : memref<1x10x80xf32, #tpu.memory_space<vmem>>, vector<1x8x64xf32>,
    %cst_6 = arith.constant 0.000000e+00 : f32
    %4 = vector.broadcast %cst_6 : f32 to vector<1x8x64xf32>
    %c0_7 = arith.constant 0 : index
    %c0_8 = arith.constant 0 : index
    %c0_9 = arith.constant 0 : index
    %5 = vector.load %arg5[%c0_7, %c0_8, %c0_9] : memref<1x10x80xf32, #tpu.memory_space<vmem>>, vector<1x8x64xf32>
    %6 = arith.addf %4, %5 : vector<1x8x64xf32>
    %c0_10 = arith.constant 0 : index
    %c0_11 = arith.constant 0 : index
    %c8_12 = arith.constant 8 : index
    %7 = vector.load %arg5[%c0_10, %c0_11, %c8_12] : memref<1x10x80xf32, #tpu.memory_space<vmem>>, vector<1x8x64xf32>
    %8 = arith.addf %6, %7 : vector<1x8x64xf32>
    %c0_13 = arith.constant 0 : index
    %c0_14 = arith.constant 0 : index
    %c16 = arith.constant 16 : index
    %9 = vector.load %arg5[%c0_13, %c0_14, %c16] : memref<1x10x80xf32, #tpu.memory_space<vmem>>, vector<1x8x64xf32>
    %10 = arith.addf %8, %9 : vector<1x8x64xf32>
    %c0_15 = arith.constant 0 : index
    %c1_16 = arith.constant 1 : index
    %c0_17 = arith.constant 0 : index
    %11 = vector.load %arg5[%c0_15, %c1_16, %c0_17] : memref<1x10x80xf32, #tpu.memory_space<vmem>>, vector<1x8x64xf32>
    %12 = arith.addf %10, %11 : vector<1x8x64xf32>
    %c0_18 = arith.constant 0 : index
    %c1_19 = arith.constant 1 : index
    %c8_20 = arith.constant 8 : index
    %13 = vector.load %arg5[%c0_18, %c1_19, %c8_20] : memref<1x10x80xf32, #tpu.memory_space<vmem>>, vector<1x8x64xf32>
    %14 = arith.addf %12, %13 : vector<1x8x64xf32>
    %c0_21 = arith.constant 0 : index
    %c1_22 = arith.constant 1 : index
    %c16_23 = arith.constant 16 : index
    %15 = vector.load %arg5[%c0_21, %c1_22, %c16_23] : memref<1x10x80xf32, #tpu.memory_space<vmem>>, vector<1x8x64xf32>
    %16 = arith.addf %14, %15 : vector<1x8x64xf32>
    %c0_24 = arith.constant 0 : index
    %c2 = arith.constant 2 : index
    %c0_25 = arith.constant 0 : index
    %17 = vector.load %arg5[%c0_24, %c2, %c0_25] : memref<1x10x80xf32, #tpu.memory_space<vmem>>, vector<1x8x64xf32>
    %18 = arith.addf %16, %17 : vector<1x8x64xf32>
    %c0_26 = arith.constant 0 : index
    %c2_27 = arith.constant 2 : index
    %c8_28 = arith.constant 8 : index
    %19 = vector.load %arg5[%c0_26, %c2_27, %c8_28] : memref<1x10x80xf32, #tpu.memory_space<vmem>>, vector<1x8x64xf32>
    %20 = arith.addf %18, %19 : vector<1x8x64xf32>
    %c0_29 = arith.constant 0 : index
    %c2_30 = arith.constant 2 : index
    %c16_31 = arith.constant 16 : index
    %21 = vector.load %arg5[%c0_29, %c2_30, %c16_31] : memref<1x10x80xf32, #tpu.memory_space<vmem>>, vector<1x8x64xf32>
    %22 = arith.addf %20, %21 : vector<1x8x64xf32>
    %c0_32 = arith.constant 0 : index
    %c0_33 = arith.constant 0 : index
    %c0_34 = arith.constant 0 : index
    %23 = vector.load %arg2[%c0_32, %c0_33, %c0_34] : memref<1x8x64xf32, #tpu.memory_space<vmem>>, vector<1x8x64xf32>
    %24 = arith.mulf %22, %23 : vector<1x8x64xf32>
    %c0_35 = arith.constant 0 : index
    %c0_36 = arith.constant 0 : index
    %c0_37 = arith.constant 0 : index
    %25 = vector.load %arg3[%c0_35, %c0_36, %c0_37] : memref<1x8x64xf32, #tpu.memory_space<vmem>>, vector<1x8x64xf32>
    %26 = arith.addf %24, %25 : vector<1x8x64xf32>
    %c0_38 = arith.constant 0 : index
    %c0_39 = arith.constant 0 : index
    %c0_40 = arith.constant 0 : index
    %27 = vector.load %arg4[%c0_38, %c0_39, %c0_40] : memref<1x8x64xf32, #tpu.memory_space<vmem>>, vector<1x8x64xf32>
    tpu.vector_store %arg4[%c0_38, %c0_39, %c0_40], %26 {strides = array<i32>} : memref<1x8x64xf32, #tpu.memory_space<vmem>>, vector<1x8x64xf32>,
    return
  }
  func.func @transform_0(%arg0: i32) -> (i32, i32, i32) {
    %c0_i32 = arith.constant 0 : i32
    %c0_i32_0 = arith.constant 0 : i32
    %c0_i32_1 = arith.constant 0 : i32
    return %arg0, %c0_i32, %c0_i32_0 : i32, i32, i32
  }
  func.func @transform_1(%arg0: i32) -> (i32, i32, i32) {
    %c0_i32 = arith.constant 0 : i32
    %c0_i32_0 = arith.constant 0 : i32
    %c0_i32_1 = arith.constant 0 : i32
    %c0_i32_2 = arith.constant 0 : i32
    return %c0_i32, %c0_i32_0, %c0_i32_1 : i32, i32, i32
  }
  func.func @transform_2(%arg0: i32) -> (i32, i32, i32) {
    %c0_i32 = arith.constant 0 : i32
    %c0_i32_0 = arith.constant 0 : i32
    %c0_i32_1 = arith.constant 0 : i32
    return %arg0, %c0_i32, %c0_i32_0 : i32, i32, i32
  }
  func.func @transform_3(%arg0: i32) -> (i32, i32, i32) {
    %c0_i32 = arith.constant 0 : i32
    %c0_i32_0 = arith.constant 0 : i32
    %c0_i32_1 = arith.constant 0 : i32
    return %arg0, %c0_i32, %c0_i32_0 : i32, i32, i32
  }
}

</mosaic_0001>

<llo_original>
// kernel: _lambda_.12
$region0: #{_lambda_.12}
  #allocation0 [shape = 'u32[]', space=smem, size = 0x4, offset = 0x4, fixed_abs, tag = 'smem constant byte address 0x4 - core index']
  #allocation1 [shape = 'u32[144,128]{1,0:T(1,128)}', space=vmem, size = 0x12000, scoped, tag = 'internal scratch']
  #allocation2 [shape = 'f32[1,10,80]{2,1,0:T(8,128)}', space=vmem, size = 0x2000, scoped, tag = 'scratch operand']
  %s0 = inlined_call_operand.vmem [shape: f32[2,8,64], index: 0, kind: input, shape index: {}]
  %s1 = inlined_call_operand.vmem [shape: f32[2,8,64], index: 1, kind: input, shape index: {}]
  %s2 = inlined_call_operand.vmem [shape: f32[2,8,64], index: 2, kind: output, shape index: {}]
  %s3 = sld [smem:[#allocation0]]
  $region41: #{_lambda_.12} parent=0
    _
  %s5 = ssub.s32 1, %s3
  %s6 = scalar_select 0, %s5, %s3
  loop: start=0, step=1, limit=4
  $region2: #{_lambda_.12} parent=0 // loop_pre_header
    _
  $region3: #{_lambda_.12} parent=0 // loop_header
    %s8 = sphi 0, %s12
    %p9 = scmp.ge.s32.totalorder %s8, 4
    %s18 = sphi 0, %s20
    %s21 = sphi 0, %s18
    %s22 = sphi 0, %s21
    %s38 = sphi 0, %s22
    %s44 = sphi 0, %s46
    %s47 = sphi 0, %s44
    %s48 = sphi 0, %s47
    %s64 = sphi 0, %s48
    %s70 = sphi 0, %s72
    %s73 = sphi 0, %s70
    %s74 = sphi 0, %s73
    %s90 = sphi 0, %s74
  $region4: #{_lambda_.12} parent=0 // loop_header_branch
    %11 = sbr.rel (%p9) target = $region8
  $region5: #{_lambda_.12} parent=0 // loop_body
    %s13 = ssub.s32 %s8, 1
    %s14 = ssub.s32 %s8, 2
    %s15 = sadd.s32 %s8, 1
    %s16 = ssub.s32 %s8, %s15
    %p17 = scmp.eq.s32.totalorder %s16, 0
    %s19 = sadd.s32 %s18, 1
    %s20 = scalar_select %p17, %s18, %s19
    %p23 = pneg %p17
    %p24 = scmp.eq.s32.totalorder %s8, 1
    %p25 = por %p23, %p24
    %p26 = scmp.ne.s32.totalorder %s18, %s21
    %p27 = scmp.eq.s32.totalorder %s8, 0
    %p28 = por %p26, %p27
    %p29 = scmp.ne.s32.totalorder %s18, %s21
    %p30 = scmp.eq.s32.totalorder %s13, 1
    %p31 = por %p29, %p30
    %p32 = scmp.ne.s32.totalorder %s21, %s22
    %p33 = scmp.eq.s32.totalorder %s13, 0
    %p34 = por %p32, %p33
    %p35 = scmp.ne.s32.totalorder %s21, %s22
    %p36 = scmp.eq.s32.totalorder %s14, 1
    %p37 = por %p35, %p36
    %p39 = scmp.ne.s32.totalorder %s22, %s38
    %p40 = scmp.eq.s32.totalorder %s14, 0
    %p41 = por %p39, %p40
    %s42 = ssub.s32 %s8, %s15
    %p43 = scmp.eq.s32.totalorder %s42, 0
    %s45 = sadd.s32 %s44, 1
    %s46 = scalar_select %p43, %s44, %s45
    %p49 = pneg %p43
    %p50 = scmp.eq.s32.totalorder %s8, 1
    %p51 = por %p49, %p50
    %p52 = scmp.ne.s32.totalorder %s44, %s47
    %p53 = scmp.eq.s32.totalorder %s8, 0
    %p54 = por %p52, %p53
    %p55 = scmp.ne.s32.totalorder %s44, %s47
    %p56 = scmp.eq.s32.totalorder %s13, 1
    %p57 = por %p55, %p56
    %p58 = scmp.ne.s32.totalorder %s47, %s48
    %p59 = scmp.eq.s32.totalorder %s13, 0
    %p60 = por %p58, %p59
    %p61 = scmp.ne.s32.totalorder %s47, %s48
    %p62 = scmp.eq.s32.totalorder %s14, 1
    %p63 = por %p61, %p62
    %p65 = scmp.ne.s32.totalorder %s48, %s64
    %p66 = scmp.eq.s32.totalorder %s14, 0
    %p67 = por %p65, %p66
    %s68 = ssub.s32 %s8, %s15
    %p69 = scmp.eq.s32.totalorder %s68, 0
    %s71 = sadd.s32 %s70, 1
    %s72 = scalar_select %p69, %s70, %s71
    %p75 = pneg %p69
    %p76 = scmp.eq.s32.totalorder %s8, 1
    %p77 = por %p75, %p76
    %p78 = scmp.ne.s32.totalorder %s70, %s73
    %p79 = scmp.eq.s32.totalorder %s8, 0
    %p80 = por %p78, %p79
    %p81 = scmp.ne.s32.totalorder %s70, %s73
    %p82 = scmp.eq.s32.totalorder %s13, 1
    %p83 = por %p81, %p82
    %p84 = scmp.ne.s32.totalorder %s73, %s74
    %p85 = scmp.eq.s32.totalorder %s13, 0
    %p86 = por %p84, %p85
    %p87 = scmp.ne.s32.totalorder %s73, %s74
    %p88 = scmp.eq.s32.totalorder %s14, 1
    %p89 = por %p87, %p88
    %p91 = scmp.ne.s32.totalorder %s74, %s90
    %p92 = scmp.eq.s32.totalorder %s14, 0
    %p93 = por %p91, %p92
    %p94 = scmp.le.s32.totalorder 1, %s8
    %p95 = scmp.lt.s32.totalorder %s8, 3
    %p96 = pnand %p94, %p95
    %p97 = pneg %p96
    // Predicated region
    $region9: #{_lambda_.12} parent=5 // pred_check
      _
    $region10: #{_lambda_.12} parent=5 // pred_check_branch
      %99 = sbr.rel (%p96) target = $region12
    $region11: #{_lambda_.12} parent=5 // pred_region
      %s100 = ssub.s32 %s8, 1
    $region12: #{_lambda_.12} parent=5 // pred_fallthru
      _
    %p101 = scmp.lt.s32.totalorder %s8, 2
    // Predicated region
    $region13: #{_lambda_.12} parent=5 // pred_check
      %p102 = pneg %p101
    $region14: #{_lambda_.12} parent=5 // pred_check_branch
      %104 = sbr.rel (%p102) target = $region16
    $region15: #{_lambda_.12} parent=5 // pred_region
      // Predicated region
      $region17: #{_lambda_.12} parent=15 // pred_check
        %p105 = pneg %p28
      $region18: #{_lambda_.12} parent=15 // pred_check_branch
        %107 = sbr.rel (%p105) target = $region20
      $region19: #{_lambda_.12} parent=15 // pred_region
        %p108 = scmp.lt.s32.totalorder %s8, 1
        %s109 = scalar_select %p108, %s8, 1
        %s110 = smul.addr %s109, 8
        %s111 = scalar_lea.vmem %s0, %s110
      $region20: #{_lambda_.12} parent=15 // pred_fallthru
        _
      // Predicated region
      $region21: #{_lambda_.12} parent=15 // pred_check
        %p112 = pneg %p54
      $region22: #{_lambda_.12} parent=15 // pred_check_branch
        %114 = sbr.rel (%p112) target = $region24
      $region23: #{_lambda_.12} parent=15 // pred_region
        %p115 = scmp.lt.s32.totalorder %s8, 1
        %s116 = scalar_select %p115, %s8, 1
        %s117 = smul.addr %s116, 8
        %s118 = scalar_lea.vmem %s1, %s117
      $region24: #{_lambda_.12} parent=15 // pred_fallthru
        _
    $region16: #{_lambda_.12} parent=5 // pred_fallthru
      _
    %p119 = scmp.le.s32.totalorder 1, %s8
    %p120 = scmp.lt.s32.totalorder %s8, 3
    %p121 = pnand %p119, %p120
    %p122 = pneg %p121
    // Predicated region
    $region25: #{_lambda_.12} parent=5 // pred_check
      _
    $region26: #{_lambda_.12} parent=5 // pred_check_branch
      %124 = sbr.rel (%p121) target = $region28
    $region27: #{_lambda_.12} parent=5 // pred_region
      %s125 = ssub.s32 %s8, 1
      %p126 = scmp.lt.s32.totalorder %s13, 1
      %s127 = scalar_select %p126, %s13, 1
      %s128 = smul.addr %s127, 8
      %s129 = scalar_lea.vmem %s0, %s128
      %p130 = pneg %p34
      %p131 = pneg %p31
      %p132 = scmp.lt.s32.totalorder %s13, 1
      %s133 = scalar_select %p132, %s13, 1
      %s134 = smul.addr %s133, 8
      %s135 = scalar_lea.vmem %s1, %s134
      %p136 = pneg %p60
      %p137 = pneg %p57
      %p138 = pneg %p86
      %p139 = pneg %p83
      %p140 = scmp.lt.s32.totalorder %s13, 1
      %s141 = scalar_select %p140, %s13, 1
      %s142 = smul.addr %s141, 8
      %s143 = scalar_lea.vmem %s2, %s142
      %p144 = scmp.lt.s32.totalorder %s13, 1
      %s145 = scalar_select %p144, %s13, 1
      %s146 = smul.addr %s145, 8
      %s147 = scalar_lea.vmem %s0, %s146
      %p148 = scmp.lt.s32.totalorder %s13, 1
      %s149 = scalar_select %p148, %s13, 1
      %s150 = smul.addr %s149, 8
      %s151 = scalar_lea.vmem %s1, %s150
      %p152 = scmp.lt.s32.totalorder %s13, 1
      %s153 = scalar_select %p152, %s13, 1
      %s154 = smul.addr %s153, 8
      %s155 = scalar_lea.vmem %s2, %s154
      %vm156 = vcmask 654336
      %157 = vst.msk [vmem:[#allocation2] sm:$0xff] %vm156, -inf
      %vm158 = vcmask 648192
      %159 = vst.msk [vmem:[#allocation2 + $0x8] sm:$0x3] %vm158, -inf
      %v160 = vld [vmem:[%s147] sm:$0xff]
      %162 = vrot.lane.b32.xlu0 %v160, 8
      %v163 = vpop.permute.xlu0 %162
      %vm165 = vcmask 588864
      %166 = vst.msk [vmem:[#allocation2 + $0x1] sm:$0xff] %vm165, %v163
      %v167 = vld [vmem:[#allocation2] sm:$0xff]
      %169 = vrot.lane.b32.xlu0 %v167, 120
      %v170 = vpop.permute.xlu0 %169
      %v172 = vmax.f32 %v167, %v170
      %173 = vrot.lane.b32.xlu0 %v167, 112
      %v174 = vpop.permute.xlu0 %173
      %v176 = vmax.f32 %v172, %v174
      %v177 = vld [vmem:[#allocation2 + $0x1] sm:$0xff]
      %v178 = vmax.f32 %v176, %v177
      %180 = vrot.lane.b32.xlu0 %v177, 120
      %v181 = vpop.permute.xlu0 %180
      %v183 = vmax.f32 %v178, %v181
      %184 = vrot.lane.b32.xlu0 %v177, 112
      %v185 = vpop.permute.xlu0 %184
      %v187 = vmax.f32 %v183, %v185
      %v188 = vld [vmem:[#allocation2 + $0x2] sm:$0xff]
      %v189 = vmax.f32 %v187, %v188
      %191 = vrot.lane.b32.xlu0 %v188, 120
      %v192 = vpop.permute.xlu0 %191
      %v194 = vmax.f32 %v189, %v192
      %195 = vrot.lane.b32.xlu0 %v188, 112
      %v196 = vpop.permute.xlu0 %195
      %v198 = vmax.f32 %v194, %v196
      %v199 = vld [vmem:[%s151] sm:$0xff]
      %v200 = vadd.f32 %v198, %v199
      %vm201 = vcmask 523264
      %202 = vst.msk [vmem:[%s155] sm:$0xff] %vm201, %v200
      %p203 = scmp.lt.s32.totalorder %s13, 1
      %s204 = scalar_select %p203, %s13, 1
      %s205 = smul.addr %s204, 8
      %s206 = scalar_lea.vmem %s2, %s205
      // Predicated region
      $region29: #{_lambda_.12} parent=27 // pred_check
        %p207 = pneg %p83
      $region30: #{_lambda_.12} parent=27 // pred_check_branch
        %209 = sbr.rel (%p207) target = $region32
      $region31: #{_lambda_.12} parent=27 // pred_region
        _
      $region32: #{_lambda_.12} parent=27 // pred_fallthru
        _
    $region28: #{_lambda_.12} parent=5 // pred_fallthru
      _
    %p210 = scmp.le.s32.totalorder 2, %s8
    // Predicated region
    $region33: #{_lambda_.12} parent=5 // pred_check
      %p211 = pneg %p210
    $region34: #{_lambda_.12} parent=5 // pred_check_branch
      %213 = sbr.rel (%p211) target = $region36
    $region35: #{_lambda_.12} parent=5 // pred_region
      %s214 = ssub.s32 %s8, 2
      // Predicated region
      $region37: #{_lambda_.12} parent=35 // pred_check
        %p215 = pneg %p89
      $region38: #{_lambda_.12} parent=35 // pred_check_branch
        %217 = sbr.rel (%p215) target = $region40
      $region39: #{_lambda_.12} parent=35 // pred_region
        %p218 = scmp.lt.s32.totalorder %s14, 1
        %s219 = scalar_select %p218, %s14, 1
        %s220 = smul.addr %s219, 8
        %s221 = scalar_lea.vmem %s2, %s220
      $region40: #{_lambda_.12} parent=35 // pred_fallthru
        _
    $region36: #{_lambda_.12} parent=5 // pred_fallthru
      _
  $region6: #{_lambda_.12} parent=0 // loop_footer
    %s12 = sadd.s32 1, %s8
  $region7: #{_lambda_.12} parent=0 // loop_footer_branch
    %7 = sbr.rel target = $region3
  $region8: #{_lambda_.12} parent=0 // loop_exit
    _

// kernel: _lambda_.7
$region0: #{_lambda_.7}
  #allocation0 [shape = 'u32[]', space=smem, size = 0x4, offset = 0x4, fixed_abs, tag = 'smem constant byte address 0x4 - core index']
  #allocation1 [shape = 'u32[144,128]{1,0:T(1,128)}', space=vmem, size = 0x12000, scoped, tag = 'internal scratch']
  %s0 = inlined_call_operand.vmem [shape: f32[128,8], index: 0, kind: input, shape index: {}]
  %s1 = inlined_call_operand.vmem [shape: bf16[8,8], index: 1, kind: input, shape index: {}]
  %s2 = inlined_call_operand.vmem [shape: f32[1,8], index: 2, kind: input, shape index: {}]
  %s3 = inlined_call_operand.vmem [shape: f32[1,8], index: 3, kind: input, shape index: {}]
  %s4 = inlined_call_operand.vmem [shape: f32[128,8], index: 4, kind: output, shape index: {}]
  %s5 = sld [smem:[#allocation0]]
  $region26: #{_lambda_.7} parent=0
    _
  %s7 = ssub.s32 1, %s5
  %s8 = scalar_select 0, %s7, %s5
  // Predicated region
  $region2: #{_lambda_.7} parent=0 // pred_check
    _
  $region3: #{_lambda_.7} parent=0 // pred_check_branch
    %10 = sbr.rel (0) target = $region5
  $region4: #{_lambda_.7} parent=0 // pred_region
    _
  $region5: #{_lambda_.7} parent=0 // pred_fallthru
    _
  // Predicated region
  $region6: #{_lambda_.7} parent=0 // pred_check
    _
  $region7: #{_lambda_.7} parent=0 // pred_check_branch
    %12 = sbr.rel (0) target = $region9
  $region8: #{_lambda_.7} parent=0 // pred_region
    _
  $region9: #{_lambda_.7} parent=0 // pred_fallthru
    _
  // Predicated region
  $region10: #{_lambda_.7} parent=0 // pred_check
    _
  $region11: #{_lambda_.7} parent=0 // pred_check_branch
    %14 = sbr.rel (0) target = $region13
  $region12: #{_lambda_.7} parent=0 // pred_region
    _
  $region13: #{_lambda_.7} parent=0 // pred_fallthru
    _
  // Predicated region
  $region14: #{_lambda_.7} parent=0 // pred_check
    _
  $region15: #{_lambda_.7} parent=0 // pred_check_branch
    %16 = sbr.rel (0) target = $region17
  $region16: #{_lambda_.7} parent=0 // pred_region
    _
  $region17: #{_lambda_.7} parent=0 // pred_fallthru
    _
  %v18 = vld [vmem:[%s0] sm:$0xff]
  %v19 = vld [vmem:[%s0 + $0x8] sm:$0xff]
  %v20 = vld [vmem:[%s0 + $0x10] sm:$0xff]
  %v21 = vld [vmem:[%s0 + $0x18] sm:$0xff]
  %v22 = vld [vmem:[%s0 + $0x20] sm:$0xff]
  %v23 = vld [vmem:[%s0 + $0x28] sm:$0xff]
  %v24 = vld [vmem:[%s0 + $0x30] sm:$0xff]
  %v25 = vld [vmem:[%s0 + $0x38] sm:$0xff]
  %v26 = vld [vmem:[%s0 + $0x40] sm:$0xff]
  %v27 = vld [vmem:[%s0 + $0x48] sm:$0xff]
  %v28 = vld [vmem:[%s0 + $0x50] sm:$0xff]
  %v29 = vld [vmem:[%s0 + $0x58] sm:$0xff]
  %v30 = vld [vmem:[%s0 + $0x60] sm:$0xff]
  %v31 = vld [vmem:[%s0 + $0x68] sm:$0xff]
  %v32 = vld [vmem:[%s0 + $0x70] sm:$0xff]
  %v33 = vld [vmem:[%s0 + $0x78] sm:$0xff]
  %v34 = vmax.f32 %v18, 0.0
  %v35 = vmax.f32 %v19, 0.0
  %v36 = vmax.f32 %v20, 0.0
  %v37 = vmax.f32 %v21, 0.0
  %v38 = vmax.f32 %v22, 0.0
  %v39 = vmax.f32 %v23, 0.0
  %v40 = vmax.f32 %v24, 0.0
  %v41 = vmax.f32 %v25, 0.0
  %v42 = vmax.f32 %v26, 0.0
  %v43 = vmax.f32 %v27, 0.0
  %v44 = vmax.f32 %v28, 0.0
  %v45 = vmax.f32 %v29, 0.0
  %v46 = vmax.f32 %v30, 0.0
  %v47 = vmax.f32 %v31, 0.0
  %v48 = vmax.f32 %v32, 0.0
  %v49 = vmax.f32 %v33, 0.0
  %v50 = vpack.c.bf16 %v35, %v34
  %v51 = vpack.c.bf16 %v37, %v36
  %v52 = vpack.c.bf16 %v39, %v38
  %v53 = vpack.c.bf16 %v41, %v40
  %v54 = vpack.c.bf16 %v43, %v42
  %v55 = vpack.c.bf16 %v45, %v44
  %v56 = vpack.c.bf16 %v47, %v46
  %v57 = vpack.c.bf16 %v49, %v48
  %v58 = vld [vmem:[%s1] sm:$0xf]
  %vm59 = vcmask 64512
  %v61 = vsel %vm59, %v50, 0
  %v64 = vsel %vm59, %v51, 0
  %v67 = vsel %vm59, %v52, 0
  %v70 = vsel %vm59, %v53, 0
  %v73 = vsel %vm59, %v54, 0
  %v76 = vsel %vm59, %v55, 0
  %v79 = vsel %vm59, %v56, 0
  %v82 = vsel %vm59, %v57, 0
  %vm84 = vcmask 1043456
  %v86 = vsel %vm84, %v58, 0
  %88 = vmatprep.subr.bf16.mxu0 0
  %89 = vmatpush1.bf16.msra.mxu0 %v86
  %90 = vmatprep.subr.bf16.mxu0 0
  %91 = vmatpush1.bf16.msra.mxu0 0
  %92 = vmatprep.subr.bf16.mxu0 0
  %93 = vmatpush1.bf16.msra.mxu0 0
  %94 = vmatprep.subr.bf16.mxu0 0
  %95 = vmatpush1.bf16.msra.mxu0 0
  %96 = vmatprep.subr.bf16.mxu0 0
  %97 = vmatpush1.bf16.msra.mxu0 0
  %98 = vmatprep.subr.bf16.mxu0 0
  %99 = vmatpush1.bf16.msra.mxu0 0
  %100 = vmatprep.subr.bf16.mxu0 0
  %101 = vmatpush1.bf16.msra.mxu0 0
  %102 = vmatprep.subr.bf16.mxu0 0
  %103 = vmatpush1.bf16.msra.mxu0 0
  %104 = vmatprep.subr.bf16.mxu0 0
  %105 = vmatpush1.bf16.msra.mxu0 0
  %106 = vmatprep.subr.bf16.mxu0 0
  %107 = vmatpush1.bf16.msra.mxu0 0
  %108 = vmatprep.subr.bf16.mxu0 0
  %109 = vmatpush1.bf16.msra.mxu0 0
  %110 = vmatprep.subr.bf16.mxu0 0
  %111 = vmatpush1.bf16.msra.mxu0 0
  %112 = vmatprep.subr.bf16.mxu0 0
  %113 = vmatpush1.bf16.msra.mxu0 0
  %114 = vmatprep.subr.bf16.mxu0 0
  %115 = vmatpush1.bf16.msra.mxu0 0
  %116 = vmatprep.subr.bf16.mxu0 0
  %117 = vmatpush1.bf16.msra.mxu0 0
  %118 = vmatprep.subr.bf16.mxu0 0
  %119 = vmatpush1.bf16.msra.mxu0 0
  %120 = vmatprep.mubr.bf16.mxu0 0
  %121 = vmatmul.mubr.bf16.gmra.mrb[0].mxu0 %v61
  %v122 = vpop.f32.mrb[0].mxu0
  %v123 = vadd.f32 0.0, %v122
  %v124 = vpop.f32.mrb[0].mxu0
  %v125 = vpop.f32.mrb[0].mxu0
  %v126 = vadd.f32 0.0, %v125
  %v127 = vpop.f32.mrb[0].mxu0
  %128 = vmatprep.mubr.bf16.mxu0 0
  %129 = vmatmul.mubr.bf16.gmra.mrb[0].mxu0 %v64
  %v130 = vpop.f32.mrb[0].mxu0
  %v131 = vadd.f32 0.0, %v130
  %v132 = vpop.f32.mrb[0].mxu0
  %v133 = vpop.f32.mrb[0].mxu0
  %v134 = vadd.f32 0.0, %v133
  %v135 = vpop.f32.mrb[0].mxu0
  %136 = vmatprep.mubr.bf16.mxu0 0
  %137 = vmatmul.mubr.bf16.gmra.mrb[0].mxu0 %v67
  %v138 = vpop.f32.mrb[0].mxu0
  %v139 = vadd.f32 0.0, %v138
  %v140 = vpop.f32.mrb[0].mxu0
  %v141 = vpop.f32.mrb[0].mxu0
  %v142 = vadd.f32 0.0, %v141
  %v143 = vpop.f32.mrb[0].mxu0
  %144 = vmatprep.mubr.bf16.mxu0 0
  %145 = vmatmul.mubr.bf16.gmra.mrb[0].mxu0 %v70
  %v146 = vpop.f32.mrb[0].mxu0
  %v147 = vadd.f32 0.0, %v146
  %v148 = vpop.f32.mrb[0].mxu0
  %v149 = vpop.f32.mrb[0].mxu0
  %v150 = vadd.f32 0.0, %v149
  %v151 = vpop.f32.mrb[0].mxu0
  %152 = vmatprep.mubr.bf16.mxu0 0
  %153 = vmatmul.mubr.bf16.gmra.mrb[0].mxu0 %v73
  %v154 = vpop.f32.mrb[0].mxu0
  %v155 = vadd.f32 0.0, %v154
  %v156 = vpop.f32.mrb[0].mxu0
  %v157 = vpop.f32.mrb[0].mxu0
  %v158 = vadd.f32 0.0, %v157
  %v159 = vpop.f32.mrb[0].mxu0
  %160 = vmatprep.mubr.bf16.mxu0 0
  %161 = vmatmul.mubr.bf16.gmra.mrb[0].mxu0 %v76
  %v162 = vpop.f32.mrb[0].mxu0
  %v163 = vadd.f32 0.0, %v162
  %v164 = vpop.f32.mrb[0].mxu0
  %v165 = vpop.f32.mrb[0].mxu0
  %v166 = vadd.f32 0.0, %v165
  %v167 = vpop.f32.mrb[0].mxu0
  %168 = vmatprep.mubr.bf16.mxu0 0
  %169 = vmatmul.mubr.bf16.gmra.mrb[0].mxu0 %v79
  %v170 = vpop.f32.mrb[0].mxu0
  %v171 = vadd.f32 0.0, %v170
  %v172 = vpop.f32.mrb[0].mxu0
  %v173 = vpop.f32.mrb[0].mxu0
  %v174 = vadd.f32 0.0, %v173
  %v175 = vpop.f32.mrb[0].mxu0
  %176 = vmatprep.mubr.bf16.mxu0 0
  %177 = vmatmul.mubr.bf16.gmra.mrb[0].mxu0 %v82
  %v178 = vpop.f32.mrb[0].mxu0
  %v179 = vadd.f32 0.0, %v178
  %v180 = vpop.f32.mrb[0].mxu0
  %v181 = vpop.f32.mrb[0].mxu0
  %v182 = vadd.f32 0.0, %v181
  %v183 = vpop.f32.mrb[0].mxu0
  %184 = vdwg.mxu0
  %v185 = vld [vmem:[%s2] sm:$0x1]
  %v187 = vlaneseq
  %v188 = vshrl.u32 %v187, 7
  %v189 = vsub.s32 0, %v188
  %v190 = vrot.slane %v185, %v189
  %v192 = vmul.f32 %v123, %v190
  %v193 = vmul.f32 %v126, %v190
  %v194 = vmul.f32 %v131, %v190
  %v195 = vmul.f32 %v134, %v190
  %v196 = vmul.f32 %v139, %v190
  %v197 = vmul.f32 %v142, %v190
  %v198 = vmul.f32 %v147, %v190
  %v199 = vmul.f32 %v150, %v190
  %v200 = vmul.f32 %v155, %v190
  %v201 = vmul.f32 %v158, %v190
  %v202 = vmul.f32 %v163, %v190
  %v203 = vmul.f32 %v166, %v190
  %v204 = vmul.f32 %v171, %v190
  %v205 = vmul.f32 %v174, %v190
  %v206 = vmul.f32 %v179, %v190
  %v207 = vmul.f32 %v182, %v190
  %v208 = vld [vmem:[%s3] sm:$0x1]
  %v210 = vlaneseq
  %v211 = vshrl.u32 %v210, 7
  %v212 = vsub.s32 0, %v211
  %v213 = vrot.slane %v208, %v212
  %v215 = vadd.f32 %v192, %v213
  %v216 = vadd.f32 %v193, %v213
  %v217 = vadd.f32 %v194, %v213
  %v218 = vadd.f32 %v195, %v213
  %v219 = vadd.f32 %v196, %v213
  %v220 = vadd.f32 %v197, %v213
  %v221 = vadd.f32 %v198, %v213
  %v222 = vadd.f32 %v199, %v213
  %v223 = vadd.f32 %v200, %v213
  %v224 = vadd.f32 %v201, %v213
  %v225 = vadd.f32 %v202, %v213
  %v226 = vadd.f32 %v203, %v213
  %v227 = vadd.f32 %v204, %v213
  %v228 = vadd.f32 %v205, %v213
  %v229 = vadd.f32 %v206, %v213
  %v230 = vadd.f32 %v207, %v213
  %231 = vst.msk [vmem:[%s4] sm:$0xff] %vm59, %v215
  %232 = vst.msk [vmem:[%s4 + $0x8] sm:$0xff] %vm59, %v216
  %233 = vst.msk [vmem:[%s4 + $0x10] sm:$0xff] %vm59, %v217
  %234 = vst.msk [vmem:[%s4 + $0x18] sm:$0xff] %vm59, %v218
  %235 = vst.msk [vmem:[%s4 + $0x20] sm:$0xff] %vm59, %v219
  %236 = vst.msk [vmem:[%s4 + $0x28] sm:$0xff] %vm59, %v220
  %237 = vst.msk [vmem:[%s4 + $0x30] sm:$0xff] %vm59, %v221
  %238 = vst.msk [vmem:[%s4 + $0x38] sm:$0xff] %vm59, %v222
  %239 = vst.msk [vmem:[%s4 + $0x40] sm:$0xff] %vm59, %v223
  %240 = vst.msk [vmem:[%s4 + $0x48] sm:$0xff] %vm59, %v224
  %241 = vst.msk [vmem:[%s4 + $0x50] sm:$0xff] %vm59, %v225
  %242 = vst.msk [vmem:[%s4 + $0x58] sm:$0xff] %vm59, %v226
  %243 = vst.msk [vmem:[%s4 + $0x60] sm:$0xff] %vm59, %v227
  %244 = vst.msk [vmem:[%s4 + $0x68] sm:$0xff] %vm59, %v228
  %245 = vst.msk [vmem:[%s4 + $0x70] sm:$0xff] %vm59, %v229
  %246 = vst.msk [vmem:[%s4 + $0x78] sm:$0xff] %vm59, %v230
  // Predicated region
  $region18: #{_lambda_.7} parent=0 // pred_check
    _
  $region19: #{_lambda_.7} parent=0 // pred_check_branch
    %248 = sbr.rel (0) target = $region21
  $region20: #{_lambda_.7} parent=0 // pred_region
    _
  $region21: #{_lambda_.7} parent=0 // pred_fallthru
    _
  // Predicated region
  $region22: #{_lambda_.7} parent=0 // pred_check
    _
  $region23: #{_lambda_.7} parent=0 // pred_check_branch
    %250 = sbr.rel (0) target = $region25
  $region24: #{_lambda_.7} parent=0 // pred_region
    _
  $region25: #{_lambda_.7} parent=0 // pred_fallthru
    _

// kernel: _lambda_.11
$region0: #{_lambda_.11}
  #allocation0 [shape = 'u32[]', space=smem, size = 0x4, offset = 0x4, fixed_abs, tag = 'smem constant byte address 0x4 - core index']
  #allocation1 [shape = 'u32[144,128]{1,0:T(1,128)}', space=vmem, size = 0x12000, scoped, tag = 'internal scratch']
  #allocation2 [shape = 'f32[1,10,80]{2,1,0:T(8,128)}', space=vmem, size = 0x2000, scoped, tag = 'scratch operand']
  %s0 = inlined_call_operand.vmem [shape: f32[2,8,64], index: 0, kind: input, shape index: {}]
  %s1 = inlined_call_operand.vmem [shape: f32[1,8,64], index: 1, kind: input, shape index: {}]
  %s2 = inlined_call_operand.vmem [shape: f32[2,8,64], index: 2, kind: input, shape index: {}]
  %s3 = inlined_call_operand.vmem [shape: f32[2,8,64], index: 3, kind: output, shape index: {}]
  %s4 = sld [smem:[#allocation0]]
  $region45: #{_lambda_.11} parent=0
    _
  %s6 = ssub.s32 1, %s4
  %s7 = scalar_select 0, %s6, %s4
  loop: start=0, step=1, limit=4
  $region2: #{_lambda_.11} parent=0 // loop_pre_header
    _
  $region3: #{_lambda_.11} parent=0 // loop_header
    %s9 = sphi 0, %s13
    %p10 = scmp.ge.s32.totalorder %s9, 4
    %s19 = sphi 0, %s21
    %s22 = sphi 0, %s19
    %s23 = sphi 0, %s22
    %s39 = sphi 0, %s23
    %s43 = sphi 0, %s43
    %s45 = sphi 0, %s43
    %s46 = sphi 0, %s45
    %s60 = sphi 0, %s46
    %s66 = sphi 0, %s68
    %s69 = sphi 0, %s66
    %s70 = sphi 0, %s69
    %s86 = sphi 0, %s70
    %s92 = sphi 0, %s94
    %s95 = sphi 0, %s92
    %s96 = sphi 0, %s95
    %s112 = sphi 0, %s96
  $region4: #{_lambda_.11} parent=0 // loop_header_branch
    %12 = sbr.rel (%p10) target = $region8
  $region5: #{_lambda_.11} parent=0 // loop_body
    %s14 = ssub.s32 %s9, 1
    %s15 = ssub.s32 %s9, 2
    %s16 = sadd.s32 %s9, 1
    %s17 = ssub.s32 %s9, %s16
    %p18 = scmp.eq.s32.totalorder %s17, 0
    %s20 = sadd.s32 %s19, 1
    %s21 = scalar_select %p18, %s19, %s20
    %p24 = pneg %p18
    %p25 = scmp.eq.s32.totalorder %s9, 1
    %p26 = por %p24, %p25
    %p27 = scmp.ne.s32.totalorder %s19, %s22
    %p28 = scmp.eq.s32.totalorder %s9, 0
    %p29 = por %p27, %p28
    %p30 = scmp.ne.s32.totalorder %s19, %s22
    %p31 = scmp.eq.s32.totalorder %s14, 1
    %p32 = por %p30, %p31
    %p33 = scmp.ne.s32.totalorder %s22, %s23
    %p34 = scmp.eq.s32.totalorder %s14, 0
    %p35 = por %p33, %p34
    %p36 = scmp.ne.s32.totalorder %s22, %s23
    %p37 = scmp.eq.s32.totalorder %s15, 1
    %p38 = por %p36, %p37
    %p40 = scmp.ne.s32.totalorder %s23, %s39
    %p41 = scmp.eq.s32.totalorder %s15, 0
    %p42 = por %p40, %p41
    %s44 = sadd.s32 %s43, 1
    %p47 = scmp.eq.s32.totalorder %s9, 1
    %p48 = scmp.ne.s32.totalorder %s43, %s45
    %p49 = scmp.eq.s32.totalorder %s9, 0
    %p50 = por %p48, %p49
    %p51 = scmp.ne.s32.totalorder %s43, %s45
    %p52 = scmp.eq.s32.totalorder %s14, 1
    %p53 = por %p51, %p52
    %p54 = scmp.ne.s32.totalorder %s45, %s46
    %p55 = scmp.eq.s32.totalorder %s14, 0
    %p56 = por %p54, %p55
    %p57 = scmp.ne.s32.totalorder %s45, %s46
    %p58 = scmp.eq.s32.totalorder %s15, 1
    %p59 = por %p57, %p58
    %p61 = scmp.ne.s32.totalorder %s46, %s60
    %p62 = scmp.eq.s32.totalorder %s15, 0
    %p63 = por %p61, %p62
    %s64 = ssub.s32 %s9, %s16
    %p65 = scmp.eq.s32.totalorder %s64, 0
    %s67 = sadd.s32 %s66, 1
    %s68 = scalar_select %p65, %s66, %s67
    %p71 = pneg %p65
    %p72 = scmp.eq.s32.totalorder %s9, 1
    %p73 = por %p71, %p72
    %p74 = scmp.ne.s32.totalorder %s66, %s69
    %p75 = scmp.eq.s32.totalorder %s9, 0
    %p76 = por %p74, %p75
    %p77 = scmp.ne.s32.totalorder %s66, %s69
    %p78 = scmp.eq.s32.totalorder %s14, 1
    %p79 = por %p77, %p78
    %p80 = scmp.ne.s32.totalorder %s69, %s70
    %p81 = scmp.eq.s32.totalorder %s14, 0
    %p82 = por %p80, %p81
    %p83 = scmp.ne.s32.totalorder %s69, %s70
    %p84 = scmp.eq.s32.totalorder %s15, 1
    %p85 = por %p83, %p84
    %p87 = scmp.ne.s32.totalorder %s70, %s86
    %p88 = scmp.eq.s32.totalorder %s15, 0
    %p89 = por %p87, %p88
    %s90 = ssub.s32 %s9, %s16
    %p91 = scmp.eq.s32.totalorder %s90, 0
    %s93 = sadd.s32 %s92, 1
    %s94 = scalar_select %p91, %s92, %s93
    %p97 = pneg %p91
    %p98 = scmp.eq.s32.totalorder %s9, 1
    %p99 = por %p97, %p98
    %p100 = scmp.ne.s32.totalorder %s92, %s95
    %p101 = scmp.eq.s32.totalorder %s9, 0
    %p102 = por %p100, %p101
    %p103 = scmp.ne.s32.totalorder %s92, %s95
    %p104 = scmp.eq.s32.totalorder %s14, 1
    %p105 = por %p103, %p104
    %p106 = scmp.ne.s32.totalorder %s95, %s96
    %p107 = scmp.eq.s32.totalorder %s14, 0
    %p108 = por %p106, %p107
    %p109 = scmp.ne.s32.totalorder %s95, %s96
    %p110 = scmp.eq.s32.totalorder %s15, 1
    %p111 = por %p109, %p110
    %p113 = scmp.ne.s32.totalorder %s96, %s112
    %p114 = scmp.eq.s32.totalorder %s15, 0
    %p115 = por %p113, %p114
    %p116 = scmp.le.s32.totalorder 1, %s9
    %p117 = scmp.lt.s32.totalorder %s9, 3
    %p118 = pnand %p116, %p117
    %p119 = pneg %p118
    // Predicated region
    $region9: #{_lambda_.11} parent=5 // pred_check
      _
    $region10: #{_lambda_.11} parent=5 // pred_check_branch
      %121 = sbr.rel (%p118) target = $region12
    $region11: #{_lambda_.11} parent=5 // pred_region
      %s122 = ssub.s32 %s9, 1
      // Predicated region
      $region13: #{_lambda_.11} parent=11 // pred_check
        %p123 = pneg %p56
      $region14: #{_lambda_.11} parent=11 // pred_check_branch
        %125 = sbr.rel (%p123) target = $region16
      $region15: #{_lambda_.11} parent=11 // pred_region
        _
      $region16: #{_lambda_.11} parent=11 // pred_fallthru
        _
    $region12: #{_lambda_.11} parent=5 // pred_fallthru
      _
    %p126 = scmp.lt.s32.totalorder %s9, 2
    // Predicated region
    $region17: #{_lambda_.11} parent=5 // pred_check
      %p127 = pneg %p126
    $region18: #{_lambda_.11} parent=5 // pred_check_branch
      %129 = sbr.rel (%p127) target = $region20
    $region19: #{_lambda_.11} parent=5 // pred_region
      // Predicated region
      $region21: #{_lambda_.11} parent=19 // pred_check
        %p130 = pneg %p29
      $region22: #{_lambda_.11} parent=19 // pred_check_branch
        %132 = sbr.rel (%p130) target = $region24
      $region23: #{_lambda_.11} parent=19 // pred_region
        %p133 = scmp.lt.s32.totalorder %s9, 1
        %s134 = scalar_select %p133, %s9, 1
        %s135 = smul.addr %s134, 8
        %s136 = scalar_lea.vmem %s0, %s135
      $region24: #{_lambda_.11} parent=19 // pred_fallthru
        _
      // Predicated region
      $region25: #{_lambda_.11} parent=19 // pred_check
        %p137 = pneg %p76
      $region26: #{_lambda_.11} parent=19 // pred_check_branch
        %139 = sbr.rel (%p137) target = $region28
      $region27: #{_lambda_.11} parent=19 // pred_region
        %p140 = scmp.lt.s32.totalorder %s9, 1
        %s141 = scalar_select %p140, %s9, 1
        %s142 = smul.addr %s141, 8
        %s143 = scalar_lea.vmem %s2, %s142
      $region28: #{_lambda_.11} parent=19 // pred_fallthru
        _
    $region20: #{_lambda_.11} parent=5 // pred_fallthru
      _
    %p144 = scmp.le.s32.totalorder 1, %s9
    %p145 = scmp.lt.s32.totalorder %s9, 3
    %p146 = pnand %p144, %p145
    %p147 = pneg %p146
    // Predicated region
    $region29: #{_lambda_.11} parent=5 // pred_check
      _
    $region30: #{_lambda_.11} parent=5 // pred_check_branch
      %149 = sbr.rel (%p146) target = $region32
    $region31: #{_lambda_.11} parent=5 // pred_region
      %s150 = ssub.s32 %s9, 1
      %p151 = scmp.lt.s32.totalorder %s14, 1
      %s152 = scalar_select %p151, %s14, 1
      %s153 = smul.addr %s152, 8
      %s154 = scalar_lea.vmem %s0, %s153
      %p155 = pneg %p35
      %p156 = pneg %p32
      %p157 = pneg %p56
      %p158 = pneg %p53
      %p159 = scmp.lt.s32.totalorder %s14, 1
      %s160 = scalar_select %p159, %s14, 1
      %s161 = smul.addr %s160, 8
      %s162 = scalar_lea.vmem %s2, %s161
      %p163 = pneg %p82
      %p164 = pneg %p79
      %p165 = pneg %p108
      %p166 = pneg %p105
      %p167 = scmp.lt.s32.totalorder %s14, 1
      %s168 = scalar_select %p167, %s14, 1
      %s169 = smul.addr %s168, 8
      %s170 = scalar_lea.vmem %s3, %s169
      %p171 = scmp.lt.s32.totalorder %s14, 1
      %s172 = scalar_select %p171, %s14, 1
      %s173 = smul.addr %s172, 8
      %s174 = scalar_lea.vmem %s0, %s173
      %p175 = scmp.lt.s32.totalorder %s14, 1
      %s176 = scalar_select %p175, %s14, 1
      %s177 = smul.addr %s176, 8
      %s178 = scalar_lea.vmem %s2, %s177
      %p179 = scmp.lt.s32.totalorder %s14, 1
      %s180 = scalar_select %p179, %s14, 1
      %s181 = smul.addr %s180, 8
      %s182 = scalar_lea.vmem %s3, %s181
      %vm183 = vcmask 654336
      %184 = vst.msk [vmem:[#allocation2] sm:$0xff] %vm183, 0.0
      %vm185 = vcmask 648192
      %186 = vst.msk [vmem:[#allocation2 + $0x8] sm:$0x3] %vm185, 0.0
      %v187 = vld [vmem:[%s174] sm:$0xff]
      %189 = vrot.lane.b32.xlu0 %v187, 8
      %v190 = vpop.permute.xlu0 %189
      %vm192 = vcmask 588864
      %193 = vst.msk [vmem:[#allocation2 + $0x1] sm:$0xff] %vm192, %v190
      %v194 = vld [vmem:[#allocation2] sm:$0xff]
      %v195 = vadd.f32 %v194, 0.0
      %197 = vrot.lane.b32.xlu0 %v194, 120
      %v198 = vpop.permute.xlu0 %197
      %v200 = vadd.f32 %v195, %v198
      %201 = vrot.lane.b32.xlu0 %v194, 112
      %v202 = vpop.permute.xlu0 %201
      %v204 = vadd.f32 %v200, %v202
      %v205 = vld [vmem:[#allocation2 + $0x1] sm:$0xff]
      %v206 = vadd.f32 %v204, %v205
      %208 = vrot.lane.b32.xlu0 %v205, 120
      %v209 = vpop.permute.xlu0 %208
      %v211 = vadd.f32 %v206, %v209
      %212 = vrot.lane.b32.xlu0 %v205, 112
      %v213 = vpop.permute.xlu0 %212
      %v215 = vadd.f32 %v211, %v213
      %v216 = vld [vmem:[#allocation2 + $0x2] sm:$0xff]
      %v217 = vadd.f32 %v215, %v216
      %219 = vrot.lane.b32.xlu0 %v216, 120
      %v220 = vpop.permute.xlu0 %219
      %v222 = vadd.f32 %v217, %v220
      %223 = vrot.lane.b32.xlu0 %v216, 112
      %v224 = vpop.permute.xlu0 %223
      %v226 = vadd.f32 %v222, %v224
      %v227 = vld [vmem:[%s1] sm:$0xff]
      %v228 = vmul.f32 %v226, %v227
      %v229 = vld [vmem:[%s178] sm:$0xff]
      %v230 = vadd.f32 %v228, %v229
      %vm231 = vcmask 523264
      %232 = vst.msk [vmem:[%s182] sm:$0xff] %vm231, %v230
      %p233 = scmp.lt.s32.totalorder %s14, 1
      %s234 = scalar_select %p233, %s14, 1
      %s235 = smul.addr %s234, 8
      %s236 = scalar_lea.vmem %s3, %s235
      // Predicated region
      $region33: #{_lambda_.11} parent=31 // pred_check
        %p237 = pneg %p105
      $region34: #{_lambda_.11} parent=31 // pred_check_branch
        %239 = sbr.rel (%p237) target = $region36
      $region35: #{_lambda_.11} parent=31 // pred_region
        _
      $region36: #{_lambda_.11} parent=31 // pred_fallthru
        _
    $region32: #{_lambda_.11} parent=5 // pred_fallthru
      _
    %p240 = scmp.le.s32.totalorder 2, %s9
    // Predicated region
    $region37: #{_lambda_.11} parent=5 // pred_check
      %p241 = pneg %p240
    $region38: #{_lambda_.11} parent=5 // pred_check_branch
      %243 = sbr.rel (%p241) target = $region40
    $region39: #{_lambda_.11} parent=5 // pred_region
      %s244 = ssub.s32 %s9, 2
      // Predicated region
      $region41: #{_lambda_.11} parent=39 // pred_check
        %p245 = pneg %p111
      $region42: #{_lambda_.11} parent=39 // pred_check_branch
        %247 = sbr.rel (%p245) target = $region44
      $region43: #{_lambda_.11} parent=39 // pred_region
        %p248 = scmp.lt.s32.totalorder %s15, 1
        %s249 = scalar_select %p248, %s15, 1
        %s250 = smul.addr %s249, 8
        %s251 = scalar_lea.vmem %s3, %s250
      $region44: #{_lambda_.11} parent=39 // pred_fallthru
        _
    $region40: #{_lambda_.11} parent=5 // pred_fallthru
      _
  $region6: #{_lambda_.11} parent=0 // loop_footer
    %s13 = sadd.s32 1, %s9
  $region7: #{_lambda_.11} parent=0 // loop_footer_branch
    %8 = sbr.rel target = $region3
  $region8: #{_lambda_.11} parent=0 // loop_exit
    _

// kernel: _lambda_.9
$region0: #{_lambda_.9}
  #allocation0 [shape = 'u32[]', space=smem, size = 0x4, offset = 0x4, fixed_abs, tag = 'smem constant byte address 0x4 - core index']
  #allocation1 [shape = 'u32[144,128]{1,0:T(1,128)}', space=vmem, size = 0x12000, scoped, tag = 'internal scratch']
  #allocation2 [shape = 'f32[1,10,10,8]{3,2,1,0:T(8,128)}', space=vmem, size = 0x14000, scoped, tag = 'scratch operand']
  #allocation3 [shape = 'f32[1,10,10,8]{3,2,1,0:T(8,128)}', space=vmem, size = 0x14000, scoped, tag = 'scratch operand']
  %s0 = inlined_call_operand.vmem [shape: f32[2,8,8,8], index: 0, kind: input, shape index: {}]
  %s1 = inlined_call_operand.vmem [shape: f32[9,8], index: 1, kind: input, shape index: {}]
  %s2 = inlined_call_operand.vmem [shape: bf16[8,8], index: 2, kind: input, shape index: {}]
  %s3 = inlined_call_operand.vmem [shape: f32[1,8], index: 3, kind: input, shape index: {}]
  %s4 = inlined_call_operand.vmem [shape: f32[1,8], index: 4, kind: input, shape index: {}]
  %s5 = inlined_call_operand.vmem [shape: f32[9,8], index: 5, kind: input, shape index: {}]
  %s6 = inlined_call_operand.vmem [shape: bf16[8,8], index: 6, kind: input, shape index: {}]
  %s7 = inlined_call_operand.vmem [shape: f32[1,8], index: 7, kind: input, shape index: {}]
  %s8 = inlined_call_operand.vmem [shape: f32[1,8], index: 8, kind: input, shape index: {}]
  %s9 = inlined_call_operand.vmem [shape: f32[2,8,8,8], index: 9, kind: input, shape index: {}]
  %s10 = inlined_call_operand.vmem [shape: f32[2,8,8,8], index: 10, kind: output, shape index: {}]
  %s11 = sld [smem:[#allocation0]]
  $region73: #{_lambda_.9} parent=0
    _
  %s13 = ssub.s32 1, %s11
  %s14 = scalar_select 0, %s13, %s11
  loop: start=0, step=1, limit=4
  $region2: #{_lambda_.9} parent=0 // loop_pre_header
    _
  $region3: #{_lambda_.9} parent=0 // loop_header
    %s16 = sphi 0, %s20
    %p17 = scmp.ge.s32.totalorder %s16, 4
    %s26 = sphi 0, %s28
    %s29 = sphi 0, %s26
    %s30 = sphi 0, %s29
    %s46 = sphi 0, %s30
    %s50 = sphi 0, %s50
    %s52 = sphi 0, %s50
    %s53 = sphi 0, %s52
    %s67 = sphi 0, %s53
    %s71 = sphi 0, %s71
    %s73 = sphi 0, %s71
    %s74 = sphi 0, %s73
    %s88 = sphi 0, %s74
    %s92 = sphi 0, %s92
    %s94 = sphi 0, %s92
    %s95 = sphi 0, %s94
    %s109 = sphi 0, %s95
    %s113 = sphi 0, %s113
    %s115 = sphi 0, %s113
    %s116 = sphi 0, %s115
    %s130 = sphi 0, %s116
    %s134 = sphi 0, %s134
    %s136 = sphi 0, %s134
    %s137 = sphi 0, %s136
    %s151 = sphi 0, %s137
    %s155 = sphi 0, %s155
    %s157 = sphi 0, %s155
    %s158 = sphi 0, %s157
    %s172 = sphi 0, %s158
    %s176 = sphi 0, %s176
    %s178 = sphi 0, %s176
    %s179 = sphi 0, %s178
    %s193 = sphi 0, %s179
    %s197 = sphi 0, %s197
    %s199 = sphi 0, %s197
    %s200 = sphi 0, %s199
    %s214 = sphi 0, %s200
    %s220 = sphi 0, %s222
    %s223 = sphi 0, %s220
    %s224 = sphi 0, %s223
    %s240 = sphi 0, %s224
    %s246 = sphi 0, %s248
    %s249 = sphi 0, %s246
    %s250 = sphi 0, %s249
    %s266 = sphi 0, %s250
  $region4: #{_lambda_.9} parent=0 // loop_header_branch
    %19 = sbr.rel (%p17) target = $region8
  $region5: #{_lambda_.9} parent=0 // loop_body
    %s21 = ssub.s32 %s16, 1
    %s22 = ssub.s32 %s16, 2
    %s23 = sadd.s32 %s16, 1
    %s24 = ssub.s32 %s16, %s23
    %p25 = scmp.eq.s32.totalorder %s24, 0
    %s27 = sadd.s32 %s26, 1
    %s28 = scalar_select %p25, %s26, %s27
    %p31 = pneg %p25
    %p32 = scmp.eq.s32.totalorder %s16, 1
    %p33 = por %p31, %p32
    %p34 = scmp.ne.s32.totalorder %s26, %s29
    %p35 = scmp.eq.s32.totalorder %s16, 0
    %p36 = por %p34, %p35
    %p37 = scmp.ne.s32.totalorder %s26, %s29
    %p38 = scmp.eq.s32.totalorder %s21, 1
    %p39 = por %p37, %p38
    %p40 = scmp.ne.s32.totalorder %s29, %s30
    %p41 = scmp.eq.s32.totalorder %s21, 0
    %p42 = por %p40, %p41
    %p43 = scmp.ne.s32.totalorder %s29, %s30
    %p44 = scmp.eq.s32.totalorder %s22, 1
    %p45 = por %p43, %p44
    %p47 = scmp.ne.s32.totalorder %s30, %s46
    %p48 = scmp.eq.s32.totalorder %s22, 0
    %p49 = por %p47, %p48
    %s51 = sadd.s32 %s50, 1
    %p54 = scmp.eq.s32.totalorder %s16, 1
    %p55 = scmp.ne.s32.totalorder %s50, %s52
    %p56 = scmp.eq.s32.totalorder %s16, 0
    %p57 = por %p55, %p56
    %p58 = scmp.ne.s32.totalorder %s50, %s52
    %p59 = scmp.eq.s32.totalorder %s21, 1
    %p60 = por %p58, %p59
    %p61 = scmp.ne.s32.totalorder %s52, %s53
    %p62 = scmp.eq.s32.totalorder %s21, 0
    %p63 = por %p61, %p62
    %p64 = scmp.ne.s32.totalorder %s52, %s53
    %p65 = scmp.eq.s32.totalorder %s22, 1
    %p66 = por %p64, %p65
    %p68 = scmp.ne.s32.totalorder %s53, %s67
    %p69 = scmp.eq.s32.totalorder %s22, 0
    %p70 = por %p68, %p69
    %s72 = sadd.s32 %s71, 1
    %p75 = scmp.eq.s32.totalorder %s16, 1
    %p76 = scmp.ne.s32.totalorder %s71, %s73
    %p77 = scmp.eq.s32.totalorder %s16, 0
    %p78 = por %p76, %p77
    %p79 = scmp.ne.s32.totalorder %s71, %s73
    %p80 = scmp.eq.s32.totalorder %s21, 1
    %p81 = por %p79, %p80
    %p82 = scmp.ne.s32.totalorder %s73, %s74
    %p83 = scmp.eq.s32.totalorder %s21, 0
    %p84 = por %p82, %p83
    %p85 = scmp.ne.s32.totalorder %s73, %s74
    %p86 = scmp.eq.s32.totalorder %s22, 1
    %p87 = por %p85, %p86
    %p89 = scmp.ne.s32.totalorder %s74, %s88
    %p90 = scmp.eq.s32.totalorder %s22, 0
    %p91 = por %p89, %p90
    %s93 = sadd.s32 %s92, 1
    %p96 = scmp.eq.s32.totalorder %s16, 1
    %p97 = scmp.ne.s32.totalorder %s92, %s94
    %p98 = scmp.eq.s32.totalorder %s16, 0
    %p99 = por %p97, %p98
    %p100 = scmp.ne.s32.totalorder %s92, %s94
    %p101 = scmp.eq.s32.totalorder %s21, 1
    %p102 = por %p100, %p101
    %p103 = scmp.ne.s32.totalorder %s94, %s95
    %p104 = scmp.eq.s32.totalorder %s21, 0
    %p105 = por %p103, %p104
    %p106 = scmp.ne.s32.totalorder %s94, %s95
    %p107 = scmp.eq.s32.totalorder %s22, 1
    %p108 = por %p106, %p107
    %p110 = scmp.ne.s32.totalorder %s95, %s109
    %p111 = scmp.eq.s32.totalorder %s22, 0
    %p112 = por %p110, %p111
    %s114 = sadd.s32 %s113, 1
    %p117 = scmp.eq.s32.totalorder %s16, 1
    %p118 = scmp.ne.s32.totalorder %s113, %s115
    %p119 = scmp.eq.s32.totalorder %s16, 0
    %p120 = por %p118, %p119
    %p121 = scmp.ne.s32.totalorder %s113, %s115
    %p122 = scmp.eq.s32.totalorder %s21, 1
    %p123 = por %p121, %p122
    %p124 = scmp.ne.s32.totalorder %s115, %s116
    %p125 = scmp.eq.s32.totalorder %s21, 0
    %p126 = por %p124, %p125
    %p127 = scmp.ne.s32.totalorder %s115, %s116
    %p128 = scmp.eq.s32.totalorder %s22, 1
    %p129 = por %p127, %p128
    %p131 = scmp.ne.s32.totalorder %s116, %s130
    %p132 = scmp.eq.s32.totalorder %s22, 0
    %p133 = por %p131, %p132
    %s135 = sadd.s32 %s134, 1
    %p138 = scmp.eq.s32.totalorder %s16, 1
    %p139 = scmp.ne.s32.totalorder %s134, %s136
    %p140 = scmp.eq.s32.totalorder %s16, 0
    %p141 = por %p139, %p140
    %p142 = scmp.ne.s32.totalorder %s134, %s136
    %p143 = scmp.eq.s32.totalorder %s21, 1
    %p144 = por %p142, %p143
    %p145 = scmp.ne.s32.totalorder %s136, %s137
    %p146 = scmp.eq.s32.totalorder %s21, 0
    %p147 = por %p145, %p146
    %p148 = scmp.ne.s32.totalorder %s136, %s137
    %p149 = scmp.eq.s32.totalorder %s22, 1
    %p150 = por %p148, %p149
    %p152 = scmp.ne.s32.totalorder %s137, %s151
    %p153 = scmp.eq.s32.totalorder %s22, 0
    %p154 = por %p152, %p153
    %s156 = sadd.s32 %s155, 1
    %p159 = scmp.eq.s32.totalorder %s16, 1
    %p160 = scmp.ne.s32.totalorder %s155, %s157
    %p161 = scmp.eq.s32.totalorder %s16, 0
    %p162 = por %p160, %p161
    %p163 = scmp.ne.s32.totalorder %s155, %s157
    %p164 = scmp.eq.s32.totalorder %s21, 1
    %p165 = por %p163, %p164
    %p166 = scmp.ne.s32.totalorder %s157, %s158
    %p167 = scmp.eq.s32.totalorder %s21, 0
    %p168 = por %p166, %p167
    %p169 = scmp.ne.s32.totalorder %s157, %s158
    %p170 = scmp.eq.s32.totalorder %s22, 1
    %p171 = por %p169, %p170
    %p173 = scmp.ne.s32.totalorder %s158, %s172
    %p174 = scmp.eq.s32.totalorder %s22, 0
    %p175 = por %p173, %p174
    %s177 = sadd.s32 %s176, 1
    %p180 = scmp.eq.s32.totalorder %s16, 1
    %p181 = scmp.ne.s32.totalorder %s176, %s178
    %p182 = scmp.eq.s32.totalorder %s16, 0
    %p183 = por %p181, %p182
    %p184 = scmp.ne.s32.totalorder %s176, %s178
    %p185 = scmp.eq.s32.totalorder %s21, 1
    %p186 = por %p184, %p185
    %p187 = scmp.ne.s32.totalorder %s178, %s179
    %p188 = scmp.eq.s32.totalorder %s21, 0
    %p189 = por %p187, %p188
    %p190 = scmp.ne.s32.totalorder %s178, %s179
    %p191 = scmp.eq.s32.totalorder %s22, 1
    %p192 = por %p190, %p191
    %p194 = scmp.ne.s32.totalorder %s179, %s193
    %p195 = scmp.eq.s32.totalorder %s22, 0
    %p196 = por %p194, %p195
    %s198 = sadd.s32 %s197, 1
    %p201 = scmp.eq.s32.totalorder %s16, 1
    %p202 = scmp.ne.s32.totalorder %s197, %s199
    %p203 = scmp.eq.s32.totalorder %s16, 0
    %p204 = por %p202, %p203
    %p205 = scmp.ne.s32.totalorder %s197, %s199
    %p206 = scmp.eq.s32.totalorder %s21, 1
    %p207 = por %p205, %p206
    %p208 = scmp.ne.s32.totalorder %s199, %s200
    %p209 = scmp.eq.s32.totalorder %s21, 0
    %p210 = por %p208, %p209
    %p211 = scmp.ne.s32.totalorder %s199, %s200
    %p212 = scmp.eq.s32.totalorder %s22, 1
    %p213 = por %p211, %p212
    %p215 = scmp.ne.s32.totalorder %s200, %s214
    %p216 = scmp.eq.s32.totalorder %s22, 0
    %p217 = por %p215, %p216
    %s218 = ssub.s32 %s16, %s23
    %p219 = scmp.eq.s32.totalorder %s218, 0
    %s221 = sadd.s32 %s220, 1
    %s222 = scalar_select %p219, %s220, %s221
    %p225 = pneg %p219
    %p226 = scmp.eq.s32.totalorder %s16, 1
    %p227 = por %p225, %p226
    %p228 = scmp.ne.s32.totalorder %s220, %s223
    %p229 = scmp.eq.s32.totalorder %s16, 0
    %p230 = por %p228, %p229
    %p231 = scmp.ne.s32.totalorder %s220, %s223
    %p232 = scmp.eq.s32.totalorder %s21, 1
    %p233 = por %p231, %p232
    %p234 = scmp.ne.s32.totalorder %s223, %s224
    %p235 = scmp.eq.s32.totalorder %s21, 0
    %p236 = por %p234, %p235
    %p237 = scmp.ne.s32.totalorder %s223, %s224
    %p238 = scmp.eq.s32.totalorder %s22, 1
    %p239 = por %p237, %p238
    %p241 = scmp.ne.s32.totalorder %s224, %s240
    %p242 = scmp.eq.s32.totalorder %s22, 0
    %p243 = por %p241, %p242
    %s244 = ssub.s32 %s16, %s23
    %p245 = scmp.eq.s32.totalorder %s244, 0
    %s247 = sadd.s32 %s246, 1
    %s248 = scalar_select %p245, %s246, %s247
    %p251 = pneg %p245
    %p252 = scmp.eq.s32.totalorder %s16, 1
    %p253 = por %p251, %p252
    %p254 = scmp.ne.s32.totalorder %s246, %s249
    %p255 = scmp.eq.s32.totalorder %s16, 0
    %p256 = por %p254, %p255
    %p257 = scmp.ne.s32.totalorder %s246, %s249
    %p258 = scmp.eq.s32.totalorder %s21, 1
    %p259 = por %p257, %p258
    %p260 = scmp.ne.s32.totalorder %s249, %s250
    %p261 = scmp.eq.s32.totalorder %s21, 0
    %p262 = por %p260, %p261
    %p263 = scmp.ne.s32.totalorder %s249, %s250
    %p264 = scmp.eq.s32.totalorder %s22, 1
    %p265 = por %p263, %p264
    %p267 = scmp.ne.s32.totalorder %s250, %s266
    %p268 = scmp.eq.s32.totalorder %s22, 0
    %p269 = por %p267, %p268
    %p270 = scmp.le.s32.totalorder 1, %s16
    %p271 = scmp.lt.s32.totalorder %s16, 3
    %p272 = pnand %p270, %p271
    %p273 = pneg %p272
    // Predicated region
    $region9: #{_lambda_.9} parent=5 // pred_check
      _
    $region10: #{_lambda_.9} parent=5 // pred_check_branch
      %275 = sbr.rel (%p272) target = $region12
    $region11: #{_lambda_.9} parent=5 // pred_region
      %s276 = ssub.s32 %s16, 1
      // Predicated region
      $region13: #{_lambda_.9} parent=11 // pred_check
        %p277 = pneg %p63
      $region14: #{_lambda_.9} parent=11 // pred_check_branch
        %279 = sbr.rel (%p277) target = $region16
      $region15: #{_lambda_.9} parent=11 // pred_region
        _
      $region16: #{_lambda_.9} parent=11 // pred_fallthru
        _
      // Predicated region
      $region17: #{_lambda_.9} parent=11 // pred_check
        %p280 = pneg %p84
      $region18: #{_lambda_.9} parent=11 // pred_check_branch
        %282 = sbr.rel (%p280) target = $region20
      $region19: #{_lambda_.9} parent=11 // pred_region
        _
      $region20: #{_lambda_.9} parent=11 // pred_fallthru
        _
      // Predicated region
      $region21: #{_lambda_.9} parent=11 // pred_check
        %p283 = pneg %p105
      $region22: #{_lambda_.9} parent=11 // pred_check_branch
        %285 = sbr.rel (%p283) target = $region24
      $region23: #{_lambda_.9} parent=11 // pred_region
        _
      $region24: #{_lambda_.9} parent=11 // pred_fallthru
        _
      // Predicated region
      $region25: #{_lambda_.9} parent=11 // pred_check
        %p286 = pneg %p126
      $region26: #{_lambda_.9} parent=11 // pred_check_branch
        %288 = sbr.rel (%p286) target = $region28
      $region27: #{_lambda_.9} parent=11 // pred_region
        _
      $region28: #{_lambda_.9} parent=11 // pred_fallthru
        _
      // Predicated region
      $region29: #{_lambda_.9} parent=11 // pred_check
        %p289 = pneg %p147
      $region30: #{_lambda_.9} parent=11 // pred_check_branch
        %291 = sbr.rel (%p289) target = $region32
      $region31: #{_lambda_.9} parent=11 // pred_region
        _
      $region32: #{_lambda_.9} parent=11 // pred_fallthru
        _
      // Predicated region
      $region33: #{_lambda_.9} parent=11 // pred_check
        %p292 = pneg %p168
      $region34: #{_lambda_.9} parent=11 // pred_check_branch
        %294 = sbr.rel (%p292) target = $region36
      $region35: #{_lambda_.9} parent=11 // pred_region
        _
      $region36: #{_lambda_.9} parent=11 // pred_fallthru
        _
      // Predicated region
      $region37: #{_lambda_.9} parent=11 // pred_check
        %p295 = pneg %p189
      $region38: #{_lambda_.9} parent=11 // pred_check_branch
        %297 = sbr.rel (%p295) target = $region40
      $region39: #{_lambda_.9} parent=11 // pred_region
        _
      $region40: #{_lambda_.9} parent=11 // pred_fallthru
        _
      // Predicated region
      $region41: #{_lambda_.9} parent=11 // pred_check
        %p298 = pneg %p210
      $region42: #{_lambda_.9} parent=11 // pred_check_branch
        %300 = sbr.rel (%p298) target = $region44
      $region43: #{_lambda_.9} parent=11 // pred_region
        _
      $region44: #{_lambda_.9} parent=11 // pred_fallthru
        _
    $region12: #{_lambda_.9} parent=5 // pred_fallthru
      _
    %p301 = scmp.lt.s32.totalorder %s16, 2
    // Predicated region
    $region45: #{_lambda_.9} parent=5 // pred_check
      %p302 = pneg %p301
    $region46: #{_lambda_.9} parent=5 // pred_check_branch
      %304 = sbr.rel (%p302) target = $region48
    $region47: #{_lambda_.9} parent=5 // pred_region
      // Predicated region
      $region49: #{_lambda_.9} parent=47 // pred_check
        %p305 = pneg %p36
      $region50: #{_lambda_.9} parent=47 // pred_check_branch
        %307 = sbr.rel (%p305) target = $region52
      $region51: #{_lambda_.9} parent=47 // pred_region
        %p308 = scmp.lt.s32.totalorder %s16, 1
        %s309 = scalar_select %p308, %s16, 1
        %s310 = smul.addr %s309, 8
        %s311 = smul.addr %s310, 8
        %s312 = scalar_lea.vmem %s0, %s311
      $region52: #{_lambda_.9} parent=47 // pred_fallthru
        _
      // Predicated region
      $region53: #{_lambda_.9} parent=47 // pred_check
        %p313 = pneg %p230
      $region54: #{_lambda_.9} parent=47 // pred_check_branch
        %315 = sbr.rel (%p313) target = $region56
      $region55: #{_lambda_.9} parent=47 // pred_region
        %p316 = scmp.lt.s32.totalorder %s16, 1
        %s317 = scalar_select %p316, %s16, 1
        %s318 = smul.addr %s317, 8
        %s319 = smul.addr %s318, 8
        %s320 = scalar_lea.vmem %s9, %s319
      $region56: #{_lambda_.9} parent=47 // pred_fallthru
        _
    $region48: #{_lambda_.9} parent=5 // pred_fallthru
      _
    %p321 = scmp.le.s32.totalorder 1, %s16
    %p322 = scmp.lt.s32.totalorder %s16, 3
    %p323 = pnand %p321, %p322
    %p324 = pneg %p323
    // Predicated region
    $region57: #{_lambda_.9} parent=5 // pred_check
      _
    $region58: #{_lambda_.9} parent=5 // pred_check_branch
      %326 = sbr.rel (%p323) target = $region60
    $region59: #{_lambda_.9} parent=5 // pred_region
      %s327 = ssub.s32 %s16, 1
      %p328 = scmp.lt.s32.totalorder %s21, 1
      %s329 = scalar_select %p328, %s21, 1
      %s330 = smul.addr %s329, 8
      %s331 = smul.addr %s330, 8
      %s332 = scalar_lea.vmem %s0, %s331
      %p333 = pneg %p42
      %p334 = pneg %p39
      %p335 = pneg %p63
      %p336 = pneg %p60
      %p337 = pneg %p84
      %p338 = pneg %p81
      %p339 = pneg %p105
      %p340 = pneg %p102
      %p341 = pneg %p126
      %p342 = pneg %p123
      %p343 = pneg %p147
      %p344 = pneg %p144
      %p345 = pneg %p168
      %p346 = pneg %p165
      %p347 = pneg %p189
      %p348 = pneg %p186
      %p349 = pneg %p210
      %p350 = pneg %p207
      %p351 = scmp.lt.s32.totalorder %s21, 1
      %s352 = scalar_select %p351, %s21, 1
      %s353 = smul.addr %s352, 8
      %s354 = smul.addr %s353, 8
      %s355 = scalar_lea.vmem %s9, %s354
      %p356 = pneg %p236
      %p357 = pneg %p233
      %p358 = pneg %p262
      %p359 = pneg %p259
      %p360 = scmp.lt.s32.totalorder %s21, 1
      %s361 = scalar_select %p360, %s21, 1
      %s362 = smul.addr %s361, 8
      %s363 = smul.addr %s362, 8
      %s364 = scalar_lea.vmem %s10, %s363
      %p365 = scmp.lt.s32.totalorder %s21, 1
      %s366 = scalar_select %p365, %s21, 1
      %s367 = smul.addr %s366, 8
      %s368 = smul.addr %s367, 8
      %s369 = scalar_lea.vmem %s0, %s368
      %p370 = scmp.lt.s32.totalorder %s21, 1
      %s371 = scalar_select %p370, %s21, 1
      %s372 = smul.addr %s371, 8
      %s373 = smul.addr %s372, 8
      %s374 = scalar_lea.vmem %s9, %s373
      %p375 = scmp.lt.s32.totalorder %s21, 1
      %s376 = scalar_select %p375, %s21, 1
      %s377 = smul.addr %s376, 8
      %s378 = smul.addr %s377, 8
      %s379 = scalar_lea.vmem %s10, %s378
      %vm381 = vcmask 64512
      %382 = vst.msk [vmem:[#allocation2] sm:$0xff] %vm381, 0.0
      %vm383 = vcmask 58368
      %384 = vst.msk [vmem:[#allocation2 + $0x8] sm:$0x3] %vm383, 0.0
      %385 = vst.msk [vmem:[#allocation2 + $0x10] sm:$0xff] %vm381, 0.0
      %386 = vst.msk [vmem:[#allocation2 + $0x18] sm:$0x3] %vm383, 0.0
      %387 = vst.msk [vmem:[#allocation2 + $0x20] sm:$0xff] %vm381, 0.0
      %388 = vst.msk [vmem:[#allocation2 + $0x28] sm:$0x3] %vm383, 0.0
      %389 = vst.msk [vmem:[#allocation2 + $0x30] sm:$0xff] %vm381, 0.0
      %390 = vst.msk [vmem:[#allocation2 + $0x38] sm:$0x3] %vm383, 0.0
      %391 = vst.msk [vmem:[#allocation2 + $0x40] sm:$0xff] %vm381, 0.0
      %392 = vst.msk [vmem:[#allocation2 + $0x48] sm:$0x3] %vm383, 0.0
      %393 = vst.msk [vmem:[#allocation2 + $0x50] sm:$0xff] %vm381, 0.0
      %394 = vst.msk [vmem:[#allocation2 + $0x58] sm:$0x3] %vm383, 0.0
      %395 = vst.msk [vmem:[#allocation2 + $0x60] sm:$0xff] %vm381, 0.0
      %396 = vst.msk [vmem:[#allocation2 + $0x68] sm:$0x3] %vm383, 0.0
      %397 = vst.msk [vmem:[#allocation2 + $0x70] sm:$0xff] %vm381, 0.0
      %398 = vst.msk [vmem:[#allocation2 + $0x78] sm:$0x3] %vm383, 0.0
      %399 = vst.msk [vmem:[#allocation2 + $0x80] sm:$0xff] %vm381, 0.0
      %400 = vst.msk [vmem:[#allocation2 + $0x88] sm:$0x3] %vm383, 0.0
      %401 = vst.msk [vmem:[#allocation2 + $0x90] sm:$0xff] %vm381, 0.0
      %402 = vst.msk [vmem:[#allocation2 + $0x98] sm:$0x3] %vm383, 0.0
      %v403 = vld [vmem:[%s369] sm:$0xff]
      %v404 = vld [vmem:[%s369 + $0x8] sm:$0xff]
      %v405 = vld [vmem:[%s369 + $0x10] sm:$0xff]
      %v406 = vld [vmem:[%s369 + $0x18] sm:$0xff]
      %v407 = vld [vmem:[%s369 + $0x20] sm:$0xff]
      %v408 = vld [vmem:[%s369 + $0x28] sm:$0xff]
      %v409 = vld [vmem:[%s369 + $0x30] sm:$0xff]
      %v410 = vld [vmem:[%s369 + $0x38] sm:$0xff]
      %v411 = vmax.f32 %v403, 0.0
      %v412 = vmax.f32 %v404, 0.0
      %v413 = vmax.f32 %v405, 0.0
      %v414 = vmax.f32 %v406, 0.0
      %v415 = vmax.f32 %v407, 0.0
      %v416 = vmax.f32 %v408, 0.0
      %v417 = vmax.f32 %v409, 0.0
      %v418 = vmax.f32 %v410, 0.0
      %s419 = scalar_lea.vmem [#allocation2], 16
      %420 = vst.msk [vmem:[%s419 + $0x1] sm:$0xff] %vm381, %v411
      %421 = vst.msk [vmem:[%s419 + $0x11] sm:$0xff] %vm381, %v412
      %422 = vst.msk [vmem:[%s419 + $0x21] sm:$0xff] %vm381, %v413
      %423 = vst.msk [vmem:[%s419 + $0x31] sm:$0xff] %vm381, %v414
      %424 = vst.msk [vmem:[%s419 + $0x41] sm:$0xff] %vm381, %v415
      %425 = vst.msk [vmem:[%s419 + $0x51] sm:$0xff] %vm381, %v416
      %426 = vst.msk [vmem:[%s419 + $0x61] sm:$0xff] %vm381, %v417
      %427 = vst.msk [vmem:[%s419 + $0x71] sm:$0xff] %vm381, %v418
      %v428 = vld [vmem:[%s1] sm:$0xff]
      %v429 = vld [vmem:[%s1 + $0x8] sm:$0x1]
      %v430 = vld [vmem:[#allocation2] sm:$0xff]
      %v431 = vld [vmem:[#allocation2 + $0x10] sm:$0xff]
      %v432 = vld [vmem:[#allocation2 + $0x20] sm:$0xff]
      %v433 = vld [vmem:[#allocation2 + $0x30] sm:$0xff]
      %v434 = vld [vmem:[#allocation2 + $0x40] sm:$0xff]
      %v435 = vld [vmem:[#allocation2 + $0x50] sm:$0xff]
      %v436 = vld [vmem:[#allocation2 + $0x60] sm:$0xff]
      %v437 = vld [vmem:[#allocation2 + $0x70] sm:$0xff]
      %v438 = vlaneseq
      %v439 = vshrl.u32 %v438, 7
      %v440 = vsub.s32 0, %v439
      %v441 = vrot.slane %v428, %v440
      %v442 = vmul.f32 %v430, %v441
      %v443 = vmul.f32 %v431, %v441
      %v444 = vmul.f32 %v432, %v441
      %v445 = vmul.f32 %v433, %v441
      %v446 = vmul.f32 %v434, %v441
      %v447 = vmul.f32 %v435, %v441
      %v448 = vmul.f32 %v436, %v441
      %v449 = vmul.f32 %v437, %v441
      %v450 = vadd.f32 %v442, 0.0
      %v451 = vadd.f32 %v443, 0.0
      %v452 = vadd.f32 %v444, 0.0
      %v453 = vadd.f32 %v445, 0.0
      %v454 = vadd.f32 %v446, 0.0
      %v455 = vadd.f32 %v447, 0.0
      %v456 = vadd.f32 %v448, 0.0
      %v457 = vadd.f32 %v449, 0.0
      %v458 = vld [vmem:[#allocation2 + $0x1] sm:$0xff]
      %v459 = vld [vmem:[#allocation2 + $0x11] sm:$0xff]
      %v460 = vld [vmem:[#allocation2 + $0x21] sm:$0xff]
      %v461 = vld [vmem:[#allocation2 + $0x31] sm:$0xff]
      %v462 = vld [vmem:[#allocation2 + $0x41] sm:$0xff]
      %v463 = vld [vmem:[#allocation2 + $0x51] sm:$0xff]
      %v464 = vld [vmem:[#allocation2 + $0x61] sm:$0xff]
      %v465 = vld [vmem:[#allocation2 + $0x71] sm:$0xff]
      %v466 = vlaneseq
      %v467 = vshrl.u32 %v466, 7
      %v468 = vsub.s32 1, %v467
      %v469 = vrot.slane %v428, %v468
      %v470 = vmul.f32 %v458, %v469
      %v471 = vmul.f32 %v459, %v469
      %v472 = vmul.f32 %v460, %v469
      %v473 = vmul.f32 %v461, %v469
      %v474 = vmul.f32 %v462, %v469
      %v475 = vmul.f32 %v463, %v469
      %v476 = vmul.f32 %v464, %v469
      %v477 = vmul.f32 %v465, %v469
      %v478 = vadd.f32 %v450, %v470
      %v479 = vadd.f32 %v451, %v471
      %v480 = vadd.f32 %v452, %v472
      %v481 = vadd.f32 %v453, %v473
      %v482 = vadd.f32 %v454, %v474
      %v483 = vadd.f32 %v455, %v475
      %v484 = vadd.f32 %v456, %v476
      %v485 = vadd.f32 %v457, %v477
      %v486 = vld [vmem:[#allocation2 + $0x2] sm:$0xff]
      %v487 = vld [vmem:[#allocation2 + $0x12] sm:$0xff]
      %v488 = vld [vmem:[#allocation2 + $0x22] sm:$0xff]
      %v489 = vld [vmem:[#allocation2 + $0x32] sm:$0xff]
      %v490 = vld [vmem:[#allocation2 + $0x42] sm:$0xff]
      %v491 = vld [vmem:[#allocation2 + $0x52] sm:$0xff]
      %v492 = vld [vmem:[#allocation2 + $0x62] sm:$0xff]
      %v493 = vld [vmem:[#allocation2 + $0x72] sm:$0xff]
      %v494 = vlaneseq
      %v495 = vshrl.u32 %v494, 7
      %v496 = vsub.s32 2, %v495
      %v497 = vrot.slane %v428, %v496
      %v498 = vmul.f32 %v486, %v497
      %v499 = vmul.f32 %v487, %v497
      %v500 = vmul.f32 %v488, %v497
      %v501 = vmul.f32 %v489, %v497
      %v502 = vmul.f32 %v490, %v497
      %v503 = vmul.f32 %v491, %v497
      %v504 = vmul.f32 %v492, %v497
      %v505 = vmul.f32 %v493, %v497
      %v506 = vadd.f32 %v478, %v498
      %v507 = vadd.f32 %v479, %v499
      %v508 = vadd.f32 %v480, %v500
      %v509 = vadd.f32 %v481, %v501
      %v510 = vadd.f32 %v482, %v502
      %v511 = vadd.f32 %v483, %v503
      %v512 = vadd.f32 %v484, %v504
      %v513 = vadd.f32 %v485, %v505
      %v514 = vld [vmem:[%s419] sm:$0xff]
      %v515 = vld [vmem:[%s419 + $0x10] sm:$0xff]
      %v516 = vld [vmem:[%s419 + $0x20] sm:$0xff]
      %v517 = vld [vmem:[%s419 + $0x30] sm:$0xff]
      %v518 = vld [vmem:[%s419 + $0x40] sm:$0xff]
      %v519 = vld [vmem:[%s419 + $0x50] sm:$0xff]
      %v520 = vld [vmem:[%s419 + $0x60] sm:$0xff]
      %v521 = vld [vmem:[%s419 + $0x70] sm:$0xff]
      %v522 = vlaneseq
      %v523 = vshrl.u32 %v522, 7
      %v524 = vsub.s32 3, %v523
      %v525 = vrot.slane %v428, %v524
      %v526 = vmul.f32 %v514, %v525
      %v527 = vmul.f32 %v515, %v525
      %v528 = vmul.f32 %v516, %v525
      %v529 = vmul.f32 %v517, %v525
      %v530 = vmul.f32 %v518, %v525
      %v531 = vmul.f32 %v519, %v525
      %v532 = vmul.f32 %v520, %v525
      %v533 = vmul.f32 %v521, %v525
      %v534 = vadd.f32 %v506, %v526
      %v535 = vadd.f32 %v507, %v527
      %v536 = vadd.f32 %v508, %v528
      %v537 = vadd.f32 %v509, %v529
      %v538 = vadd.f32 %v510, %v530
      %v539 = vadd.f32 %v511, %v531
      %v540 = vadd.f32 %v512, %v532
      %v541 = vadd.f32 %v513, %v533
      %v542 = vld [vmem:[%s419 + $0x1] sm:$0xff]
      %v543 = vld [vmem:[%s419 + $0x11] sm:$0xff]
      %v544 = vld [vmem:[%s419 + $0x21] sm:$0xff]
      %v545 = vld [vmem:[%s419 + $0x31] sm:$0xff]
      %v546 = vld [vmem:[%s419 + $0x41] sm:$0xff]
      %v547 = vld [vmem:[%s419 + $0x51] sm:$0xff]
      %v548 = vld [vmem:[%s419 + $0x61] sm:$0xff]
      %v549 = vld [vmem:[%s419 + $0x71] sm:$0xff]
      %v550 = vlaneseq
      %v551 = vshrl.u32 %v550, 7
      %v552 = vsub.s32 4, %v551
      %v553 = vrot.slane %v428, %v552
      %v554 = vmul.f32 %v542, %v553
      %v555 = vmul.f32 %v543, %v553
      %v556 = vmul.f32 %v544, %v553
      %v557 = vmul.f32 %v545, %v553
      %v558 = vmul.f32 %v546, %v553
      %v559 = vmul.f32 %v547, %v553
      %v560 = vmul.f32 %v548, %v553
      %v561 = vmul.f32 %v549, %v553
      %v562 = vadd.f32 %v534, %v554
      %v563 = vadd.f32 %v535, %v555
      %v564 = vadd.f32 %v536, %v556
      %v565 = vadd.f32 %v537, %v557
      %v566 = vadd.f32 %v538, %v558
      %v567 = vadd.f32 %v539, %v559
      %v568 = vadd.f32 %v540, %v560
      %v569 = vadd.f32 %v541, %v561
      %v570 = vld [vmem:[%s419 + $0x2] sm:$0xff]
      %v571 = vld [vmem:[%s419 + $0x12] sm:$0xff]
      %v572 = vld [vmem:[%s419 + $0x22] sm:$0xff]
      %v573 = vld [vmem:[%s419 + $0x32] sm:$0xff]
      %v574 = vld [vmem:[%s419 + $0x42] sm:$0xff]
      %v575 = vld [vmem:[%s419 + $0x52] sm:$0xff]
      %v576 = vld [vmem:[%s419 + $0x62] sm:$0xff]
      %v577 = vld [vmem:[%s419 + $0x72] sm:$0xff]
      %v578 = vlaneseq
      %v579 = vshrl.u32 %v578, 7
      %v580 = vsub.s32 5, %v579
      %v581 = vrot.slane %v428, %v580
      %v582 = vmul.f32 %v570, %v581
      %v583 = vmul.f32 %v571, %v581
      %v584 = vmul.f32 %v572, %v581
      %v585 = vmul.f32 %v573, %v581
      %v586 = vmul.f32 %v574, %v581
      %v587 = vmul.f32 %v575, %v581
      %v588 = vmul.f32 %v576, %v581
      %v589 = vmul.f32 %v577, %v581
      %v590 = vadd.f32 %v562, %v582
      %v591 = vadd.f32 %v563, %v583
      %v592 = vadd.f32 %v564, %v584
      %v593 = vadd.f32 %v565, %v585
      %v594 = vadd.f32 %v566, %v586
      %v595 = vadd.f32 %v567, %v587
      %v596 = vadd.f32 %v568, %v588
      %v597 = vadd.f32 %v569, %v589
      %s598 = scalar_lea.vmem [#allocation2], 32
      %v599 = vld [vmem:[%s598] sm:$0xff]
      %v600 = vld [vmem:[%s598 + $0x10] sm:$0xff]
      %v601 = vld [vmem:[%s598 + $0x20] sm:$0xff]
      %v602 = vld [vmem:[%s598 + $0x30] sm:$0xff]
      %v603 = vld [vmem:[%s598 + $0x40] sm:$0xff]
      %v604 = vld [vmem:[%s598 + $0x50] sm:$0xff]
      %v605 = vld [vmem:[%s598 + $0x60] sm:$0xff]
      %v606 = vld [vmem:[%s598 + $0x70] sm:$0xff]
      %v607 = vlaneseq
      %v608 = vshrl.u32 %v607, 7
      %v609 = vsub.s32 6, %v608
      %v610 = vrot.slane %v428, %v609
      %v611 = vmul.f32 %v599, %v610
      %v612 = vmul.f32 %v600, %v610
      %v613 = vmul.f32 %v601, %v610
      %v614 = vmul.f32 %v602, %v610
      %v615 = vmul.f32 %v603, %v610
      %v616 = vmul.f32 %v604, %v610
      %v617 = vmul.f32 %v605, %v610
      %v618 = vmul.f32 %v606, %v610
      %v619 = vadd.f32 %v590, %v611
      %v620 = vadd.f32 %v591, %v612
      %v621 = vadd.f32 %v592, %v613
      %v622 = vadd.f32 %v593, %v614
      %v623 = vadd.f32 %v594, %v615
      %v624 = vadd.f32 %v595, %v616
      %v625 = vadd.f32 %v596, %v617
      %v626 = vadd.f32 %v597, %v618
      %v627 = vld [vmem:[%s598 + $0x1] sm:$0xff]
      %v628 = vld [vmem:[%s598 + $0x11] sm:$0xff]
      %v629 = vld [vmem:[%s598 + $0x21] sm:$0xff]
      %v630 = vld [vmem:[%s598 + $0x31] sm:$0xff]
      %v631 = vld [vmem:[%s598 + $0x41] sm:$0xff]
      %v632 = vld [vmem:[%s598 + $0x51] sm:$0xff]
      %v633 = vld [vmem:[%s598 + $0x61] sm:$0xff]
      %v634 = vld [vmem:[%s598 + $0x71] sm:$0xff]
      %v635 = vlaneseq
      %v636 = vshrl.u32 %v635, 7
      %v637 = vsub.s32 7, %v636
      %v638 = vrot.slane %v428, %v637
      %v639 = vmul.f32 %v627, %v638
      %v640 = vmul.f32 %v628, %v638
      %v641 = vmul.f32 %v629, %v638
      %v642 = vmul.f32 %v630, %v638
      %v643 = vmul.f32 %v631, %v638
      %v644 = vmul.f32 %v632, %v638
      %v645 = vmul.f32 %v633, %v638
      %v646 = vmul.f32 %v634, %v638
      %v647 = vadd.f32 %v619, %v639
      %v648 = vadd.f32 %v620, %v640
      %v649 = vadd.f32 %v621, %v641
      %v650 = vadd.f32 %v622, %v642
      %v651 = vadd.f32 %v623, %v643
      %v652 = vadd.f32 %v624, %v644
      %v653 = vadd.f32 %v625, %v645
      %v654 = vadd.f32 %v626, %v646
      %v655 = vld [vmem:[%s598 + $0x2] sm:$0xff]
      %v656 = vld [vmem:[%s598 + $0x12] sm:$0xff]
      %v657 = vld [vmem:[%s598 + $0x22] sm:$0xff]
      %v658 = vld [vmem:[%s598 + $0x32] sm:$0xff]
      %v659 = vld [vmem:[%s598 + $0x42] sm:$0xff]
      %v660 = vld [vmem:[%s598 + $0x52] sm:$0xff]
      %v661 = vld [vmem:[%s598 + $0x62] sm:$0xff]
      %v662 = vld [vmem:[%s598 + $0x72] sm:$0xff]
      %v663 = vlaneseq
      %v664 = vshrl.u32 %v663, 7
      %v665 = vsub.s32 0, %v664
      %v666 = vrot.slane %v429, %v665
      %v667 = vmul.f32 %v655, %v666
      %v668 = vmul.f32 %v656, %v666
      %v669 = vmul.f32 %v657, %v666
      %v670 = vmul.f32 %v658, %v666
      %v671 = vmul.f32 %v659, %v666
      %v672 = vmul.f32 %v660, %v666
      %v673 = vmul.f32 %v661, %v666
      %v674 = vmul.f32 %v662, %v666
      %v675 = vadd.f32 %v647, %v667
      %v676 = vadd.f32 %v648, %v668
      %v677 = vadd.f32 %v649, %v669
      %v678 = vadd.f32 %v650, %v670
      %v679 = vadd.f32 %v651, %v671
      %v680 = vadd.f32 %v652, %v672
      %v681 = vadd.f32 %v653, %v673
      %v682 = vadd.f32 %v654, %v674
      %v683 = vpack.c.bf16 %v676, %v675
      %v684 = vpack.c.bf16 %v678, %v677
      %v685 = vpack.c.bf16 %v680, %v679
      %v686 = vpack.c.bf16 %v682, %v681
      %v687 = vld [vmem:[%s2] sm:$0xf]
      %v689 = vsel %vm381, %v683, 0
      %v692 = vsel %vm381, %v684, 0
      %v695 = vsel %vm381, %v685, 0
      %v698 = vsel %vm381, %v686, 0
      %vm700 = vcmask 1043456
      %v702 = vsel %vm700, %v687, 0
      %704 = vmatprep.subr.bf16.mxu0 0
      %705 = vmatpush1.bf16.msra.mxu0 %v702
      %706 = vmatprep.subr.bf16.mxu0 0
      %707 = vmatpush1.bf16.msra.mxu0 0
      %708 = vmatprep.subr.bf16.mxu0 0
      %709 = vmatpush1.bf16.msra.mxu0 0
      %710 = vmatprep.subr.bf16.mxu0 0
      %711 = vmatpush1.bf16.msra.mxu0 0
      %712 = vmatprep.subr.bf16.mxu0 0
      %713 = vmatpush1.bf16.msra.mxu0 0
      %714 = vmatprep.subr.bf16.mxu0 0
      %715 = vmatpush1.bf16.msra.mxu0 0
      %716 = vmatprep.subr.bf16.mxu0 0
      %717 = vmatpush1.bf16.msra.mxu0 0
      %718 = vmatprep.subr.bf16.mxu0 0
      %719 = vmatpush1.bf16.msra.mxu0 0
      %720 = vmatprep.subr.bf16.mxu0 0
      %721 = vmatpush1.bf16.msra.mxu0 0
      %722 = vmatprep.subr.bf16.mxu0 0
      %723 = vmatpush1.bf16.msra.mxu0 0
      %724 = vmatprep.subr.bf16.mxu0 0
      %725 = vmatpush1.bf16.msra.mxu0 0
      %726 = vmatprep.subr.bf16.mxu0 0
      %727 = vmatpush1.bf16.msra.mxu0 0
      %728 = vmatprep.subr.bf16.mxu0 0
      %729 = vmatpush1.bf16.msra.mxu0 0
      %730 = vmatprep.subr.bf16.mxu0 0
      %731 = vmatpush1.bf16.msra.mxu0 0
      %732 = vmatprep.subr.bf16.mxu0 0
      %733 = vmatpush1.bf16.msra.mxu0 0
      %734 = vmatprep.subr.bf16.mxu0 0
      %735 = vmatpush1.bf16.msra.mxu0 0
      %736 = vmatprep.mubr.bf16.mxu0 0
      %737 = vmatmul.mubr.bf16.gmra.mrb[0].mxu0 %v689
      %v738 = vpop.f32.mrb[0].mxu0
      %v739 = vadd.f32 0.0, %v738
      %v740 = vpop.f32.mrb[0].mxu0
      %v741 = vpop.f32.mrb[0].mxu0
      %v742 = vadd.f32 0.0, %v741
      %v743 = vpop.f32.mrb[0].mxu0
      %744 = vmatprep.mubr.bf16.mxu0 0
      %745 = vmatmul.mubr.bf16.gmra.mrb[0].mxu0 %v692
      %v746 = vpop.f32.mrb[0].mxu0
      %v747 = vadd.f32 0.0, %v746
      %v748 = vpop.f32.mrb[0].mxu0
      %v749 = vpop.f32.mrb[0].mxu0
      %v750 = vadd.f32 0.0, %v749
      %v751 = vpop.f32.mrb[0].mxu0
      %752 = vmatprep.mubr.bf16.mxu0 0
      %753 = vmatmul.mubr.bf16.gmra.mrb[0].mxu0 %v695
      %v754 = vpop.f32.mrb[0].mxu0
      %v755 = vadd.f32 0.0, %v754
      %v756 = vpop.f32.mrb[0].mxu0
      %v757 = vpop.f32.mrb[0].mxu0
      %v758 = vadd.f32 0.0, %v757
      %v759 = vpop.f32.mrb[0].mxu0
      %760 = vmatprep.mubr.bf16.mxu0 0
      %761 = vmatmul.mubr.bf16.gmra.mrb[0].mxu0 %v698
      %v762 = vpop.f32.mrb[0].mxu0
      %v763 = vadd.f32 0.0, %v762
      %v764 = vpop.f32.mrb[0].mxu0
      %v765 = vpop.f32.mrb[0].mxu0
      %v766 = vadd.f32 0.0, %v765
      %v767 = vpop.f32.mrb[0].mxu0
      %768 = vdwg.mxu0
      %v769 = vld [vmem:[%s3] sm:$0x1]
      %v771 = vlaneseq
      %v772 = vshrl.u32 %v771, 7
      %v773 = vsub.s32 0, %v772
      %v774 = vrot.slane %v769, %v773
      %v776 = vmul.f32 %v739, %v774
      %v777 = vmul.f32 %v742, %v774
      %v778 = vmul.f32 %v747, %v774
      %v779 = vmul.f32 %v750, %v774
      %v780 = vmul.f32 %v755, %v774
      %v781 = vmul.f32 %v758, %v774
      %v782 = vmul.f32 %v763, %v774
      %v783 = vmul.f32 %v766, %v774
      %v784 = vld [vmem:[%s4] sm:$0x1]
      %v786 = vlaneseq
      %v787 = vshrl.u32 %v786, 7
      %v788 = vsub.s32 0, %v787
      %v789 = vrot.slane %v784, %v788
      %v791 = vadd.f32 %v776, %v789
      %v792 = vadd.f32 %v777, %v789
      %v793 = vadd.f32 %v778, %v789
      %v794 = vadd.f32 %v779, %v789
      %v795 = vadd.f32 %v780, %v789
      %v796 = vadd.f32 %v781, %v789
      %v797 = vadd.f32 %v782, %v789
      %v798 = vadd.f32 %v783, %v789
      %799 = vst.msk [vmem:[#allocation3] sm:$0xff] %vm381, 0.0
      %800 = vst.msk [vmem:[#allocation3 + $0x8] sm:$0x3] %vm383, 0.0
      %801 = vst.msk [vmem:[#allocation3 + $0x10] sm:$0xff] %vm381, 0.0
      %802 = vst.msk [vmem:[#allocation3 + $0x18] sm:$0x3] %vm383, 0.0
      %803 = vst.msk [vmem:[#allocation3 + $0x20] sm:$0xff] %vm381, 0.0
      %804 = vst.msk [vmem:[#allocation3 + $0x28] sm:$0x3] %vm383, 0.0
      %805 = vst.msk [vmem:[#allocation3 + $0x30] sm:$0xff] %vm381, 0.0
      %806 = vst.msk [vmem:[#allocation3 + $0x38] sm:$0x3] %vm383, 0.0
      %807 = vst.msk [vmem:[#allocation3 + $0x40] sm:$0xff] %vm381, 0.0
      %808 = vst.msk [vmem:[#allocation3 + $0x48] sm:$0x3] %vm383, 0.0
      %809 = vst.msk [vmem:[#allocation3 + $0x50] sm:$0xff] %vm381, 0.0
      %810 = vst.msk [vmem:[#allocation3 + $0x58] sm:$0x3] %vm383, 0.0
      %811 = vst.msk [vmem:[#allocation3 + $0x60] sm:$0xff] %vm381, 0.0
      %812 = vst.msk [vmem:[#allocation3 + $0x68] sm:$0x3] %vm383, 0.0
      %813 = vst.msk [vmem:[#allocation3 + $0x70] sm:$0xff] %vm381, 0.0
      %814 = vst.msk [vmem:[#allocation3 + $0x78] sm:$0x3] %vm383, 0.0
      %815 = vst.msk [vmem:[#allocation3 + $0x80] sm:$0xff] %vm381, 0.0
      %816 = vst.msk [vmem:[#allocation3 + $0x88] sm:$0x3] %vm383, 0.0
      %817 = vst.msk [vmem:[#allocation3 + $0x90] sm:$0xff] %vm381, 0.0
      %818 = vst.msk [vmem:[#allocation3 + $0x98] sm:$0x3] %vm383, 0.0
      %v819 = vmax.f32 %v791, 0.0
      %v820 = vmax.f32 %v792, 0.0
      %v821 = vmax.f32 %v793, 0.0
      %v822 = vmax.f32 %v794, 0.0
      %v823 = vmax.f32 %v795, 0.0
      %v824 = vmax.f32 %v796, 0.0
      %v825 = vmax.f32 %v797, 0.0
      %v826 = vmax.f32 %v798, 0.0
      %s827 = scalar_lea.vmem [#allocation3], 16
      %828 = vst.msk [vmem:[%s827 + $0x1] sm:$0xff] %vm381, %v819
      %829 = vst.msk [vmem:[%s827 + $0x11] sm:$0xff] %vm381, %v820
      %830 = vst.msk [vmem:[%s827 + $0x21] sm:$0xff] %vm381, %v821
      %831 = vst.msk [vmem:[%s827 + $0x31] sm:$0xff] %vm381, %v822
      %832 = vst.msk [vmem:[%s827 + $0x41] sm:$0xff] %vm381, %v823
      %833 = vst.msk [vmem:[%s827 + $0x51] sm:$0xff] %vm381, %v824
      %834 = vst.msk [vmem:[%s827 + $0x61] sm:$0xff] %vm381, %v825
      %835 = vst.msk [vmem:[%s827 + $0x71] sm:$0xff] %vm381, %v826
      %v836 = vld [vmem:[%s5] sm:$0xff]
      %v837 = vld [vmem:[%s5 + $0x8] sm:$0x1]
      %v838 = vld [vmem:[#allocation3] sm:$0xff]
      %v839 = vld [vmem:[#allocation3 + $0x10] sm:$0xff]
      %v840 = vld [vmem:[#allocation3 + $0x20] sm:$0xff]
      %v841 = vld [vmem:[#allocation3 + $0x30] sm:$0xff]
      %v842 = vld [vmem:[#allocation3 + $0x40] sm:$0xff]
      %v843 = vld [vmem:[#allocation3 + $0x50] sm:$0xff]
      %v844 = vld [vmem:[#allocation3 + $0x60] sm:$0xff]
      %v845 = vld [vmem:[#allocation3 + $0x70] sm:$0xff]
      %v846 = vlaneseq
      %v847 = vshrl.u32 %v846, 7
      %v848 = vsub.s32 0, %v847
      %v849 = vrot.slane %v836, %v848
      %v850 = vmul.f32 %v838, %v849
      %v851 = vmul.f32 %v839, %v849
      %v852 = vmul.f32 %v840, %v849
      %v853 = vmul.f32 %v841, %v849
      %v854 = vmul.f32 %v842, %v849
      %v855 = vmul.f32 %v843, %v849
      %v856 = vmul.f32 %v844, %v849
      %v857 = vmul.f32 %v845, %v849
      %v858 = vadd.f32 %v850, 0.0
      %v859 = vadd.f32 %v851, 0.0
      %v860 = vadd.f32 %v852, 0.0
      %v861 = vadd.f32 %v853, 0.0
      %v862 = vadd.f32 %v854, 0.0
      %v863 = vadd.f32 %v855, 0.0
      %v864 = vadd.f32 %v856, 0.0
      %v865 = vadd.f32 %v857, 0.0
      %v866 = vld [vmem:[#allocation3 + $0x1] sm:$0xff]
      %v867 = vld [vmem:[#allocation3 + $0x11] sm:$0xff]
      %v868 = vld [vmem:[#allocation3 + $0x21] sm:$0xff]
      %v869 = vld [vmem:[#allocation3 + $0x31] sm:$0xff]
      %v870 = vld [vmem:[#allocation3 + $0x41] sm:$0xff]
      %v871 = vld [vmem:[#allocation3 + $0x51] sm:$0xff]
      %v872 = vld [vmem:[#allocation3 + $0x61] sm:$0xff]
      %v873 = vld [vmem:[#allocation3 + $0x71] sm:$0xff]
      %v874 = vlaneseq
      %v875 = vshrl.u32 %v874, 7
      %v876 = vsub.s32 1, %v875
      %v877 = vrot.slane %v836, %v876
      %v878 = vmul.f32 %v866, %v877
      %v879 = vmul.f32 %v867, %v877
      %v880 = vmul.f32 %v868, %v877
      %v881 = vmul.f32 %v869, %v877
      %v882 = vmul.f32 %v870, %v877
      %v883 = vmul.f32 %v871, %v877
      %v884 = vmul.f32 %v872, %v877
      %v885 = vmul.f32 %v873, %v877
      %v886 = vadd.f32 %v858, %v878
      %v887 = vadd.f32 %v859, %v879
      %v888 = vadd.f32 %v860, %v880
      %v889 = vadd.f32 %v861, %v881
      %v890 = vadd.f32 %v862, %v882
      %v891 = vadd.f32 %v863, %v883
      %v892 = vadd.f32 %v864, %v884
      %v893 = vadd.f32 %v865, %v885
      %v894 = vld [vmem:[#allocation3 + $0x2] sm:$0xff]
      %v895 = vld [vmem:[#allocation3 + $0x12] sm:$0xff]
      %v896 = vld [vmem:[#allocation3 + $0x22] sm:$0xff]
      %v897 = vld [vmem:[#allocation3 + $0x32] sm:$0xff]
      %v898 = vld [vmem:[#allocation3 + $0x42] sm:$0xff]
      %v899 = vld [vmem:[#allocation3 + $0x52] sm:$0xff]
      %v900 = vld [vmem:[#allocation3 + $0x62] sm:$0xff]
      %v901 = vld [vmem:[#allocation3 + $0x72] sm:$0xff]
      %v902 = vlaneseq
      %v903 = vshrl.u32 %v902, 7
      %v904 = vsub.s32 2, %v903
      %v905 = vrot.slane %v836, %v904
      %v906 = vmul.f32 %v894, %v905
      %v907 = vmul.f32 %v895, %v905
      %v908 = vmul.f32 %v896, %v905
      %v909 = vmul.f32 %v897, %v905
      %v910 = vmul.f32 %v898, %v905
      %v911 = vmul.f32 %v899, %v905
      %v912 = vmul.f32 %v900, %v905
      %v913 = vmul.f32 %v901, %v905
      %v914 = vadd.f32 %v886, %v906
      %v915 = vadd.f32 %v887, %v907
      %v916 = vadd.f32 %v888, %v908
      %v917 = vadd.f32 %v889, %v909
      %v918 = vadd.f32 %v890, %v910
      %v919 = vadd.f32 %v891, %v911
      %v920 = vadd.f32 %v892, %v912
      %v921 = vadd.f32 %v893, %v913
      %v922 = vld [vmem:[%s827] sm:$0xff]
      %v923 = vld [vmem:[%s827 + $0x10] sm:$0xff]
      %v924 = vld [vmem:[%s827 + $0x20] sm:$0xff]
      %v925 = vld [vmem:[%s827 + $0x30] sm:$0xff]
      %v926 = vld [vmem:[%s827 + $0x40] sm:$0xff]
      %v927 = vld [vmem:[%s827 + $0x50] sm:$0xff]
      %v928 = vld [vmem:[%s827 + $0x60] sm:$0xff]
      %v929 = vld [vmem:[%s827 + $0x70] sm:$0xff]
      %v930 = vlaneseq
      %v931 = vshrl.u32 %v930, 7
      %v932 = vsub.s32 3, %v931
      %v933 = vrot.slane %v836, %v932
      %v934 = vmul.f32 %v922, %v933
      %v935 = vmul.f32 %v923, %v933
      %v936 = vmul.f32 %v924, %v933
      %v937 = vmul.f32 %v925, %v933
      %v938 = vmul.f32 %v926, %v933
      %v939 = vmul.f32 %v927, %v933
      %v940 = vmul.f32 %v928, %v933
      %v941 = vmul.f32 %v929, %v933
      %v942 = vadd.f32 %v914, %v934
      %v943 = vadd.f32 %v915, %v935
      %v944 = vadd.f32 %v916, %v936
      %v945 = vadd.f32 %v917, %v937
      %v946 = vadd.f32 %v918, %v938
      %v947 = vadd.f32 %v919, %v939
      %v948 = vadd.f32 %v920, %v940
      %v949 = vadd.f32 %v921, %v941
      %v950 = vld [vmem:[%s827 + $0x1] sm:$0xff]
      %v951 = vld [vmem:[%s827 + $0x11] sm:$0xff]
      %v952 = vld [vmem:[%s827 + $0x21] sm:$0xff]
      %v953 = vld [vmem:[%s827 + $0x31] sm:$0xff]
      %v954 = vld [vmem:[%s827 + $0x41] sm:$0xff]
      %v955 = vld [vmem:[%s827 + $0x51] sm:$0xff]
      %v956 = vld [vmem:[%s827 + $0x61] sm:$0xff]
      %v957 = vld [vmem:[%s827 + $0x71] sm:$0xff]
      %v958 = vlaneseq
      %v959 = vshrl.u32 %v958, 7
      %v960 = vsub.s32 4, %v959
      %v961 = vrot.slane %v836, %v960
      %v962 = vmul.f32 %v950, %v961
      %v963 = vmul.f32 %v951, %v961
      %v964 = vmul.f32 %v952, %v961
      %v965 = vmul.f32 %v953, %v961
      %v966 = vmul.f32 %v954, %v961
      %v967 = vmul.f32 %v955, %v961
      %v968 = vmul.f32 %v956, %v961
      %v969 = vmul.f32 %v957, %v961
      %v970 = vadd.f32 %v942, %v962
      %v971 = vadd.f32 %v943, %v963
      %v972 = vadd.f32 %v944, %v964
      %v973 = vadd.f32 %v945, %v965
      %v974 = vadd.f32 %v946, %v966
      %v975 = vadd.f32 %v947, %v967
      %v976 = vadd.f32 %v948, %v968
      %v977 = vadd.f32 %v949, %v969
      %v978 = vld [vmem:[%s827 + $0x2] sm:$0xff]
      %v979 = vld [vmem:[%s827 + $0x12] sm:$0xff]
      %v980 = vld [vmem:[%s827 + $0x22] sm:$0xff]
      %v981 = vld [vmem:[%s827 + $0x32] sm:$0xff]
      %v982 = vld [vmem:[%s827 + $0x42] sm:$0xff]
      %v983 = vld [vmem:[%s827 + $0x52] sm:$0xff]
      %v984 = vld [vmem:[%s827 + $0x62] sm:$0xff]
      %v985 = vld [vmem:[%s827 + $0x72] sm:$0xff]
      %v986 = vlaneseq
      %v987 = vshrl.u32 %v986, 7
      %v988 = vsub.s32 5, %v987
      %v989 = vrot.slane %v836, %v988
      %v990 = vmul.f32 %v978, %v989
      %v991 = vmul.f32 %v979, %v989
      %v992 = vmul.f32 %v980, %v989
      %v993 = vmul.f32 %v981, %v989
      %v994 = vmul.f32 %v982, %v989
      %v995 = vmul.f32 %v983, %v989
      %v996 = vmul.f32 %v984, %v989
      %v997 = vmul.f32 %v985, %v989
      %v998 = vadd.f32 %v970, %v990
      %v999 = vadd.f32 %v971, %v991
      %v1000 = vadd.f32 %v972, %v992
      %v1001 = vadd.f32 %v973, %v993
      %v1002 = vadd.f32 %v974, %v994
      %v1003 = vadd.f32 %v975, %v995
      %v1004 = vadd.f32 %v976, %v996
      %v1005 = vadd.f32 %v977, %v997
      %s1006 = scalar_lea.vmem [#allocation3], 32
      %v1007 = vld [vmem:[%s1006] sm:$0xff]
      %v1008 = vld [vmem:[%s1006 + $0x10] sm:$0xff]
      %v1009 = vld [vmem:[%s1006 + $0x20] sm:$0xff]
      %v1010 = vld [vmem:[%s1006 + $0x30] sm:$0xff]
      %v1011 = vld [vmem:[%s1006 + $0x40] sm:$0xff]
      %v1012 = vld [vmem:[%s1006 + $0x50] sm:$0xff]
      %v1013 = vld [vmem:[%s1006 + $0x60] sm:$0xff]
      %v1014 = vld [vmem:[%s1006 + $0x70] sm:$0xff]
      %v1015 = vlaneseq
      %v1016 = vshrl.u32 %v1015, 7
      %v1017 = vsub.s32 6, %v1016
      %v1018 = vrot.slane %v836, %v1017
      %v1019 = vmul.f32 %v1007, %v1018
      %v1020 = vmul.f32 %v1008, %v1018
      %v1021 = vmul.f32 %v1009, %v1018
      %v1022 = vmul.f32 %v1010, %v1018
      %v1023 = vmul.f32 %v1011, %v1018
      %v1024 = vmul.f32 %v1012, %v1018
      %v1025 = vmul.f32 %v1013, %v1018
      %v1026 = vmul.f32 %v1014, %v1018
      %v1027 = vadd.f32 %v998, %v1019
      %v1028 = vadd.f32 %v999, %v1020
      %v1029 = vadd.f32 %v1000, %v1021
      %v1030 = vadd.f32 %v1001, %v1022
      %v1031 = vadd.f32 %v1002, %v1023
      %v1032 = vadd.f32 %v1003, %v1024
      %v1033 = vadd.f32 %v1004, %v1025
      %v1034 = vadd.f32 %v1005, %v1026
      %v1035 = vld [vmem:[%s1006 + $0x1] sm:$0xff]
      %v1036 = vld [vmem:[%s1006 + $0x11] sm:$0xff]
      %v1037 = vld [vmem:[%s1006 + $0x21] sm:$0xff]
      %v1038 = vld [vmem:[%s1006 + $0x31] sm:$0xff]
      %v1039 = vld [vmem:[%s1006 + $0x41] sm:$0xff]
      %v1040 = vld [vmem:[%s1006 + $0x51] sm:$0xff]
      %v1041 = vld [vmem:[%s1006 + $0x61] sm:$0xff]
      %v1042 = vld [vmem:[%s1006 + $0x71] sm:$0xff]
      %v1043 = vlaneseq
      %v1044 = vshrl.u32 %v1043, 7
      %v1045 = vsub.s32 7, %v1044
      %v1046 = vrot.slane %v836, %v1045
      %v1047 = vmul.f32 %v1035, %v1046
      %v1048 = vmul.f32 %v1036, %v1046
      %v1049 = vmul.f32 %v1037, %v1046
      %v1050 = vmul.f32 %v1038, %v1046
      %v1051 = vmul.f32 %v1039, %v1046
      %v1052 = vmul.f32 %v1040, %v1046
      %v1053 = vmul.f32 %v1041, %v1046
      %v1054 = vmul.f32 %v1042, %v1046
      %v1055 = vadd.f32 %v1027, %v1047
      %v1056 = vadd.f32 %v1028, %v1048
      %v1057 = vadd.f32 %v1029, %v1049
      %v1058 = vadd.f32 %v1030, %v1050
      %v1059 = vadd.f32 %v1031, %v1051
      %v1060 = vadd.f32 %v1032, %v1052
      %v1061 = vadd.f32 %v1033, %v1053
      %v1062 = vadd.f32 %v1034, %v1054
      %v1063 = vld [vmem:[%s1006 + $0x2] sm:$0xff]
      %v1064 = vld [vmem:[%s1006 + $0x12] sm:$0xff]
      %v1065 = vld [vmem:[%s1006 + $0x22] sm:$0xff]
      %v1066 = vld [vmem:[%s1006 + $0x32] sm:$0xff]
      %v1067 = vld [vmem:[%s1006 + $0x42] sm:$0xff]
      %v1068 = vld [vmem:[%s1006 + $0x52] sm:$0xff]
      %v1069 = vld [vmem:[%s1006 + $0x62] sm:$0xff]
      %v1070 = vld [vmem:[%s1006 + $0x72] sm:$0xff]
      %v1071 = vlaneseq
      %v1072 = vshrl.u32 %v1071, 7
      %v1073 = vsub.s32 0, %v1072
      %v1074 = vrot.slane %v837, %v1073
      %v1075 = vmul.f32 %v1063, %v1074
      %v1076 = vmul.f32 %v1064, %v1074
      %v1077 = vmul.f32 %v1065, %v1074
      %v1078 = vmul.f32 %v1066, %v1074
      %v1079 = vmul.f32 %v1067, %v1074
      %v1080 = vmul.f32 %v1068, %v1074
      %v1081 = vmul.f32 %v1069, %v1074
      %v1082 = vmul.f32 %v1070, %v1074
      %v1083 = vadd.f32 %v1055, %v1075
      %v1084 = vadd.f32 %v1056, %v1076
      %v1085 = vadd.f32 %v1057, %v1077
      %v1086 = vadd.f32 %v1058, %v1078
      %v1087 = vadd.f32 %v1059, %v1079
      %v1088 = vadd.f32 %v1060, %v1080
      %v1089 = vadd.f32 %v1061, %v1081
      %v1090 = vadd.f32 %v1062, %v1082
      %v1091 = vpack.c.bf16 %v1084, %v1083
      %v1092 = vpack.c.bf16 %v1086, %v1085
      %v1093 = vpack.c.bf16 %v1088, %v1087
      %v1094 = vpack.c.bf16 %v1090, %v1089
      %v1095 = vld [vmem:[%s6] sm:$0xf]
      %v1097 = vsel %vm381, %v1091, 0
      %v1100 = vsel %vm381, %v1092, 0
      %v1103 = vsel %vm381, %v1093, 0
      %v1106 = vsel %vm381, %v1094, 0
      %v1109 = vsel %vm700, %v1095, 0
      %1111 = vmatprep.subr.bf16.mxu0 0
      %1112 = vmatpush1.bf16.msra.mxu0 %v1109
      %1113 = vmatprep.subr.bf16.mxu0 0
      %1114 = vmatpush1.bf16.msra.mxu0 0
      %1115 = vmatprep.subr.bf16.mxu0 0
      %1116 = vmatpush1.bf16.msra.mxu0 0
      %1117 = vmatprep.subr.bf16.mxu0 0
      %1118 = vmatpush1.bf16.msra.mxu0 0
      %1119 = vmatprep.subr.bf16.mxu0 0
      %1120 = vmatpush1.bf16.msra.mxu0 0
      %1121 = vmatprep.subr.bf16.mxu0 0
      %1122 = vmatpush1.bf16.msra.mxu0 0
      %1123 = vmatprep.subr.bf16.mxu0 0
      %1124 = vmatpush1.bf16.msra.mxu0 0
      %1125 = vmatprep.subr.bf16.mxu0 0
      %1126 = vmatpush1.bf16.msra.mxu0 0
      %1127 = vmatprep.subr.bf16.mxu0 0
      %1128 = vmatpush1.bf16.msra.mxu0 0
      %1129 = vmatprep.subr.bf16.mxu0 0
      %1130 = vmatpush1.bf16.msra.mxu0 0
      %1131 = vmatprep.subr.bf16.mxu0 0
      %1132 = vmatpush1.bf16.msra.mxu0 0
      %1133 = vmatprep.subr.bf16.mxu0 0
      %1134 = vmatpush1.bf16.msra.mxu0 0
      %1135 = vmatprep.subr.bf16.mxu0 0
      %1136 = vmatpush1.bf16.msra.mxu0 0
      %1137 = vmatprep.subr.bf16.mxu0 0
      %1138 = vmatpush1.bf16.msra.mxu0 0
      %1139 = vmatprep.subr.bf16.mxu0 0
      %1140 = vmatpush1.bf16.msra.mxu0 0
      %1141 = vmatprep.subr.bf16.mxu0 0
      %1142 = vmatpush1.bf16.msra.mxu0 0
      %1143 = vmatprep.mubr.bf16.mxu0 0
      %1144 = vmatmul.mubr.bf16.gmra.mrb[0].mxu0 %v1097
      %v1145 = vpop.f32.mrb[0].mxu0
      %v1146 = vadd.f32 0.0, %v1145
      %v1147 = vpop.f32.mrb[0].mxu0
      %v1148 = vpop.f32.mrb[0].mxu0
      %v1149 = vadd.f32 0.0, %v1148
      %v1150 = vpop.f32.mrb[0].mxu0
      %1151 = vmatprep.mubr.bf16.mxu0 0
      %1152 = vmatmul.mubr.bf16.gmra.mrb[0].mxu0 %v1100
      %v1153 = vpop.f32.mrb[0].mxu0
      %v1154 = vadd.f32 0.0, %v1153
      %v1155 = vpop.f32.mrb[0].mxu0
      %v1156 = vpop.f32.mrb[0].mxu0
      %v1157 = vadd.f32 0.0, %v1156
      %v1158 = vpop.f32.mrb[0].mxu0
      %1159 = vmatprep.mubr.bf16.mxu0 0
      %1160 = vmatmul.mubr.bf16.gmra.mrb[0].mxu0 %v1103
      %v1161 = vpop.f32.mrb[0].mxu0
      %v1162 = vadd.f32 0.0, %v1161
      %v1163 = vpop.f32.mrb[0].mxu0
      %v1164 = vpop.f32.mrb[0].mxu0
      %v1165 = vadd.f32 0.0, %v1164
      %v1166 = vpop.f32.mrb[0].mxu0
      %1167 = vmatprep.mubr.bf16.mxu0 0
      %1168 = vmatmul.mubr.bf16.gmra.mrb[0].mxu0 %v1106
      %v1169 = vpop.f32.mrb[0].mxu0
      %v1170 = vadd.f32 0.0, %v1169
      %v1171 = vpop.f32.mrb[0].mxu0
      %v1172 = vpop.f32.mrb[0].mxu0
      %v1173 = vadd.f32 0.0, %v1172
      %v1174 = vpop.f32.mrb[0].mxu0
      %1175 = vdwg.mxu0
      %v1176 = vld [vmem:[%s7] sm:$0x1]
      %v1178 = vlaneseq
      %v1179 = vshrl.u32 %v1178, 7
      %v1180 = vsub.s32 0, %v1179
      %v1181 = vrot.slane %v1176, %v1180
      %v1183 = vmul.f32 %v1146, %v1181
      %v1184 = vmul.f32 %v1149, %v1181
      %v1185 = vmul.f32 %v1154, %v1181
      %v1186 = vmul.f32 %v1157, %v1181
      %v1187 = vmul.f32 %v1162, %v1181
      %v1188 = vmul.f32 %v1165, %v1181
      %v1189 = vmul.f32 %v1170, %v1181
      %v1190 = vmul.f32 %v1173, %v1181
      %v1191 = vld [vmem:[%s8] sm:$0x1]
      %v1193 = vlaneseq
      %v1194 = vshrl.u32 %v1193, 7
      %v1195 = vsub.s32 0, %v1194
      %v1196 = vrot.slane %v1191, %v1195
      %v1198 = vadd.f32 %v1183, %v1196
      %v1199 = vadd.f32 %v1184, %v1196
      %v1200 = vadd.f32 %v1185, %v1196
      %v1201 = vadd.f32 %v1186, %v1196
      %v1202 = vadd.f32 %v1187, %v1196
      %v1203 = vadd.f32 %v1188, %v1196
      %v1204 = vadd.f32 %v1189, %v1196
      %v1205 = vadd.f32 %v1190, %v1196
      %v1206 = vld [vmem:[%s374] sm:$0xff]
      %v1207 = vld [vmem:[%s374 + $0x8] sm:$0xff]
      %v1208 = vld [vmem:[%s374 + $0x10] sm:$0xff]
      %v1209 = vld [vmem:[%s374 + $0x18] sm:$0xff]
      %v1210 = vld [vmem:[%s374 + $0x20] sm:$0xff]
      %v1211 = vld [vmem:[%s374 + $0x28] sm:$0xff]
      %v1212 = vld [vmem:[%s374 + $0x30] sm:$0xff]
      %v1213 = vld [vmem:[%s374 + $0x38] sm:$0xff]
      %v1214 = vadd.f32 %v1198, %v1206
      %v1215 = vadd.f32 %v1199, %v1207
      %v1216 = vadd.f32 %v1200, %v1208
      %v1217 = vadd.f32 %v1201, %v1209
      %v1218 = vadd.f32 %v1202, %v1210
      %v1219 = vadd.f32 %v1203, %v1211
      %v1220 = vadd.f32 %v1204, %v1212
      %v1221 = vadd.f32 %v1205, %v1213
      %1222 = vst.msk [vmem:[%s379] sm:$0xff] %vm381, %v1214
      %1223 = vst.msk [vmem:[%s379 + $0x8] sm:$0xff] %vm381, %v1215
      %1224 = vst.msk [vmem:[%s379 + $0x10] sm:$0xff] %vm381, %v1216
      %1225 = vst.msk [vmem:[%s379 + $0x18] sm:$0xff] %vm381, %v1217
      %1226 = vst.msk [vmem:[%s379 + $0x20] sm:$0xff] %vm381, %v1218
      %1227 = vst.msk [vmem:[%s379 + $0x28] sm:$0xff] %vm381, %v1219
      %1228 = vst.msk [vmem:[%s379 + $0x30] sm:$0xff] %vm381, %v1220
      %1229 = vst.msk [vmem:[%s379 + $0x38] sm:$0xff] %vm381, %v1221
      %p1230 = scmp.lt.s32.totalorder %s21, 1
      %s1231 = scalar_select %p1230, %s21, 1
      %s1232 = smul.addr %s1231, 8
      %s1233 = smul.addr %s1232, 8
      %s1234 = scalar_lea.vmem %s10, %s1233
      // Predicated region
      $region61: #{_lambda_.9} parent=59 // pred_check
        %p1235 = pneg %p259
      $region62: #{_lambda_.9} parent=59 // pred_check_branch
        %1237 = sbr.rel (%p1235) target = $region64
      $region63: #{_lambda_.9} parent=59 // pred_region
        _
      $region64: #{_lambda_.9} parent=59 // pred_fallthru
        _
    $region60: #{_lambda_.9} parent=5 // pred_fallthru
      _
    %p1238 = scmp.le.s32.totalorder 2, %s16
    // Predicated region
    $region65: #{_lambda_.9} parent=5 // pred_check
      %p1239 = pneg %p1238
    $region66: #{_lambda_.9} parent=5 // pred_check_branch
      %1241 = sbr.rel (%p1239) target = $region68
    $region67: #{_lambda_.9} parent=5 // pred_region
      %s1242 = ssub.s32 %s16, 2
      // Predicated region
      $region69: #{_lambda_.9} parent=67 // pred_check
        %p1243 = pneg %p265
      $region70: #{_lambda_.9} parent=67 // pred_check_branch
        %1245 = sbr.rel (%p1243) target = $region72
      $region71: #{_lambda_.9} parent=67 // pred_region
        %p1246 = scmp.lt.s32.totalorder %s22, 1
        %s1247 = scalar_select %p1246, %s22, 1
        %s1248 = smul.addr %s1247, 8
        %s1249 = smul.addr %s1248, 8
        %s1250 = scalar_lea.vmem %s10, %s1249
      $region72: #{_lambda_.9} parent=67 // pred_fallthru
        _
    $region68: #{_lambda_.9} parent=5 // pred_fallthru
      _
  $region6: #{_lambda_.9} parent=0 // loop_footer
    %s20 = sadd.s32 1, %s16
  $region7: #{_lambda_.9} parent=0 // loop_footer_branch
    %15 = sbr.rel target = $region3
  $region8: #{_lambda_.9} parent=0 // loop_exit
    _

// kernel: _lambda_.10
$region0: #{_lambda_.10}
  #allocation0 [shape = 'u32[]', space=smem, size = 0x4, offset = 0x4, fixed_abs, tag = 'smem constant byte address 0x4 - core index']
  #allocation1 [shape = 'u32[144,128]{1,0:T(1,128)}', space=vmem, size = 0x12000, scoped, tag = 'internal scratch']
  #allocation2 [shape = 'f32[1,10,10,8]{3,2,1,0:T(8,128)}', space=vmem, size = 0x14000, scoped, tag = 'scratch operand']
  #allocation3 [shape = 'f32[1,10,10,8]{3,2,1,0:T(8,128)}', space=vmem, size = 0x14000, scoped, tag = 'scratch operand']
  %s0 = inlined_call_operand.vmem [shape: f32[2,8,8,8], index: 0, kind: input, shape index: {}]
  %s1 = inlined_call_operand.vmem [shape: f32[9,8], index: 1, kind: input, shape index: {}]
  %s2 = inlined_call_operand.vmem [shape: bf16[8,8], index: 2, kind: input, shape index: {}]
  %s3 = inlined_call_operand.vmem [shape: f32[1,8], index: 3, kind: input, shape index: {}]
  %s4 = inlined_call_operand.vmem [shape: f32[1,8], index: 4, kind: input, shape index: {}]
  %s5 = inlined_call_operand.vmem [shape: f32[9,8], index: 5, kind: input, shape index: {}]
  %s6 = inlined_call_operand.vmem [shape: bf16[8,8], index: 6, kind: input, shape index: {}]
  %s7 = inlined_call_operand.vmem [shape: f32[1,8], index: 7, kind: input, shape index: {}]
  %s8 = inlined_call_operand.vmem [shape: f32[1,8], index: 8, kind: input, shape index: {}]
  %s9 = inlined_call_operand.vmem [shape: f32[2,8,8,8], index: 9, kind: output, shape index: {}]
  %s10 = sld [smem:[#allocation0]]
  $region69: #{_lambda_.10} parent=0
    _
  %s12 = ssub.s32 1, %s10
  %s13 = scalar_select 0, %s12, %s10
  loop: start=0, step=1, limit=4
  $region2: #{_lambda_.10} parent=0 // loop_pre_header
    _
  $region3: #{_lambda_.10} parent=0 // loop_header
    %s15 = sphi 0, %s19
    %p16 = scmp.ge.s32.totalorder %s15, 4
    %s25 = sphi 0, %s27
    %s28 = sphi 0, %s25
    %s29 = sphi 0, %s28
    %s45 = sphi 0, %s29
    %s49 = sphi 0, %s49
    %s51 = sphi 0, %s49
    %s52 = sphi 0, %s51
    %s66 = sphi 0, %s52
    %s70 = sphi 0, %s70
    %s72 = sphi 0, %s70
    %s73 = sphi 0, %s72
    %s87 = sphi 0, %s73
    %s91 = sphi 0, %s91
    %s93 = sphi 0, %s91
    %s94 = sphi 0, %s93
    %s108 = sphi 0, %s94
    %s112 = sphi 0, %s112
    %s114 = sphi 0, %s112
    %s115 = sphi 0, %s114
    %s129 = sphi 0, %s115
    %s133 = sphi 0, %s133
    %s135 = sphi 0, %s133
    %s136 = sphi 0, %s135
    %s150 = sphi 0, %s136
    %s154 = sphi 0, %s154
    %s156 = sphi 0, %s154
    %s157 = sphi 0, %s156
    %s171 = sphi 0, %s157
    %s175 = sphi 0, %s175
    %s177 = sphi 0, %s175
    %s178 = sphi 0, %s177
    %s192 = sphi 0, %s178
    %s196 = sphi 0, %s196
    %s198 = sphi 0, %s196
    %s199 = sphi 0, %s198
    %s213 = sphi 0, %s199
    %s219 = sphi 0, %s221
    %s222 = sphi 0, %s219
    %s223 = sphi 0, %s222
    %s239 = sphi 0, %s223
  $region4: #{_lambda_.10} parent=0 // loop_header_branch
    %18 = sbr.rel (%p16) target = $region8
  $region5: #{_lambda_.10} parent=0 // loop_body
    %s20 = ssub.s32 %s15, 1
    %s21 = ssub.s32 %s15, 2
    %s22 = sadd.s32 %s15, 1
    %s23 = ssub.s32 %s15, %s22
    %p24 = scmp.eq.s32.totalorder %s23, 0
    %s26 = sadd.s32 %s25, 1
    %s27 = scalar_select %p24, %s25, %s26
    %p30 = pneg %p24
    %p31 = scmp.eq.s32.totalorder %s15, 1
    %p32 = por %p30, %p31
    %p33 = scmp.ne.s32.totalorder %s25, %s28
    %p34 = scmp.eq.s32.totalorder %s15, 0
    %p35 = por %p33, %p34
    %p36 = scmp.ne.s32.totalorder %s25, %s28
    %p37 = scmp.eq.s32.totalorder %s20, 1
    %p38 = por %p36, %p37
    %p39 = scmp.ne.s32.totalorder %s28, %s29
    %p40 = scmp.eq.s32.totalorder %s20, 0
    %p41 = por %p39, %p40
    %p42 = scmp.ne.s32.totalorder %s28, %s29
    %p43 = scmp.eq.s32.totalorder %s21, 1
    %p44 = por %p42, %p43
    %p46 = scmp.ne.s32.totalorder %s29, %s45
    %p47 = scmp.eq.s32.totalorder %s21, 0
    %p48 = por %p46, %p47
    %s50 = sadd.s32 %s49, 1
    %p53 = scmp.eq.s32.totalorder %s15, 1
    %p54 = scmp.ne.s32.totalorder %s49, %s51
    %p55 = scmp.eq.s32.totalorder %s15, 0
    %p56 = por %p54, %p55
    %p57 = scmp.ne.s32.totalorder %s49, %s51
    %p58 = scmp.eq.s32.totalorder %s20, 1
    %p59 = por %p57, %p58
    %p60 = scmp.ne.s32.totalorder %s51, %s52
    %p61 = scmp.eq.s32.totalorder %s20, 0
    %p62 = por %p60, %p61
    %p63 = scmp.ne.s32.totalorder %s51, %s52
    %p64 = scmp.eq.s32.totalorder %s21, 1
    %p65 = por %p63, %p64
    %p67 = scmp.ne.s32.totalorder %s52, %s66
    %p68 = scmp.eq.s32.totalorder %s21, 0
    %p69 = por %p67, %p68
    %s71 = sadd.s32 %s70, 1
    %p74 = scmp.eq.s32.totalorder %s15, 1
    %p75 = scmp.ne.s32.totalorder %s70, %s72
    %p76 = scmp.eq.s32.totalorder %s15, 0
    %p77 = por %p75, %p76
    %p78 = scmp.ne.s32.totalorder %s70, %s72
    %p79 = scmp.eq.s32.totalorder %s20, 1
    %p80 = por %p78, %p79
    %p81 = scmp.ne.s32.totalorder %s72, %s73
    %p82 = scmp.eq.s32.totalorder %s20, 0
    %p83 = por %p81, %p82
    %p84 = scmp.ne.s32.totalorder %s72, %s73
    %p85 = scmp.eq.s32.totalorder %s21, 1
    %p86 = por %p84, %p85
    %p88 = scmp.ne.s32.totalorder %s73, %s87
    %p89 = scmp.eq.s32.totalorder %s21, 0
    %p90 = por %p88, %p89
    %s92 = sadd.s32 %s91, 1
    %p95 = scmp.eq.s32.totalorder %s15, 1
    %p96 = scmp.ne.s32.totalorder %s91, %s93
    %p97 = scmp.eq.s32.totalorder %s15, 0
    %p98 = por %p96, %p97
    %p99 = scmp.ne.s32.totalorder %s91, %s93
    %p100 = scmp.eq.s32.totalorder %s20, 1
    %p101 = por %p99, %p100
    %p102 = scmp.ne.s32.totalorder %s93, %s94
    %p103 = scmp.eq.s32.totalorder %s20, 0
    %p104 = por %p102, %p103
    %p105 = scmp.ne.s32.totalorder %s93, %s94
    %p106 = scmp.eq.s32.totalorder %s21, 1
    %p107 = por %p105, %p106
    %p109 = scmp.ne.s32.totalorder %s94, %s108
    %p110 = scmp.eq.s32.totalorder %s21, 0
    %p111 = por %p109, %p110
    %s113 = sadd.s32 %s112, 1
    %p116 = scmp.eq.s32.totalorder %s15, 1
    %p117 = scmp.ne.s32.totalorder %s112, %s114
    %p118 = scmp.eq.s32.totalorder %s15, 0
    %p119 = por %p117, %p118
    %p120 = scmp.ne.s32.totalorder %s112, %s114
    %p121 = scmp.eq.s32.totalorder %s20, 1
    %p122 = por %p120, %p121
    %p123 = scmp.ne.s32.totalorder %s114, %s115
    %p124 = scmp.eq.s32.totalorder %s20, 0
    %p125 = por %p123, %p124
    %p126 = scmp.ne.s32.totalorder %s114, %s115
    %p127 = scmp.eq.s32.totalorder %s21, 1
    %p128 = por %p126, %p127
    %p130 = scmp.ne.s32.totalorder %s115, %s129
    %p131 = scmp.eq.s32.totalorder %s21, 0
    %p132 = por %p130, %p131
    %s134 = sadd.s32 %s133, 1
    %p137 = scmp.eq.s32.totalorder %s15, 1
    %p138 = scmp.ne.s32.totalorder %s133, %s135
    %p139 = scmp.eq.s32.totalorder %s15, 0
    %p140 = por %p138, %p139
    %p141 = scmp.ne.s32.totalorder %s133, %s135
    %p142 = scmp.eq.s32.totalorder %s20, 1
    %p143 = por %p141, %p142
    %p144 = scmp.ne.s32.totalorder %s135, %s136
    %p145 = scmp.eq.s32.totalorder %s20, 0
    %p146 = por %p144, %p145
    %p147 = scmp.ne.s32.totalorder %s135, %s136
    %p148 = scmp.eq.s32.totalorder %s21, 1
    %p149 = por %p147, %p148
    %p151 = scmp.ne.s32.totalorder %s136, %s150
    %p152 = scmp.eq.s32.totalorder %s21, 0
    %p153 = por %p151, %p152
    %s155 = sadd.s32 %s154, 1
    %p158 = scmp.eq.s32.totalorder %s15, 1
    %p159 = scmp.ne.s32.totalorder %s154, %s156
    %p160 = scmp.eq.s32.totalorder %s15, 0
    %p161 = por %p159, %p160
    %p162 = scmp.ne.s32.totalorder %s154, %s156
    %p163 = scmp.eq.s32.totalorder %s20, 1
    %p164 = por %p162, %p163
    %p165 = scmp.ne.s32.totalorder %s156, %s157
    %p166 = scmp.eq.s32.totalorder %s20, 0
    %p167 = por %p165, %p166
    %p168 = scmp.ne.s32.totalorder %s156, %s157
    %p169 = scmp.eq.s32.totalorder %s21, 1
    %p170 = por %p168, %p169
    %p172 = scmp.ne.s32.totalorder %s157, %s171
    %p173 = scmp.eq.s32.totalorder %s21, 0
    %p174 = por %p172, %p173
    %s176 = sadd.s32 %s175, 1
    %p179 = scmp.eq.s32.totalorder %s15, 1
    %p180 = scmp.ne.s32.totalorder %s175, %s177
    %p181 = scmp.eq.s32.totalorder %s15, 0
    %p182 = por %p180, %p181
    %p183 = scmp.ne.s32.totalorder %s175, %s177
    %p184 = scmp.eq.s32.totalorder %s20, 1
    %p185 = por %p183, %p184
    %p186 = scmp.ne.s32.totalorder %s177, %s178
    %p187 = scmp.eq.s32.totalorder %s20, 0
    %p188 = por %p186, %p187
    %p189 = scmp.ne.s32.totalorder %s177, %s178
    %p190 = scmp.eq.s32.totalorder %s21, 1
    %p191 = por %p189, %p190
    %p193 = scmp.ne.s32.totalorder %s178, %s192
    %p194 = scmp.eq.s32.totalorder %s21, 0
    %p195 = por %p193, %p194
    %s197 = sadd.s32 %s196, 1
    %p200 = scmp.eq.s32.totalorder %s15, 1
    %p201 = scmp.ne.s32.totalorder %s196, %s198
    %p202 = scmp.eq.s32.totalorder %s15, 0
    %p203 = por %p201, %p202
    %p204 = scmp.ne.s32.totalorder %s196, %s198
    %p205 = scmp.eq.s32.totalorder %s20, 1
    %p206 = por %p204, %p205
    %p207 = scmp.ne.s32.totalorder %s198, %s199
    %p208 = scmp.eq.s32.totalorder %s20, 0
    %p209 = por %p207, %p208
    %p210 = scmp.ne.s32.totalorder %s198, %s199
    %p211 = scmp.eq.s32.totalorder %s21, 1
    %p212 = por %p210, %p211
    %p214 = scmp.ne.s32.totalorder %s199, %s213
    %p215 = scmp.eq.s32.totalorder %s21, 0
    %p216 = por %p214, %p215
    %s217 = ssub.s32 %s15, %s22
    %p218 = scmp.eq.s32.totalorder %s217, 0
    %s220 = sadd.s32 %s219, 1
    %s221 = scalar_select %p218, %s219, %s220
    %p224 = pneg %p218
    %p225 = scmp.eq.s32.totalorder %s15, 1
    %p226 = por %p224, %p225
    %p227 = scmp.ne.s32.totalorder %s219, %s222
    %p228 = scmp.eq.s32.totalorder %s15, 0
    %p229 = por %p227, %p228
    %p230 = scmp.ne.s32.totalorder %s219, %s222
    %p231 = scmp.eq.s32.totalorder %s20, 1
    %p232 = por %p230, %p231
    %p233 = scmp.ne.s32.totalorder %s222, %s223
    %p234 = scmp.eq.s32.totalorder %s20, 0
    %p235 = por %p233, %p234
    %p236 = scmp.ne.s32.totalorder %s222, %s223
    %p237 = scmp.eq.s32.totalorder %s21, 1
    %p238 = por %p236, %p237
    %p240 = scmp.ne.s32.totalorder %s223, %s239
    %p241 = scmp.eq.s32.totalorder %s21, 0
    %p242 = por %p240, %p241
    %p243 = scmp.le.s32.totalorder 1, %s15
    %p244 = scmp.lt.s32.totalorder %s15, 3
    %p245 = pnand %p243, %p244
    %p246 = pneg %p245
    // Predicated region
    $region9: #{_lambda_.10} parent=5 // pred_check
      _
    $region10: #{_lambda_.10} parent=5 // pred_check_branch
      %248 = sbr.rel (%p245) target = $region12
    $region11: #{_lambda_.10} parent=5 // pred_region
      %s249 = ssub.s32 %s15, 1
      // Predicated region
      $region13: #{_lambda_.10} parent=11 // pred_check
        %p250 = pneg %p62
      $region14: #{_lambda_.10} parent=11 // pred_check_branch
        %252 = sbr.rel (%p250) target = $region16
      $region15: #{_lambda_.10} parent=11 // pred_region
        _
      $region16: #{_lambda_.10} parent=11 // pred_fallthru
        _
      // Predicated region
      $region17: #{_lambda_.10} parent=11 // pred_check
        %p253 = pneg %p83
      $region18: #{_lambda_.10} parent=11 // pred_check_branch
        %255 = sbr.rel (%p253) target = $region20
      $region19: #{_lambda_.10} parent=11 // pred_region
        _
      $region20: #{_lambda_.10} parent=11 // pred_fallthru
        _
      // Predicated region
      $region21: #{_lambda_.10} parent=11 // pred_check
        %p256 = pneg %p104
      $region22: #{_lambda_.10} parent=11 // pred_check_branch
        %258 = sbr.rel (%p256) target = $region24
      $region23: #{_lambda_.10} parent=11 // pred_region
        _
      $region24: #{_lambda_.10} parent=11 // pred_fallthru
        _
      // Predicated region
      $region25: #{_lambda_.10} parent=11 // pred_check
        %p259 = pneg %p125
      $region26: #{_lambda_.10} parent=11 // pred_check_branch
        %261 = sbr.rel (%p259) target = $region28
      $region27: #{_lambda_.10} parent=11 // pred_region
        _
      $region28: #{_lambda_.10} parent=11 // pred_fallthru
        _
      // Predicated region
      $region29: #{_lambda_.10} parent=11 // pred_check
        %p262 = pneg %p146
      $region30: #{_lambda_.10} parent=11 // pred_check_branch
        %264 = sbr.rel (%p262) target = $region32
      $region31: #{_lambda_.10} parent=11 // pred_region
        _
      $region32: #{_lambda_.10} parent=11 // pred_fallthru
        _
      // Predicated region
      $region33: #{_lambda_.10} parent=11 // pred_check
        %p265 = pneg %p167
      $region34: #{_lambda_.10} parent=11 // pred_check_branch
        %267 = sbr.rel (%p265) target = $region36
      $region35: #{_lambda_.10} parent=11 // pred_region
        _
      $region36: #{_lambda_.10} parent=11 // pred_fallthru
        _
      // Predicated region
      $region37: #{_lambda_.10} parent=11 // pred_check
        %p268 = pneg %p188
      $region38: #{_lambda_.10} parent=11 // pred_check_branch
        %270 = sbr.rel (%p268) target = $region40
      $region39: #{_lambda_.10} parent=11 // pred_region
        _
      $region40: #{_lambda_.10} parent=11 // pred_fallthru
        _
      // Predicated region
      $region41: #{_lambda_.10} parent=11 // pred_check
        %p271 = pneg %p209
      $region42: #{_lambda_.10} parent=11 // pred_check_branch
        %273 = sbr.rel (%p271) target = $region44
      $region43: #{_lambda_.10} parent=11 // pred_region
        _
      $region44: #{_lambda_.10} parent=11 // pred_fallthru
        _
    $region12: #{_lambda_.10} parent=5 // pred_fallthru
      _
    %p274 = scmp.lt.s32.totalorder %s15, 2
    // Predicated region
    $region45: #{_lambda_.10} parent=5 // pred_check
      %p275 = pneg %p274
    $region46: #{_lambda_.10} parent=5 // pred_check_branch
      %277 = sbr.rel (%p275) target = $region48
    $region47: #{_lambda_.10} parent=5 // pred_region
      // Predicated region
      $region49: #{_lambda_.10} parent=47 // pred_check
        %p278 = pneg %p35
      $region50: #{_lambda_.10} parent=47 // pred_check_branch
        %280 = sbr.rel (%p278) target = $region52
      $region51: #{_lambda_.10} parent=47 // pred_region
        %p281 = scmp.lt.s32.totalorder %s15, 1
        %s282 = scalar_select %p281, %s15, 1
        %s283 = smul.addr %s282, 8
        %s284 = smul.addr %s283, 8
        %s285 = scalar_lea.vmem %s0, %s284
      $region52: #{_lambda_.10} parent=47 // pred_fallthru
        _
    $region48: #{_lambda_.10} parent=5 // pred_fallthru
      _
    %p286 = scmp.le.s32.totalorder 1, %s15
    %p287 = scmp.lt.s32.totalorder %s15, 3
    %p288 = pnand %p286, %p287
    %p289 = pneg %p288
    // Predicated region
    $region53: #{_lambda_.10} parent=5 // pred_check
      _
    $region54: #{_lambda_.10} parent=5 // pred_check_branch
      %291 = sbr.rel (%p288) target = $region56
    $region55: #{_lambda_.10} parent=5 // pred_region
      %s292 = ssub.s32 %s15, 1
      %p293 = scmp.lt.s32.totalorder %s20, 1
      %s294 = scalar_select %p293, %s20, 1
      %s295 = smul.addr %s294, 8
      %s296 = smul.addr %s295, 8
      %s297 = scalar_lea.vmem %s0, %s296
      %p298 = pneg %p41
      %p299 = pneg %p38
      %p300 = pneg %p62
      %p301 = pneg %p59
      %p302 = pneg %p83
      %p303 = pneg %p80
      %p304 = pneg %p104
      %p305 = pneg %p101
      %p306 = pneg %p125
      %p307 = pneg %p122
      %p308 = pneg %p146
      %p309 = pneg %p143
      %p310 = pneg %p167
      %p311 = pneg %p164
      %p312 = pneg %p188
      %p313 = pneg %p185
      %p314 = pneg %p209
      %p315 = pneg %p206
      %p316 = pneg %p235
      %p317 = pneg %p232
      %p318 = scmp.lt.s32.totalorder %s20, 1
      %s319 = scalar_select %p318, %s20, 1
      %s320 = smul.addr %s319, 8
      %s321 = smul.addr %s320, 8
      %s322 = scalar_lea.vmem %s9, %s321
      %p323 = scmp.lt.s32.totalorder %s20, 1
      %s324 = scalar_select %p323, %s20, 1
      %s325 = smul.addr %s324, 8
      %s326 = smul.addr %s325, 8
      %s327 = scalar_lea.vmem %s0, %s326
      %p328 = scmp.lt.s32.totalorder %s20, 1
      %s329 = scalar_select %p328, %s20, 1
      %s330 = smul.addr %s329, 8
      %s331 = smul.addr %s330, 8
      %s332 = scalar_lea.vmem %s9, %s331
      %vm334 = vcmask 64512
      %335 = vst.msk [vmem:[#allocation2] sm:$0xff] %vm334, 0.0
      %vm336 = vcmask 58368
      %337 = vst.msk [vmem:[#allocation2 + $0x8] sm:$0x3] %vm336, 0.0
      %338 = vst.msk [vmem:[#allocation2 + $0x10] sm:$0xff] %vm334, 0.0
      %339 = vst.msk [vmem:[#allocation2 + $0x18] sm:$0x3] %vm336, 0.0
      %340 = vst.msk [vmem:[#allocation2 + $0x20] sm:$0xff] %vm334, 0.0
      %341 = vst.msk [vmem:[#allocation2 + $0x28] sm:$0x3] %vm336, 0.0
      %342 = vst.msk [vmem:[#allocation2 + $0x30] sm:$0xff] %vm334, 0.0
      %343 = vst.msk [vmem:[#allocation2 + $0x38] sm:$0x3] %vm336, 0.0
      %344 = vst.msk [vmem:[#allocation2 + $0x40] sm:$0xff] %vm334, 0.0
      %345 = vst.msk [vmem:[#allocation2 + $0x48] sm:$0x3] %vm336, 0.0
      %346 = vst.msk [vmem:[#allocation2 + $0x50] sm:$0xff] %vm334, 0.0
      %347 = vst.msk [vmem:[#allocation2 + $0x58] sm:$0x3] %vm336, 0.0
      %348 = vst.msk [vmem:[#allocation2 + $0x60] sm:$0xff] %vm334, 0.0
      %349 = vst.msk [vmem:[#allocation2 + $0x68] sm:$0x3] %vm336, 0.0
      %350 = vst.msk [vmem:[#allocation2 + $0x70] sm:$0xff] %vm334, 0.0
      %351 = vst.msk [vmem:[#allocation2 + $0x78] sm:$0x3] %vm336, 0.0
      %352 = vst.msk [vmem:[#allocation2 + $0x80] sm:$0xff] %vm334, 0.0
      %353 = vst.msk [vmem:[#allocation2 + $0x88] sm:$0x3] %vm336, 0.0
      %354 = vst.msk [vmem:[#allocation2 + $0x90] sm:$0xff] %vm334, 0.0
      %355 = vst.msk [vmem:[#allocation2 + $0x98] sm:$0x3] %vm336, 0.0
      %v356 = vld [vmem:[%s327] sm:$0xff]
      %v357 = vld [vmem:[%s327 + $0x8] sm:$0xff]
      %v358 = vld [vmem:[%s327 + $0x10] sm:$0xff]
      %v359 = vld [vmem:[%s327 + $0x18] sm:$0xff]
      %v360 = vld [vmem:[%s327 + $0x20] sm:$0xff]
      %v361 = vld [vmem:[%s327 + $0x28] sm:$0xff]
      %v362 = vld [vmem:[%s327 + $0x30] sm:$0xff]
      %v363 = vld [vmem:[%s327 + $0x38] sm:$0xff]
      %v364 = vmax.f32 %v356, 0.0
      %v365 = vmax.f32 %v357, 0.0
      %v366 = vmax.f32 %v358, 0.0
      %v367 = vmax.f32 %v359, 0.0
      %v368 = vmax.f32 %v360, 0.0
      %v369 = vmax.f32 %v361, 0.0
      %v370 = vmax.f32 %v362, 0.0
      %v371 = vmax.f32 %v363, 0.0
      %s372 = scalar_lea.vmem [#allocation2], 16
      %373 = vst.msk [vmem:[%s372 + $0x1] sm:$0xff] %vm334, %v364
      %374 = vst.msk [vmem:[%s372 + $0x11] sm:$0xff] %vm334, %v365
      %375 = vst.msk [vmem:[%s372 + $0x21] sm:$0xff] %vm334, %v366
      %376 = vst.msk [vmem:[%s372 + $0x31] sm:$0xff] %vm334, %v367
      %377 = vst.msk [vmem:[%s372 + $0x41] sm:$0xff] %vm334, %v368
      %378 = vst.msk [vmem:[%s372 + $0x51] sm:$0xff] %vm334, %v369
      %379 = vst.msk [vmem:[%s372 + $0x61] sm:$0xff] %vm334, %v370
      %380 = vst.msk [vmem:[%s372 + $0x71] sm:$0xff] %vm334, %v371
      %v381 = vld [vmem:[%s1] sm:$0xff]
      %v382 = vld [vmem:[%s1 + $0x8] sm:$0x1]
      %v383 = vld [vmem:[#allocation2] sm:$0xff]
      %v384 = vld [vmem:[#allocation2 + $0x10] sm:$0xff]
      %v385 = vld [vmem:[#allocation2 + $0x20] sm:$0xff]
      %v386 = vld [vmem:[#allocation2 + $0x30] sm:$0xff]
      %v387 = vld [vmem:[#allocation2 + $0x40] sm:$0xff]
      %v388 = vld [vmem:[#allocation2 + $0x50] sm:$0xff]
      %v389 = vld [vmem:[#allocation2 + $0x60] sm:$0xff]
      %v390 = vld [vmem:[#allocation2 + $0x70] sm:$0xff]
      %v391 = vlaneseq
      %v392 = vshrl.u32 %v391, 7
      %v393 = vsub.s32 0, %v392
      %v394 = vrot.slane %v381, %v393
      %v395 = vmul.f32 %v383, %v394
      %v396 = vmul.f32 %v384, %v394
      %v397 = vmul.f32 %v385, %v394
      %v398 = vmul.f32 %v386, %v394
      %v399 = vmul.f32 %v387, %v394
      %v400 = vmul.f32 %v388, %v394
      %v401 = vmul.f32 %v389, %v394
      %v402 = vmul.f32 %v390, %v394
      %v403 = vadd.f32 %v395, 0.0
      %v404 = vadd.f32 %v396, 0.0
      %v405 = vadd.f32 %v397, 0.0
      %v406 = vadd.f32 %v398, 0.0
      %v407 = vadd.f32 %v399, 0.0
      %v408 = vadd.f32 %v400, 0.0
      %v409 = vadd.f32 %v401, 0.0
      %v410 = vadd.f32 %v402, 0.0
      %v411 = vld [vmem:[#allocation2 + $0x1] sm:$0xff]
      %v412 = vld [vmem:[#allocation2 + $0x11] sm:$0xff]
      %v413 = vld [vmem:[#allocation2 + $0x21] sm:$0xff]
      %v414 = vld [vmem:[#allocation2 + $0x31] sm:$0xff]
      %v415 = vld [vmem:[#allocation2 + $0x41] sm:$0xff]
      %v416 = vld [vmem:[#allocation2 + $0x51] sm:$0xff]
      %v417 = vld [vmem:[#allocation2 + $0x61] sm:$0xff]
      %v418 = vld [vmem:[#allocation2 + $0x71] sm:$0xff]
      %v419 = vlaneseq
      %v420 = vshrl.u32 %v419, 7
      %v421 = vsub.s32 1, %v420
      %v422 = vrot.slane %v381, %v421
      %v423 = vmul.f32 %v411, %v422
      %v424 = vmul.f32 %v412, %v422
      %v425 = vmul.f32 %v413, %v422
      %v426 = vmul.f32 %v414, %v422
      %v427 = vmul.f32 %v415, %v422
      %v428 = vmul.f32 %v416, %v422
      %v429 = vmul.f32 %v417, %v422
      %v430 = vmul.f32 %v418, %v422
      %v431 = vadd.f32 %v403, %v423
      %v432 = vadd.f32 %v404, %v424
      %v433 = vadd.f32 %v405, %v425
      %v434 = vadd.f32 %v406, %v426
      %v435 = vadd.f32 %v407, %v427
      %v436 = vadd.f32 %v408, %v428
      %v437 = vadd.f32 %v409, %v429
      %v438 = vadd.f32 %v410, %v430
      %v439 = vld [vmem:[#allocation2 + $0x2] sm:$0xff]
      %v440 = vld [vmem:[#allocation2 + $0x12] sm:$0xff]
      %v441 = vld [vmem:[#allocation2 + $0x22] sm:$0xff]
      %v442 = vld [vmem:[#allocation2 + $0x32] sm:$0xff]
      %v443 = vld [vmem:[#allocation2 + $0x42] sm:$0xff]
      %v444 = vld [vmem:[#allocation2 + $0x52] sm:$0xff]
      %v445 = vld [vmem:[#allocation2 + $0x62] sm:$0xff]
      %v446 = vld [vmem:[#allocation2 + $0x72] sm:$0xff]
      %v447 = vlaneseq
      %v448 = vshrl.u32 %v447, 7
      %v449 = vsub.s32 2, %v448
      %v450 = vrot.slane %v381, %v449
      %v451 = vmul.f32 %v439, %v450
      %v452 = vmul.f32 %v440, %v450
      %v453 = vmul.f32 %v441, %v450
      %v454 = vmul.f32 %v442, %v450
      %v455 = vmul.f32 %v443, %v450
      %v456 = vmul.f32 %v444, %v450
      %v457 = vmul.f32 %v445, %v450
      %v458 = vmul.f32 %v446, %v450
      %v459 = vadd.f32 %v431, %v451
      %v460 = vadd.f32 %v432, %v452
      %v461 = vadd.f32 %v433, %v453
      %v462 = vadd.f32 %v434, %v454
      %v463 = vadd.f32 %v435, %v455
      %v464 = vadd.f32 %v436, %v456
      %v465 = vadd.f32 %v437, %v457
      %v466 = vadd.f32 %v438, %v458
      %v467 = vld [vmem:[%s372] sm:$0xff]
      %v468 = vld [vmem:[%s372 + $0x10] sm:$0xff]
      %v469 = vld [vmem:[%s372 + $0x20] sm:$0xff]
      %v470 = vld [vmem:[%s372 + $0x30] sm:$0xff]
      %v471 = vld [vmem:[%s372 + $0x40] sm:$0xff]
      %v472 = vld [vmem:[%s372 + $0x50] sm:$0xff]
      %v473 = vld [vmem:[%s372 + $0x60] sm:$0xff]
      %v474 = vld [vmem:[%s372 + $0x70] sm:$0xff]
      %v475 = vlaneseq
      %v476 = vshrl.u32 %v475, 7
      %v477 = vsub.s32 3, %v476
      %v478 = vrot.slane %v381, %v477
      %v479 = vmul.f32 %v467, %v478
      %v480 = vmul.f32 %v468, %v478
      %v481 = vmul.f32 %v469, %v478
      %v482 = vmul.f32 %v470, %v478
      %v483 = vmul.f32 %v471, %v478
      %v484 = vmul.f32 %v472, %v478
      %v485 = vmul.f32 %v473, %v478
      %v486 = vmul.f32 %v474, %v478
      %v487 = vadd.f32 %v459, %v479
      %v488 = vadd.f32 %v460, %v480
      %v489 = vadd.f32 %v461, %v481
      %v490 = vadd.f32 %v462, %v482
      %v491 = vadd.f32 %v463, %v483
      %v492 = vadd.f32 %v464, %v484
      %v493 = vadd.f32 %v465, %v485
      %v494 = vadd.f32 %v466, %v486
      %v495 = vld [vmem:[%s372 + $0x1] sm:$0xff]
      %v496 = vld [vmem:[%s372 + $0x11] sm:$0xff]
      %v497 = vld [vmem:[%s372 + $0x21] sm:$0xff]
      %v498 = vld [vmem:[%s372 + $0x31] sm:$0xff]
      %v499 = vld [vmem:[%s372 + $0x41] sm:$0xff]
      %v500 = vld [vmem:[%s372 + $0x51] sm:$0xff]
      %v501 = vld [vmem:[%s372 + $0x61] sm:$0xff]
      %v502 = vld [vmem:[%s372 + $0x71] sm:$0xff]
      %v503 = vlaneseq
      %v504 = vshrl.u32 %v503, 7
      %v505 = vsub.s32 4, %v504
      %v506 = vrot.slane %v381, %v505
      %v507 = vmul.f32 %v495, %v506
      %v508 = vmul.f32 %v496, %v506
      %v509 = vmul.f32 %v497, %v506
      %v510 = vmul.f32 %v498, %v506
      %v511 = vmul.f32 %v499, %v506
      %v512 = vmul.f32 %v500, %v506
      %v513 = vmul.f32 %v501, %v506
      %v514 = vmul.f32 %v502, %v506
      %v515 = vadd.f32 %v487, %v507
      %v516 = vadd.f32 %v488, %v508
      %v517 = vadd.f32 %v489, %v509
      %v518 = vadd.f32 %v490, %v510
      %v519 = vadd.f32 %v491, %v511
      %v520 = vadd.f32 %v492, %v512
      %v521 = vadd.f32 %v493, %v513
      %v522 = vadd.f32 %v494, %v514
      %v523 = vld [vmem:[%s372 + $0x2] sm:$0xff]
      %v524 = vld [vmem:[%s372 + $0x12] sm:$0xff]
      %v525 = vld [vmem:[%s372 + $0x22] sm:$0xff]
      %v526 = vld [vmem:[%s372 + $0x32] sm:$0xff]
      %v527 = vld [vmem:[%s372 + $0x42] sm:$0xff]
      %v528 = vld [vmem:[%s372 + $0x52] sm:$0xff]
      %v529 = vld [vmem:[%s372 + $0x62] sm:$0xff]
      %v530 = vld [vmem:[%s372 + $0x72] sm:$0xff]
      %v531 = vlaneseq
      %v532 = vshrl.u32 %v531, 7
      %v533 = vsub.s32 5, %v532
      %v534 = vrot.slane %v381, %v533
      %v535 = vmul.f32 %v523, %v534
      %v536 = vmul.f32 %v524, %v534
      %v537 = vmul.f32 %v525, %v534
      %v538 = vmul.f32 %v526, %v534
      %v539 = vmul.f32 %v527, %v534
      %v540 = vmul.f32 %v528, %v534
      %v541 = vmul.f32 %v529, %v534
      %v542 = vmul.f32 %v530, %v534
      %v543 = vadd.f32 %v515, %v535
      %v544 = vadd.f32 %v516, %v536
      %v545 = vadd.f32 %v517, %v537
      %v546 = vadd.f32 %v518, %v538
      %v547 = vadd.f32 %v519, %v539
      %v548 = vadd.f32 %v520, %v540
      %v549 = vadd.f32 %v521, %v541
      %v550 = vadd.f32 %v522, %v542
      %s551 = scalar_lea.vmem [#allocation2], 32
      %v552 = vld [vmem:[%s551] sm:$0xff]
      %v553 = vld [vmem:[%s551 + $0x10] sm:$0xff]
      %v554 = vld [vmem:[%s551 + $0x20] sm:$0xff]
      %v555 = vld [vmem:[%s551 + $0x30] sm:$0xff]
      %v556 = vld [vmem:[%s551 + $0x40] sm:$0xff]
      %v557 = vld [vmem:[%s551 + $0x50] sm:$0xff]
      %v558 = vld [vmem:[%s551 + $0x60] sm:$0xff]
      %v559 = vld [vmem:[%s551 + $0x70] sm:$0xff]
      %v560 = vlaneseq
      %v561 = vshrl.u32 %v560, 7
      %v562 = vsub.s32 6, %v561
      %v563 = vrot.slane %v381, %v562
      %v564 = vmul.f32 %v552, %v563
      %v565 = vmul.f32 %v553, %v563
      %v566 = vmul.f32 %v554, %v563
      %v567 = vmul.f32 %v555, %v563
      %v568 = vmul.f32 %v556, %v563
      %v569 = vmul.f32 %v557, %v563
      %v570 = vmul.f32 %v558, %v563
      %v571 = vmul.f32 %v559, %v563
      %v572 = vadd.f32 %v543, %v564
      %v573 = vadd.f32 %v544, %v565
      %v574 = vadd.f32 %v545, %v566
      %v575 = vadd.f32 %v546, %v567
      %v576 = vadd.f32 %v547, %v568
      %v577 = vadd.f32 %v548, %v569
      %v578 = vadd.f32 %v549, %v570
      %v579 = vadd.f32 %v550, %v571
      %v580 = vld [vmem:[%s551 + $0x1] sm:$0xff]
      %v581 = vld [vmem:[%s551 + $0x11] sm:$0xff]
      %v582 = vld [vmem:[%s551 + $0x21] sm:$0xff]
      %v583 = vld [vmem:[%s551 + $0x31] sm:$0xff]
      %v584 = vld [vmem:[%s551 + $0x41] sm:$0xff]
      %v585 = vld [vmem:[%s551 + $0x51] sm:$0xff]
      %v586 = vld [vmem:[%s551 + $0x61] sm:$0xff]
      %v587 = vld [vmem:[%s551 + $0x71] sm:$0xff]
      %v588 = vlaneseq
      %v589 = vshrl.u32 %v588, 7
      %v590 = vsub.s32 7, %v589
      %v591 = vrot.slane %v381, %v590
      %v592 = vmul.f32 %v580, %v591
      %v593 = vmul.f32 %v581, %v591
      %v594 = vmul.f32 %v582, %v591
      %v595 = vmul.f32 %v583, %v591
      %v596 = vmul.f32 %v584, %v591
      %v597 = vmul.f32 %v585, %v591
      %v598 = vmul.f32 %v586, %v591
      %v599 = vmul.f32 %v587, %v591
      %v600 = vadd.f32 %v572, %v592
      %v601 = vadd.f32 %v573, %v593
      %v602 = vadd.f32 %v574, %v594
      %v603 = vadd.f32 %v575, %v595
      %v604 = vadd.f32 %v576, %v596
      %v605 = vadd.f32 %v577, %v597
      %v606 = vadd.f32 %v578, %v598
      %v607 = vadd.f32 %v579, %v599
      %v608 = vld [vmem:[%s551 + $0x2] sm:$0xff]
      %v609 = vld [vmem:[%s551 + $0x12] sm:$0xff]
      %v610 = vld [vmem:[%s551 + $0x22] sm:$0xff]
      %v611 = vld [vmem:[%s551 + $0x32] sm:$0xff]
      %v612 = vld [vmem:[%s551 + $0x42] sm:$0xff]
      %v613 = vld [vmem:[%s551 + $0x52] sm:$0xff]
      %v614 = vld [vmem:[%s551 + $0x62] sm:$0xff]
      %v615 = vld [vmem:[%s551 + $0x72] sm:$0xff]
      %v616 = vlaneseq
      %v617 = vshrl.u32 %v616, 7
      %v618 = vsub.s32 0, %v617
      %v619 = vrot.slane %v382, %v618
      %v620 = vmul.f32 %v608, %v619
      %v621 = vmul.f32 %v609, %v619
      %v622 = vmul.f32 %v610, %v619
      %v623 = vmul.f32 %v611, %v619
      %v624 = vmul.f32 %v612, %v619
      %v625 = vmul.f32 %v613, %v619
      %v626 = vmul.f32 %v614, %v619
      %v627 = vmul.f32 %v615, %v619
      %v628 = vadd.f32 %v600, %v620
      %v629 = vadd.f32 %v601, %v621
      %v630 = vadd.f32 %v602, %v622
      %v631 = vadd.f32 %v603, %v623
      %v632 = vadd.f32 %v604, %v624
      %v633 = vadd.f32 %v605, %v625
      %v634 = vadd.f32 %v606, %v626
      %v635 = vadd.f32 %v607, %v627
      %v636 = vpack.c.bf16 %v629, %v628
      %v637 = vpack.c.bf16 %v631, %v630
      %v638 = vpack.c.bf16 %v633, %v632
      %v639 = vpack.c.bf16 %v635, %v634
      %v640 = vld [vmem:[%s2] sm:$0xf]
      %v642 = vsel %vm334, %v636, 0
      %v645 = vsel %vm334, %v637, 0
      %v648 = vsel %vm334, %v638, 0
      %v651 = vsel %vm334, %v639, 0
      %vm653 = vcmask 1043456
      %v655 = vsel %vm653, %v640, 0
      %657 = vmatprep.subr.bf16.mxu0 0
      %658 = vmatpush1.bf16.msra.mxu0 %v655
      %659 = vmatprep.subr.bf16.mxu0 0
      %660 = vmatpush1.bf16.msra.mxu0 0
      %661 = vmatprep.subr.bf16.mxu0 0
      %662 = vmatpush1.bf16.msra.mxu0 0
      %663 = vmatprep.subr.bf16.mxu0 0
      %664 = vmatpush1.bf16.msra.mxu0 0
      %665 = vmatprep.subr.bf16.mxu0 0
      %666 = vmatpush1.bf16.msra.mxu0 0
      %667 = vmatprep.subr.bf16.mxu0 0
      %668 = vmatpush1.bf16.msra.mxu0 0
      %669 = vmatprep.subr.bf16.mxu0 0
      %670 = vmatpush1.bf16.msra.mxu0 0
      %671 = vmatprep.subr.bf16.mxu0 0
      %672 = vmatpush1.bf16.msra.mxu0 0
      %673 = vmatprep.subr.bf16.mxu0 0
      %674 = vmatpush1.bf16.msra.mxu0 0
      %675 = vmatprep.subr.bf16.mxu0 0
      %676 = vmatpush1.bf16.msra.mxu0 0
      %677 = vmatprep.subr.bf16.mxu0 0
      %678 = vmatpush1.bf16.msra.mxu0 0
      %679 = vmatprep.subr.bf16.mxu0 0
      %680 = vmatpush1.bf16.msra.mxu0 0
      %681 = vmatprep.subr.bf16.mxu0 0
      %682 = vmatpush1.bf16.msra.mxu0 0
      %683 = vmatprep.subr.bf16.mxu0 0
      %684 = vmatpush1.bf16.msra.mxu0 0
      %685 = vmatprep.subr.bf16.mxu0 0
      %686 = vmatpush1.bf16.msra.mxu0 0
      %687 = vmatprep.subr.bf16.mxu0 0
      %688 = vmatpush1.bf16.msra.mxu0 0
      %689 = vmatprep.mubr.bf16.mxu0 0
      %690 = vmatmul.mubr.bf16.gmra.mrb[0].mxu0 %v642
      %v691 = vpop.f32.mrb[0].mxu0
      %v692 = vadd.f32 0.0, %v691
      %v693 = vpop.f32.mrb[0].mxu0
      %v694 = vpop.f32.mrb[0].mxu0
      %v695 = vadd.f32 0.0, %v694
      %v696 = vpop.f32.mrb[0].mxu0
      %697 = vmatprep.mubr.bf16.mxu0 0
      %698 = vmatmul.mubr.bf16.gmra.mrb[0].mxu0 %v645
      %v699 = vpop.f32.mrb[0].mxu0
      %v700 = vadd.f32 0.0, %v699
      %v701 = vpop.f32.mrb[0].mxu0
      %v702 = vpop.f32.mrb[0].mxu0
      %v703 = vadd.f32 0.0, %v702
      %v704 = vpop.f32.mrb[0].mxu0
      %705 = vmatprep.mubr.bf16.mxu0 0
      %706 = vmatmul.mubr.bf16.gmra.mrb[0].mxu0 %v648
      %v707 = vpop.f32.mrb[0].mxu0
      %v708 = vadd.f32 0.0, %v707
      %v709 = vpop.f32.mrb[0].mxu0
      %v710 = vpop.f32.mrb[0].mxu0
      %v711 = vadd.f32 0.0, %v710
      %v712 = vpop.f32.mrb[0].mxu0
      %713 = vmatprep.mubr.bf16.mxu0 0
      %714 = vmatmul.mubr.bf16.gmra.mrb[0].mxu0 %v651
      %v715 = vpop.f32.mrb[0].mxu0
      %v716 = vadd.f32 0.0, %v715
      %v717 = vpop.f32.mrb[0].mxu0
      %v718 = vpop.f32.mrb[0].mxu0
      %v719 = vadd.f32 0.0, %v718
      %v720 = vpop.f32.mrb[0].mxu0
      %721 = vdwg.mxu0
      %v722 = vld [vmem:[%s3] sm:$0x1]
      %v724 = vlaneseq
      %v725 = vshrl.u32 %v724, 7
      %v726 = vsub.s32 0, %v725
      %v727 = vrot.slane %v722, %v726
      %v729 = vmul.f32 %v692, %v727
      %v730 = vmul.f32 %v695, %v727
      %v731 = vmul.f32 %v700, %v727
      %v732 = vmul.f32 %v703, %v727
      %v733 = vmul.f32 %v708, %v727
      %v734 = vmul.f32 %v711, %v727
      %v735 = vmul.f32 %v716, %v727
      %v736 = vmul.f32 %v719, %v727
      %v737 = vld [vmem:[%s4] sm:$0x1]
      %v739 = vlaneseq
      %v740 = vshrl.u32 %v739, 7
      %v741 = vsub.s32 0, %v740
      %v742 = vrot.slane %v737, %v741
      %v744 = vadd.f32 %v729, %v742
      %v745 = vadd.f32 %v730, %v742
      %v746 = vadd.f32 %v731, %v742
      %v747 = vadd.f32 %v732, %v742
      %v748 = vadd.f32 %v733, %v742
      %v749 = vadd.f32 %v734, %v742
      %v750 = vadd.f32 %v735, %v742
      %v751 = vadd.f32 %v736, %v742
      %752 = vst.msk [vmem:[#allocation3] sm:$0xff] %vm334, 0.0
      %753 = vst.msk [vmem:[#allocation3 + $0x8] sm:$0x3] %vm336, 0.0
      %754 = vst.msk [vmem:[#allocation3 + $0x10] sm:$0xff] %vm334, 0.0
      %755 = vst.msk [vmem:[#allocation3 + $0x18] sm:$0x3] %vm336, 0.0
      %756 = vst.msk [vmem:[#allocation3 + $0x20] sm:$0xff] %vm334, 0.0
      %757 = vst.msk [vmem:[#allocation3 + $0x28] sm:$0x3] %vm336, 0.0
      %758 = vst.msk [vmem:[#allocation3 + $0x30] sm:$0xff] %vm334, 0.0
      %759 = vst.msk [vmem:[#allocation3 + $0x38] sm:$0x3] %vm336, 0.0
      %760 = vst.msk [vmem:[#allocation3 + $0x40] sm:$0xff] %vm334, 0.0
      %761 = vst.msk [vmem:[#allocation3 + $0x48] sm:$0x3] %vm336, 0.0
      %762 = vst.msk [vmem:[#allocation3 + $0x50] sm:$0xff] %vm334, 0.0
      %763 = vst.msk [vmem:[#allocation3 + $0x58] sm:$0x3] %vm336, 0.0
      %764 = vst.msk [vmem:[#allocation3 + $0x60] sm:$0xff] %vm334, 0.0
      %765 = vst.msk [vmem:[#allocation3 + $0x68] sm:$0x3] %vm336, 0.0
      %766 = vst.msk [vmem:[#allocation3 + $0x70] sm:$0xff] %vm334, 0.0
      %767 = vst.msk [vmem:[#allocation3 + $0x78] sm:$0x3] %vm336, 0.0
      %768 = vst.msk [vmem:[#allocation3 + $0x80] sm:$0xff] %vm334, 0.0
      %769 = vst.msk [vmem:[#allocation3 + $0x88] sm:$0x3] %vm336, 0.0
      %770 = vst.msk [vmem:[#allocation3 + $0x90] sm:$0xff] %vm334, 0.0
      %771 = vst.msk [vmem:[#allocation3 + $0x98] sm:$0x3] %vm336, 0.0
      %v772 = vmax.f32 %v744, 0.0
      %v773 = vmax.f32 %v745, 0.0
      %v774 = vmax.f32 %v746, 0.0
      %v775 = vmax.f32 %v747, 0.0
      %v776 = vmax.f32 %v748, 0.0
      %v777 = vmax.f32 %v749, 0.0
      %v778 = vmax.f32 %v750, 0.0
      %v779 = vmax.f32 %v751, 0.0
      %s780 = scalar_lea.vmem [#allocation3], 16
      %781 = vst.msk [vmem:[%s780 + $0x1] sm:$0xff] %vm334, %v772
      %782 = vst.msk [vmem:[%s780 + $0x11] sm:$0xff] %vm334, %v773
      %783 = vst.msk [vmem:[%s780 + $0x21] sm:$0xff] %vm334, %v774
      %784 = vst.msk [vmem:[%s780 + $0x31] sm:$0xff] %vm334, %v775
      %785 = vst.msk [vmem:[%s780 + $0x41] sm:$0xff] %vm334, %v776
      %786 = vst.msk [vmem:[%s780 + $0x51] sm:$0xff] %vm334, %v777
      %787 = vst.msk [vmem:[%s780 + $0x61] sm:$0xff] %vm334, %v778
      %788 = vst.msk [vmem:[%s780 + $0x71] sm:$0xff] %vm334, %v779
      %v789 = vld [vmem:[%s5] sm:$0xff]
      %v790 = vld [vmem:[%s5 + $0x8] sm:$0x1]
      %v791 = vld [vmem:[#allocation3] sm:$0xff]
      %v792 = vld [vmem:[#allocation3 + $0x10] sm:$0xff]
      %v793 = vld [vmem:[#allocation3 + $0x20] sm:$0xff]
      %v794 = vld [vmem:[#allocation3 + $0x30] sm:$0xff]
      %v795 = vld [vmem:[#allocation3 + $0x40] sm:$0xff]
      %v796 = vld [vmem:[#allocation3 + $0x50] sm:$0xff]
      %v797 = vld [vmem:[#allocation3 + $0x60] sm:$0xff]
      %v798 = vld [vmem:[#allocation3 + $0x70] sm:$0xff]
      %v799 = vlaneseq
      %v800 = vshrl.u32 %v799, 7
      %v801 = vsub.s32 0, %v800
      %v802 = vrot.slane %v789, %v801
      %v803 = vmul.f32 %v791, %v802
      %v804 = vmul.f32 %v792, %v802
      %v805 = vmul.f32 %v793, %v802
      %v806 = vmul.f32 %v794, %v802
      %v807 = vmul.f32 %v795, %v802
      %v808 = vmul.f32 %v796, %v802
      %v809 = vmul.f32 %v797, %v802
      %v810 = vmul.f32 %v798, %v802
      %v811 = vadd.f32 %v803, 0.0
      %v812 = vadd.f32 %v804, 0.0
      %v813 = vadd.f32 %v805, 0.0
      %v814 = vadd.f32 %v806, 0.0
      %v815 = vadd.f32 %v807, 0.0
      %v816 = vadd.f32 %v808, 0.0
      %v817 = vadd.f32 %v809, 0.0
      %v818 = vadd.f32 %v810, 0.0
      %v819 = vld [vmem:[#allocation3 + $0x1] sm:$0xff]
      %v820 = vld [vmem:[#allocation3 + $0x11] sm:$0xff]
      %v821 = vld [vmem:[#allocation3 + $0x21] sm:$0xff]
      %v822 = vld [vmem:[#allocation3 + $0x31] sm:$0xff]
      %v823 = vld [vmem:[#allocation3 + $0x41] sm:$0xff]
      %v824 = vld [vmem:[#allocation3 + $0x51] sm:$0xff]
      %v825 = vld [vmem:[#allocation3 + $0x61] sm:$0xff]
      %v826 = vld [vmem:[#allocation3 + $0x71] sm:$0xff]
      %v827 = vlaneseq
      %v828 = vshrl.u32 %v827, 7
      %v829 = vsub.s32 1, %v828
      %v830 = vrot.slane %v789, %v829
      %v831 = vmul.f32 %v819, %v830
      %v832 = vmul.f32 %v820, %v830
      %v833 = vmul.f32 %v821, %v830
      %v834 = vmul.f32 %v822, %v830
      %v835 = vmul.f32 %v823, %v830
      %v836 = vmul.f32 %v824, %v830
      %v837 = vmul.f32 %v825, %v830
      %v838 = vmul.f32 %v826, %v830
      %v839 = vadd.f32 %v811, %v831
      %v840 = vadd.f32 %v812, %v832
      %v841 = vadd.f32 %v813, %v833
      %v842 = vadd.f32 %v814, %v834
      %v843 = vadd.f32 %v815, %v835
      %v844 = vadd.f32 %v816, %v836
      %v845 = vadd.f32 %v817, %v837
      %v846 = vadd.f32 %v818, %v838
      %v847 = vld [vmem:[#allocation3 + $0x2] sm:$0xff]
      %v848 = vld [vmem:[#allocation3 + $0x12] sm:$0xff]
      %v849 = vld [vmem:[#allocation3 + $0x22] sm:$0xff]
      %v850 = vld [vmem:[#allocation3 + $0x32] sm:$0xff]
      %v851 = vld [vmem:[#allocation3 + $0x42] sm:$0xff]
      %v852 = vld [vmem:[#allocation3 + $0x52] sm:$0xff]
      %v853 = vld [vmem:[#allocation3 + $0x62] sm:$0xff]
      %v854 = vld [vmem:[#allocation3 + $0x72] sm:$0xff]
      %v855 = vlaneseq
      %v856 = vshrl.u32 %v855, 7
      %v857 = vsub.s32 2, %v856
      %v858 = vrot.slane %v789, %v857
      %v859 = vmul.f32 %v847, %v858
      %v860 = vmul.f32 %v848, %v858
      %v861 = vmul.f32 %v849, %v858
      %v862 = vmul.f32 %v850, %v858
      %v863 = vmul.f32 %v851, %v858
      %v864 = vmul.f32 %v852, %v858
      %v865 = vmul.f32 %v853, %v858
      %v866 = vmul.f32 %v854, %v858
      %v867 = vadd.f32 %v839, %v859
      %v868 = vadd.f32 %v840, %v860
      %v869 = vadd.f32 %v841, %v861
      %v870 = vadd.f32 %v842, %v862
      %v871 = vadd.f32 %v843, %v863
      %v872 = vadd.f32 %v844, %v864
      %v873 = vadd.f32 %v845, %v865
      %v874 = vadd.f32 %v846, %v866
      %v875 = vld [vmem:[%s780] sm:$0xff]
      %v876 = vld [vmem:[%s780 + $0x10] sm:$0xff]
      %v877 = vld [vmem:[%s780 + $0x20] sm:$0xff]
      %v878 = vld [vmem:[%s780 + $0x30] sm:$0xff]
      %v879 = vld [vmem:[%s780 + $0x40] sm:$0xff]
      %v880 = vld [vmem:[%s780 + $0x50] sm:$0xff]
      %v881 = vld [vmem:[%s780 + $0x60] sm:$0xff]
      %v882 = vld [vmem:[%s780 + $0x70] sm:$0xff]
      %v883 = vlaneseq
      %v884 = vshrl.u32 %v883, 7
      %v885 = vsub.s32 3, %v884
      %v886 = vrot.slane %v789, %v885
      %v887 = vmul.f32 %v875, %v886
      %v888 = vmul.f32 %v876, %v886
      %v889 = vmul.f32 %v877, %v886
      %v890 = vmul.f32 %v878, %v886
      %v891 = vmul.f32 %v879, %v886
      %v892 = vmul.f32 %v880, %v886
      %v893 = vmul.f32 %v881, %v886
      %v894 = vmul.f32 %v882, %v886
      %v895 = vadd.f32 %v867, %v887
      %v896 = vadd.f32 %v868, %v888
      %v897 = vadd.f32 %v869, %v889
      %v898 = vadd.f32 %v870, %v890
      %v899 = vadd.f32 %v871, %v891
      %v900 = vadd.f32 %v872, %v892
      %v901 = vadd.f32 %v873, %v893
      %v902 = vadd.f32 %v874, %v894
      %v903 = vld [vmem:[%s780 + $0x1] sm:$0xff]
      %v904 = vld [vmem:[%s780 + $0x11] sm:$0xff]
      %v905 = vld [vmem:[%s780 + $0x21] sm:$0xff]
      %v906 = vld [vmem:[%s780 + $0x31] sm:$0xff]
      %v907 = vld [vmem:[%s780 + $0x41] sm:$0xff]
      %v908 = vld [vmem:[%s780 + $0x51] sm:$0xff]
      %v909 = vld [vmem:[%s780 + $0x61] sm:$0xff]
      %v910 = vld [vmem:[%s780 + $0x71] sm:$0xff]
      %v911 = vlaneseq
      %v912 = vshrl.u32 %v911, 7
      %v913 = vsub.s32 4, %v912
      %v914 = vrot.slane %v789, %v913
      %v915 = vmul.f32 %v903, %v914
      %v916 = vmul.f32 %v904, %v914
      %v917 = vmul.f32 %v905, %v914
      %v918 = vmul.f32 %v906, %v914
      %v919 = vmul.f32 %v907, %v914
      %v920 = vmul.f32 %v908, %v914
      %v921 = vmul.f32 %v909, %v914
      %v922 = vmul.f32 %v910, %v914
      %v923 = vadd.f32 %v895, %v915
      %v924 = vadd.f32 %v896, %v916
      %v925 = vadd.f32 %v897, %v917
      %v926 = vadd.f32 %v898, %v918
      %v927 = vadd.f32 %v899, %v919
      %v928 = vadd.f32 %v900, %v920
      %v929 = vadd.f32 %v901, %v921
      %v930 = vadd.f32 %v902, %v922
      %v931 = vld [vmem:[%s780 + $0x2] sm:$0xff]
      %v932 = vld [vmem:[%s780 + $0x12] sm:$0xff]
      %v933 = vld [vmem:[%s780 + $0x22] sm:$0xff]
      %v934 = vld [vmem:[%s780 + $0x32] sm:$0xff]
      %v935 = vld [vmem:[%s780 + $0x42] sm:$0xff]
      %v936 = vld [vmem:[%s780 + $0x52] sm:$0xff]
      %v937 = vld [vmem:[%s780 + $0x62] sm:$0xff]
      %v938 = vld [vmem:[%s780 + $0x72] sm:$0xff]
      %v939 = vlaneseq
      %v940 = vshrl.u32 %v939, 7
      %v941 = vsub.s32 5, %v940
      %v942 = vrot.slane %v789, %v941
      %v943 = vmul.f32 %v931, %v942
      %v944 = vmul.f32 %v932, %v942
      %v945 = vmul.f32 %v933, %v942
      %v946 = vmul.f32 %v934, %v942
      %v947 = vmul.f32 %v935, %v942
      %v948 = vmul.f32 %v936, %v942
      %v949 = vmul.f32 %v937, %v942
      %v950 = vmul.f32 %v938, %v942
      %v951 = vadd.f32 %v923, %v943
      %v952 = vadd.f32 %v924, %v944
      %v953 = vadd.f32 %v925, %v945
      %v954 = vadd.f32 %v926, %v946
      %v955 = vadd.f32 %v927, %v947
      %v956 = vadd.f32 %v928, %v948
      %v957 = vadd.f32 %v929, %v949
      %v958 = vadd.f32 %v930, %v950
      %s959 = scalar_lea.vmem [#allocation3], 32
      %v960 = vld [vmem:[%s959] sm:$0xff]
      %v961 = vld [vmem:[%s959 + $0x10] sm:$0xff]
      %v962 = vld [vmem:[%s959 + $0x20] sm:$0xff]
      %v963 = vld [vmem:[%s959 + $0x30] sm:$0xff]
      %v964 = vld [vmem:[%s959 + $0x40] sm:$0xff]
      %v965 = vld [vmem:[%s959 + $0x50] sm:$0xff]
      %v966 = vld [vmem:[%s959 + $0x60] sm:$0xff]
      %v967 = vld [vmem:[%s959 + $0x70] sm:$0xff]
      %v968 = vlaneseq
      %v969 = vshrl.u32 %v968, 7
      %v970 = vsub.s32 6, %v969
      %v971 = vrot.slane %v789, %v970
      %v972 = vmul.f32 %v960, %v971
      %v973 = vmul.f32 %v961, %v971
      %v974 = vmul.f32 %v962, %v971
      %v975 = vmul.f32 %v963, %v971
      %v976 = vmul.f32 %v964, %v971
      %v977 = vmul.f32 %v965, %v971
      %v978 = vmul.f32 %v966, %v971
      %v979 = vmul.f32 %v967, %v971
      %v980 = vadd.f32 %v951, %v972
      %v981 = vadd.f32 %v952, %v973
      %v982 = vadd.f32 %v953, %v974
      %v983 = vadd.f32 %v954, %v975
      %v984 = vadd.f32 %v955, %v976
      %v985 = vadd.f32 %v956, %v977
      %v986 = vadd.f32 %v957, %v978
      %v987 = vadd.f32 %v958, %v979
      %v988 = vld [vmem:[%s959 + $0x1] sm:$0xff]
      %v989 = vld [vmem:[%s959 + $0x11] sm:$0xff]
      %v990 = vld [vmem:[%s959 + $0x21] sm:$0xff]
      %v991 = vld [vmem:[%s959 + $0x31] sm:$0xff]
      %v992 = vld [vmem:[%s959 + $0x41] sm:$0xff]
      %v993 = vld [vmem:[%s959 + $0x51] sm:$0xff]
      %v994 = vld [vmem:[%s959 + $0x61] sm:$0xff]
      %v995 = vld [vmem:[%s959 + $0x71] sm:$0xff]
      %v996 = vlaneseq
      %v997 = vshrl.u32 %v996, 7
      %v998 = vsub.s32 7, %v997
      %v999 = vrot.slane %v789, %v998
      %v1000 = vmul.f32 %v988, %v999
      %v1001 = vmul.f32 %v989, %v999
      %v1002 = vmul.f32 %v990, %v999
      %v1003 = vmul.f32 %v991, %v999
      %v1004 = vmul.f32 %v992, %v999
      %v1005 = vmul.f32 %v993, %v999
      %v1006 = vmul.f32 %v994, %v999
      %v1007 = vmul.f32 %v995, %v999
      %v1008 = vadd.f32 %v980, %v1000
      %v1009 = vadd.f32 %v981, %v1001
      %v1010 = vadd.f32 %v982, %v1002
      %v1011 = vadd.f32 %v983, %v1003
      %v1012 = vadd.f32 %v984, %v1004
      %v1013 = vadd.f32 %v985, %v1005
      %v1014 = vadd.f32 %v986, %v1006
      %v1015 = vadd.f32 %v987, %v1007
      %v1016 = vld [vmem:[%s959 + $0x2] sm:$0xff]
      %v1017 = vld [vmem:[%s959 + $0x12] sm:$0xff]
      %v1018 = vld [vmem:[%s959 + $0x22] sm:$0xff]
      %v1019 = vld [vmem:[%s959 + $0x32] sm:$0xff]
      %v1020 = vld [vmem:[%s959 + $0x42] sm:$0xff]
      %v1021 = vld [vmem:[%s959 + $0x52] sm:$0xff]
      %v1022 = vld [vmem:[%s959 + $0x62] sm:$0xff]
      %v1023 = vld [vmem:[%s959 + $0x72] sm:$0xff]
      %v1024 = vlaneseq
      %v1025 = vshrl.u32 %v1024, 7
      %v1026 = vsub.s32 0, %v1025
      %v1027 = vrot.slane %v790, %v1026
      %v1028 = vmul.f32 %v1016, %v1027
      %v1029 = vmul.f32 %v1017, %v1027
      %v1030 = vmul.f32 %v1018, %v1027
      %v1031 = vmul.f32 %v1019, %v1027
      %v1032 = vmul.f32 %v1020, %v1027
      %v1033 = vmul.f32 %v1021, %v1027
      %v1034 = vmul.f32 %v1022, %v1027
      %v1035 = vmul.f32 %v1023, %v1027
      %v1036 = vadd.f32 %v1008, %v1028
      %v1037 = vadd.f32 %v1009, %v1029
      %v1038 = vadd.f32 %v1010, %v1030
      %v1039 = vadd.f32 %v1011, %v1031
      %v1040 = vadd.f32 %v1012, %v1032
      %v1041 = vadd.f32 %v1013, %v1033
      %v1042 = vadd.f32 %v1014, %v1034
      %v1043 = vadd.f32 %v1015, %v1035
      %v1044 = vpack.c.bf16 %v1037, %v1036
      %v1045 = vpack.c.bf16 %v1039, %v1038
      %v1046 = vpack.c.bf16 %v1041, %v1040
      %v1047 = vpack.c.bf16 %v1043, %v1042
      %v1048 = vld [vmem:[%s6] sm:$0xf]
      %v1050 = vsel %vm334, %v1044, 0
      %v1053 = vsel %vm334, %v1045, 0
      %v1056 = vsel %vm334, %v1046, 0
      %v1059 = vsel %vm334, %v1047, 0
      %v1062 = vsel %vm653, %v1048, 0
      %1064 = vmatprep.subr.bf16.mxu0 0
      %1065 = vmatpush1.bf16.msra.mxu0 %v1062
      %1066 = vmatprep.subr.bf16.mxu0 0
      %1067 = vmatpush1.bf16.msra.mxu0 0
      %1068 = vmatprep.subr.bf16.mxu0 0
      %1069 = vmatpush1.bf16.msra.mxu0 0
      %1070 = vmatprep.subr.bf16.mxu0 0
      %1071 = vmatpush1.bf16.msra.mxu0 0
      %1072 = vmatprep.subr.bf16.mxu0 0
      %1073 = vmatpush1.bf16.msra.mxu0 0
      %1074 = vmatprep.subr.bf16.mxu0 0
      %1075 = vmatpush1.bf16.msra.mxu0 0
      %1076 = vmatprep.subr.bf16.mxu0 0
      %1077 = vmatpush1.bf16.msra.mxu0 0
      %1078 = vmatprep.subr.bf16.mxu0 0
      %1079 = vmatpush1.bf16.msra.mxu0 0
      %1080 = vmatprep.subr.bf16.mxu0 0
      %1081 = vmatpush1.bf16.msra.mxu0 0
      %1082 = vmatprep.subr.bf16.mxu0 0
      %1083 = vmatpush1.bf16.msra.mxu0 0
      %1084 = vmatprep.subr.bf16.mxu0 0
      %1085 = vmatpush1.bf16.msra.mxu0 0
      %1086 = vmatprep.subr.bf16.mxu0 0
      %1087 = vmatpush1.bf16.msra.mxu0 0
      %1088 = vmatprep.subr.bf16.mxu0 0
      %1089 = vmatpush1.bf16.msra.mxu0 0
      %1090 = vmatprep.subr.bf16.mxu0 0
      %1091 = vmatpush1.bf16.msra.mxu0 0
      %1092 = vmatprep.subr.bf16.mxu0 0
      %1093 = vmatpush1.bf16.msra.mxu0 0
      %1094 = vmatprep.subr.bf16.mxu0 0
      %1095 = vmatpush1.bf16.msra.mxu0 0
      %1096 = vmatprep.mubr.bf16.mxu0 0
      %1097 = vmatmul.mubr.bf16.gmra.mrb[0].mxu0 %v1050
      %v1098 = vpop.f32.mrb[0].mxu0
      %v1099 = vadd.f32 0.0, %v1098
      %v1100 = vpop.f32.mrb[0].mxu0
      %v1101 = vpop.f32.mrb[0].mxu0
      %v1102 = vadd.f32 0.0, %v1101
      %v1103 = vpop.f32.mrb[0].mxu0
      %1104 = vmatprep.mubr.bf16.mxu0 0
      %1105 = vmatmul.mubr.bf16.gmra.mrb[0].mxu0 %v1053
      %v1106 = vpop.f32.mrb[0].mxu0
      %v1107 = vadd.f32 0.0, %v1106
      %v1108 = vpop.f32.mrb[0].mxu0
      %v1109 = vpop.f32.mrb[0].mxu0
      %v1110 = vadd.f32 0.0, %v1109
      %v1111 = vpop.f32.mrb[0].mxu0
      %1112 = vmatprep.mubr.bf16.mxu0 0
      %1113 = vmatmul.mubr.bf16.gmra.mrb[0].mxu0 %v1056
      %v1114 = vpop.f32.mrb[0].mxu0
      %v1115 = vadd.f32 0.0, %v1114
      %v1116 = vpop.f32.mrb[0].mxu0
      %v1117 = vpop.f32.mrb[0].mxu0
      %v1118 = vadd.f32 0.0, %v1117
      %v1119 = vpop.f32.mrb[0].mxu0
      %1120 = vmatprep.mubr.bf16.mxu0 0
      %1121 = vmatmul.mubr.bf16.gmra.mrb[0].mxu0 %v1059
      %v1122 = vpop.f32.mrb[0].mxu0
      %v1123 = vadd.f32 0.0, %v1122
      %v1124 = vpop.f32.mrb[0].mxu0
      %v1125 = vpop.f32.mrb[0].mxu0
      %v1126 = vadd.f32 0.0, %v1125
      %v1127 = vpop.f32.mrb[0].mxu0
      %1128 = vdwg.mxu0
      %v1129 = vld [vmem:[%s7] sm:$0x1]
      %v1131 = vlaneseq
      %v1132 = vshrl.u32 %v1131, 7
      %v1133 = vsub.s32 0, %v1132
      %v1134 = vrot.slane %v1129, %v1133
      %v1136 = vmul.f32 %v1099, %v1134
      %v1137 = vmul.f32 %v1102, %v1134
      %v1138 = vmul.f32 %v1107, %v1134
      %v1139 = vmul.f32 %v1110, %v1134
      %v1140 = vmul.f32 %v1115, %v1134
      %v1141 = vmul.f32 %v1118, %v1134
      %v1142 = vmul.f32 %v1123, %v1134
      %v1143 = vmul.f32 %v1126, %v1134
      %v1144 = vld [vmem:[%s8] sm:$0x1]
      %v1146 = vlaneseq
      %v1147 = vshrl.u32 %v1146, 7
      %v1148 = vsub.s32 0, %v1147
      %v1149 = vrot.slane %v1144, %v1148
      %v1151 = vadd.f32 %v1136, %v1149
      %v1152 = vadd.f32 %v1137, %v1149
      %v1153 = vadd.f32 %v1138, %v1149
      %v1154 = vadd.f32 %v1139, %v1149
      %v1155 = vadd.f32 %v1140, %v1149
      %v1156 = vadd.f32 %v1141, %v1149
      %v1157 = vadd.f32 %v1142, %v1149
      %v1158 = vadd.f32 %v1143, %v1149
      %1159 = vst.msk [vmem:[%s332] sm:$0xff] %vm334, %v1151
      %1160 = vst.msk [vmem:[%s332 + $0x8] sm:$0xff] %vm334, %v1152
      %1161 = vst.msk [vmem:[%s332 + $0x10] sm:$0xff] %vm334, %v1153
      %1162 = vst.msk [vmem:[%s332 + $0x18] sm:$0xff] %vm334, %v1154
      %1163 = vst.msk [vmem:[%s332 + $0x20] sm:$0xff] %vm334, %v1155
      %1164 = vst.msk [vmem:[%s332 + $0x28] sm:$0xff] %vm334, %v1156
      %1165 = vst.msk [vmem:[%s332 + $0x30] sm:$0xff] %vm334, %v1157
      %1166 = vst.msk [vmem:[%s332 + $0x38] sm:$0xff] %vm334, %v1158
      %p1167 = scmp.lt.s32.totalorder %s20, 1
      %s1168 = scalar_select %p1167, %s20, 1
      %s1169 = smul.addr %s1168, 8
      %s1170 = smul.addr %s1169, 8
      %s1171 = scalar_lea.vmem %s9, %s1170
      // Predicated region
      $region57: #{_lambda_.10} parent=55 // pred_check
        %p1172 = pneg %p232
      $region58: #{_lambda_.10} parent=55 // pred_check_branch
        %1174 = sbr.rel (%p1172) target = $region60
      $region59: #{_lambda_.10} parent=55 // pred_region
        _
      $region60: #{_lambda_.10} parent=55 // pred_fallthru
        _
    $region56: #{_lambda_.10} parent=5 // pred_fallthru
      _
    %p1175 = scmp.le.s32.totalorder 2, %s15
    // Predicated region
    $region61: #{_lambda_.10} parent=5 // pred_check
      %p1176 = pneg %p1175
    $region62: #{_lambda_.10} parent=5 // pred_check_branch
      %1178 = sbr.rel (%p1176) target = $region64
    $region63: #{_lambda_.10} parent=5 // pred_region
      %s1179 = ssub.s32 %s15, 2
      // Predicated region
      $region65: #{_lambda_.10} parent=63 // pred_check
        %p1180 = pneg %p238
      $region66: #{_lambda_.10} parent=63 // pred_check_branch
        %1182 = sbr.rel (%p1180) target = $region68
      $region67: #{_lambda_.10} parent=63 // pred_region
        %p1183 = scmp.lt.s32.totalorder %s21, 1
        %s1184 = scalar_select %p1183, %s21, 1
        %s1185 = smul.addr %s1184, 8
        %s1186 = smul.addr %s1185, 8
        %s1187 = scalar_lea.vmem %s9, %s1186
      $region68: #{_lambda_.10} parent=63 // pred_fallthru
        _
    $region64: #{_lambda_.10} parent=5 // pred_fallthru
      _
  $region6: #{_lambda_.10} parent=0 // loop_footer
    %s19 = sadd.s32 1, %s15
  $region7: #{_lambda_.10} parent=0 // loop_footer_branch
    %14 = sbr.rel target = $region3
  $region8: #{_lambda_.10} parent=0 // loop_exit
    _

</llo_original>
